<compile_context>
chip_gen: v5e
topology: v5e:2x2
jax: 0.10.0
libtpu: 0.0.40
codegen_flags: <defaults>
</compile_context>

<pallas_src>
import jax
import jax.numpy as jnp
from jax import lax
from jax.experimental import pallas as pl
from jax.experimental.pallas import tpu as pltpu


def _round_up(x, m):
    return ((x + m - 1) // m) * m


def _init_pad(g_ref, x):
    """Write image x (1,H,W,C) into a (1,H+4,Wr,C) zero-padded VMEM scratch.

    Scratch row r holds padded-image row r-1 (rows 0 and H+3 are guard rows
    that only absorb the kw-shift slice overrun). Only the zero border / guard
    strips are zero-filled; the interior is overwritten with x.
    """
    _, Hg, Wr, C = g_ref.shape
    H = x.shape[1]
    W = x.shape[2]
    zr = jnp.zeros((1, 2, Wr, C), g_ref.dtype)
    g_ref[:, 0:2, :, :] = zr                 # top guard row + padded row 0
    g_ref[:, Hg - 2:Hg, :, :] = zr           # padded row H+1 + bottom guard row
    g_ref[:, :, 0:1, :] = jnp.zeros((1, Hg, 1, C), g_ref.dtype)          # left pad col
    g_ref[:, :, W + 1:Wr, :] = jnp.zeros((1, Hg, Wr - W - 1, C), g_ref.dtype)
    g_ref[:, 2:2 + H, 1:1 + W, :] = x.astype(g_ref.dtype)               # interior


def _conv3x3_flat(g_ref, w_ref, H, W, Cout):
    """3x3 stride-1 conv over a pre-padded scratch, kw taps packed along K.

    g_ref: (1, H+4, Wr, Cin) padded scratch, Wr % 16 == 0 (bf16 sublane pack).
    w_ref: (3, 3*Cin, Cout) weights, K index = kw*Cin + ci (HWIO row-major).
    Returns (1, H, W, Cout) float32.

    For output (h, w), tap (kh, kw) reads flat[(h+kh+1)*Wr + w + kw] — the kw
    shift is realized by two misaligned slab slices built once (s1, s2) and
    K-concatenated; every kh slice of `packed` is then Wr-aligned (a view).
    """
    _, Hg, Wr, Cin = g_ref.shape
    flat = g_ref[...].reshape(Hg * Wr, Cin)       # aligned flatten (Wr % 16 == 0)
    base = Wr                                     # scratch row 1 == padded row 0
    m_all = (H + 2) * Wr                          # covers kh = 0..2 start rows
    s0 = flat[base + 0:base + m_all + 0, :]       # aligned view
    s1 = flat[base + 1:base + m_all + 1, :]       # 1-sublane offset (one relayout)
    s2 = flat[base + 2:base + m_all + 2, :]       # 2-sublane offset (one relayout)
    packed = jnp.concatenate([s0, s1, s2], axis=-1)   # (m_all, 3*Cin)

    m = H * Wr
    acc = jnp.zeros((m, Cout), jnp.float32)
    for kh in range(3):
        xs = packed[kh * Wr:kh * Wr + m, :]       # Wr-aligned slice (view)
        acc = acc + jnp.dot(xs, w_ref[kh], preferred_element_type=jnp.float32)
    out = acc.reshape(1, H, Wr, Cout)
    return out[:, :, 0:W, :]                      # drop garbage pad columns (offset 0)


def _octave_kernel(xh_ref, xl_ref, w_h2h_ref, w_low_ref, w_h2l_ref,
                   yh_ref, yl_ref, gh_ref, gl_ref, gp_ref):
    _, H, W, Ch_in = xh_ref.shape
    _, Hl, Wl, _ = xl_ref.shape
    Ch_out = w_h2h_ref.shape[2]
    Cl_out = w_h2l_ref.shape[2]

    xh = xh_ref[...]
    xl = xl_ref[...]

    # Pad in VMEM (borders zeroed, interior overwritten).
    _init_pad(gh_ref, xh)
    _init_pad(gl_ref, xl)

    # h2h conv (high resolution).
    hh = _conv3x3_flat(gh_ref, w_h2h_ref, H, W, Ch_out)
    # Fused l2l + l2h conv over x_l (weights concatenated along Cout: [l2l, l2h]).
    lo = _conv3x3_flat(gl_ref, w_low_ref, Hl, Wl, Cl_out + Ch_out)
    ll = lo[:, :, :, :Cl_out]                     # lane-aligned slice
    lh = lo[:, :, :, Cl_out:]

    # 2x2 sum-pool of the high-frequency input in f32 (the 0.25 avg divisor is
    # folded into the h2l weights in the wrapper), then h2l conv.
    xh32 = xh.astype(jnp.float32)
    t = xh32.reshape(1, H, Wl, 2, Ch_in)
    t = t[:, :, :, 0, :] + t[:, :, :, 1, :]          # (1, H, Wl, Ch_in)
    t = t.reshape(1, Hl, 2, Wl, Ch_in)
    pooled = t[:, :, 0, :, :] + t[:, :, 1, :, :]     # (1, Hl, Wl, Ch_in)
    _init_pad(gp_ref, pooled)
    hl = _conv3x3_flat(gp_ref, w_h2l_ref, Hl, Wl, Cl_out)

    # Nearest-neighbour 2x upsample of the low->high path, add to h2h.
    up = jnp.broadcast_to(lh[:, :, :, None, :], (1, Hl, Wl, 2, Ch_out))
    up = up.reshape(1, Hl, W, Ch_out)
    up = jnp.broadcast_to(up[:, :, None, :, :], (1, Hl, 2, W, Ch_out))
    up = up.reshape(1, H, W, Ch_out)

    yh = hh + up                                     # X_h = upsample(l2h) + h2h
    yl = ll + hl                                     # X_l = h2l(pool(h)) + l2l

    # Lane-dense stores: cast to the (bf16) output dtype first, then merge the
    # (W, C) tail into a single wide lane dimension.
    yh_ref[...] = yh.astype(yh_ref.dtype).reshape(1, H, W * Ch_out)
    yl_ref[...] = yl.astype(yl_ref.dtype).reshape(1, Hl, Wl * Cl_out)


def _pack_w(w_hwio):
    """(3, 3, Cin, Cout) HWIO -> (3, 3*Cin, Cout), K index = kw*Cin + ci."""
    kh, kw, ci, co = w_hwio.shape
    return w_hwio.reshape(kh, kw * ci, co)


def octave_conv_forward_nhwc(xh, xl, w_h2h, w_low, w_h2l, *,
                             out_dtype=jnp.bfloat16):
    """OctaveConv forward on NHWC/bf16 activations with pre-packed weights.

    xh: (N, H, W, Ch_in) bf16, xl: (N, Hl, Wl, Cl_in) bf16.
    w_h2h: (3, 3*Ch_in, Ch_out); w_low: (3, 3*Cl_in, Cl_out+Ch_out) ([l2l,l2h]);
    w_h2l: (3, 3*Ch_in, Cl_out) with the 0.25 avg-pool factor folded in.
    Returns ((N, H, W, Ch_out), (N, Hl, Wl, Cl_out)) in out_dtype.
    """
    N, H, W, Ch_in = xh.shape
    _, Hl, Wl, Cl_in = xl.shape
    Ch_out = w_h2h.shape[2]
    Cl_out = w_h2l.shape[2]
    cdt = xh.dtype

    Wr_h = _round_up(W + 2, 16)      # bf16 sublane pack = 16 -> aligned flatten/shifts
    Wr_l = _round_up(Wl + 2, 16)

    out_shape = (
        jax.ShapeDtypeStruct((N, H, W * Ch_out), out_dtype),
        jax.ShapeDtypeStruct((N, Hl, Wl * Cl_out), out_dtype),
    )

    def img_spec(h, w, c):
        return pl.BlockSpec((1, h, w, c), lambda n: (n, 0, 0, 0))

    def wgt_spec(w_arr):
        return pl.BlockSpec(w_arr.shape, lambda n: (0, 0, 0))

    def slab_spec(h, wc):
        return pl.BlockSpec((1, h, wc), lambda n: (n, 0, 0))

    yh_slab, yl_slab = pl.pallas_call(
        _octave_kernel,
        out_shape=out_shape,
        grid=(N,),
        in_specs=[
            img_spec(H, W, Ch_in),
            img_spec(Hl, Wl, Cl_in),
            wgt_spec(w_h2h),
            wgt_spec(w_low),
            wgt_spec(w_h2l),
        ],
        out_specs=(
            slab_spec(H, W * Ch_out),
            slab_spec(Hl, Wl * Cl_out),
        ),
        scratch_shapes=[
            pltpu.VMEM((1, H + 4, Wr_h, Ch_in), cdt),    # padded x_h
            pltpu.VMEM((1, Hl + 4, Wr_l, Cl_in), cdt),   # padded x_l
            pltpu.VMEM((1, Hl + 4, Wr_l, Ch_in), cdt),   # padded pooled x_h
        ],
        compiler_params=pltpu.CompilerParams(
            dimension_semantics=("parallel",),
            vmem_limit_bytes=64 * 1024 * 1024),
    )(xh, xl, w_h2h, w_low, w_h2l)

    # Trailing-dim splits are free (row-major metadata reshape).
    return (yh_slab.reshape(N, H, W, Ch_out),
            yl_slab.reshape(N, Hl, Wl, Cl_out))


def octave_conv_forward(x_h, x_l, w_h2h, w_l2h, w_l2l, w_h2l,
                        *, out_dtype=jnp.bfloat16):
    """NCHW adapter mirroring the PyTorch module (kernel 3, stride 1, pad 1, no bias).

    In a real pipeline keep activations NHWC/bf16 and call
    octave_conv_forward_nhwc directly to avoid these layout round-trips.
    """
    N, Ch_in, H, W = x_h.shape
    _, Cl_in, Hl, Wl = x_l.shape
    assert H % 2 == 0 and W % 2 == 0 and Hl == H // 2 and Wl == W // 2

    to_nhwc = lambda x: jnp.transpose(x, (0, 2, 3, 1))
    to_hwio = lambda w: jnp.transpose(w, (2, 3, 1, 0))
    cdt = jnp.bfloat16

    xh = to_nhwc(x_h).astype(cdt)
    xl = to_nhwc(x_l).astype(cdt)
    wh2h = _pack_w(to_hwio(w_h2h)).astype(cdt)
    # Fused low-path weights, order [l2l, l2h] (lane-aligned l2l slice in-kernel).
    wlow = _pack_w(jnp.concatenate([to_hwio(w_l2l), to_hwio(w_l2h)],
                                   axis=-1)).astype(cdt)
    # Fold the 2x2 avg-pool divisor into the h2l weights.
    wh2l = _pack_w(0.25 * to_hwio(w_h2l)).astype(cdt)

    yh, yl = octave_conv_forward_nhwc(xh, xl, wh2h, wlow, wh2l,
                                      out_dtype=out_dtype)

    from_nhwc = lambda y: jnp.transpose(y, (0, 3, 1, 2))
    return from_nhwc(yh), from_nhwc(yl)


def _ref_forward(x_h, x_l, w_h2h, w_l2h, w_l2l, w_h2l):
    """Pure-JAX reference mirroring the PyTorch forward (NCHW, f32)."""
    def conv(x, w):
        return lax.conv_general_dilated(
            x, w, window_strides=(1, 1), padding=((1, 1), (1, 1)),
            dimension_numbers=("NCHW", "OIHW", "NCHW"),
            precision=lax.Precision.HIGHEST)

    def avgpool(x):
        n, c, h, w = x.shape
        return x.reshape(n, c, h // 2, 2, w // 2, 2).mean(axis=(3, 5))

    def upsample(x):
        return jnp.repeat(jnp.repeat(x, 2, axis=2), 2, axis=3)

    x_h2l = avgpool(x_h)
    x_h2h = conv(x_h, w_h2h)
    x_l2h = conv(x_l, w_l2h)
    x_l2l = conv(x_l, w_l2l)
    x_h2l = conv(x_h2l, w_h2l)
    x_l2h = upsample(x_l2h)
    return x_l2h + x_h2h, x_h2l + x_l2l


if __name__ == "__main__":
    key = jax.random.PRNGKey(0)
    k = jax.random.split(key, 6)

    N = 2
    in_channels, out_channels, alpha = 4, 4, 0.5
    H = W = 16
    Cl_in = int(alpha * in_channels)
    Ch_in = in_channels - Cl_in
    Cl_out = int(alpha * out_channels)
    Ch_out = out_channels - Cl_out

    x_h = jax.random.normal(k[0], (N, Ch_in, H, W), jnp.float32)
    x_l = jax.random.normal(k[1], (N, Cl_in, H // 2, W // 2), jnp.float32)

    def winit(kk, cout, cin):
        fan_in = cin * 3 * 3
        return jax.random.normal(kk, (cout, cin, 3, 3), jnp.float32) / jnp.sqrt(fan_in)

    # Deterministic synthetic Conv2d weights (OIHW), matching the module shapes.
    w_l2l = winit(k[2], Cl_out, Cl_in)   # l2l
    w_l2h = winit(k[3], Ch_out, Cl_in)   # l2h
    w_h2l = winit(k[4], Cl_out, Ch_in)   # h2l
    w_h2h = winit(k[5], Ch_out, Ch_in)   # h2h

    fwd = jax.jit(octave_conv_forward)
    y_h, y_l = fwd(x_h, x_l, w_h2h, w_l2h, w_l2l, w_h2l)
    jax.block_until_ready((y_h, y_l))

    r_h, r_l = _ref_forward(x_h, x_l, w_h2h, w_l2h, w_l2l, w_h2l)
    assert y_h.shape == (N, Ch_out, H, W)
    assert y_l.shape == (N, Cl_out, H // 2, W // 2)
    # bf16 activations/weights and bf16 outputs (f32 accumulation): ~0.5%
    # relative quantization error bound -> 3e-2 tolerance vs the f32 reference.
    assert jnp.allclose(y_h.astype(jnp.float32), r_h, rtol=3e-2, atol=3e-2)
    assert jnp.allclose(y_l.astype(jnp.float32), r_l, rtol=3e-2, atol=3e-2)
    print("KERNEL_OK")
</pallas_src>

<mosaic_0001>
module attributes {stable_mosaic.version = 11 : i64} {
  func.func @_octave_kernel(%arg0: i32, %arg1: memref<1x16x16x2xbf16, #tpu.memory_space<vmem>>, %arg2: memref<1x8x8x2xbf16, #tpu.memory_space<vmem>>, %arg3: memref<3x6x2xbf16, #tpu.memory_space<vmem>>, %arg4: memref<3x6x4xbf16, #tpu.memory_space<vmem>>, %arg5: memref<3x6x2xbf16, #tpu.memory_space<vmem>>, %arg6: memref<1x16x32xbf16, #tpu.memory_space<vmem>>, %arg7: memref<1x8x16xbf16, #tpu.memory_space<vmem>>, %arg8: memref<1x20x32x2xbf16, #tpu.memory_space<vmem>>, %arg9: memref<1x12x16x2xbf16, #tpu.memory_space<vmem>>, %arg10: memref<1x12x16x2xbf16, #tpu.memory_space<vmem>>) attributes {dimension_semantics = [#tpu.dimension_semantics<parallel>], iteration_bounds = array<i64: 2>, scalar_prefetch = 0 : i64, scratch_operands = 3 : i64, tpu.core_type = #tpu.core_type<tc>, window_params = [{transform_indices = @transform_0, window_bounds = array<i64: 1, 16, 16, 2>}, {transform_indices = @transform_1, window_bounds = array<i64: 1, 8, 8, 2>}, {pipeline_mode = #tpu.pipeline_mode<synchronous>, transform_indices = @transform_2, window_bounds = array<i64: 3, 6, 2>}, {pipeline_mode = #tpu.pipeline_mode<synchronous>, transform_indices = @transform_3, window_bounds = array<i64: 3, 6, 4>}, {pipeline_mode = #tpu.pipeline_mode<synchronous>, transform_indices = @transform_4, window_bounds = array<i64: 3, 6, 2>}, {transform_indices = @transform_5, window_bounds = array<i64: 1, 16, 32>}, {transform_indices = @transform_6, window_bounds = array<i64: 1, 8, 16>}]} {
    %c0 = arith.constant 0 : index
    %c0_0 = arith.constant 0 : index
    %c0_1 = arith.constant 0 : index
    %c0_2 = arith.constant 0 : index
    %0 = vector.load %arg1[%c0, %c0_0, %c0_1, %c0_2] : memref<1x16x16x2xbf16, #tpu.memory_space<vmem>>, vector<1x16x16x2xbf16>
    %c0_3 = arith.constant 0 : index
    %c0_4 = arith.constant 0 : index
    %c0_5 = arith.constant 0 : index
    %c0_6 = arith.constant 0 : index
    %1 = vector.load %arg2[%c0_3, %c0_4, %c0_5, %c0_6] : memref<1x8x8x2xbf16, #tpu.memory_space<vmem>>, vector<1x8x8x2xbf16>
    %cst = arith.constant 0.000000e+00 : bf16
    %2 = vector.broadcast %cst : bf16 to vector<1x2x32x2xbf16>
    %c0_7 = arith.constant 0 : index
    %c0_8 = arith.constant 0 : index
    %c0_9 = arith.constant 0 : index
    %c0_10 = arith.constant 0 : index
    %3 = vector.load %arg8[%c0_7, %c0_8, %c0_9, %c0_10] : memref<1x20x32x2xbf16, #tpu.memory_space<vmem>>, vector<1x2x32x2xbf16>
    tpu.vector_store %arg8[%c0_7, %c0_8, %c0_9, %c0_10], %2 {strides = array<i32>} : memref<1x20x32x2xbf16, #tpu.memory_space<vmem>>, vector<1x2x32x2xbf16>,
    %c0_11 = arith.constant 0 : index
    %c18 = arith.constant 18 : index
    %c0_12 = arith.constant 0 : index
    %c0_13 = arith.constant 0 : index
    %4 = vector.load %arg8[%c0_11, %c18, %c0_12, %c0_13] : memref<1x20x32x2xbf16, #tpu.memory_space<vmem>>, vector<1x2x32x2xbf16>
    tpu.vector_store %arg8[%c0_11, %c18, %c0_12, %c0_13], %2 {strides = array<i32>} : memref<1x20x32x2xbf16, #tpu.memory_space<vmem>>, vector<1x2x32x2xbf16>,
    %cst_14 = arith.constant 0.000000e+00 : bf16
    %5 = vector.broadcast %cst_14 : bf16 to vector<1x20x1x2xbf16>
    %c0_15 = arith.constant 0 : index
    %c0_16 = arith.constant 0 : index
    %c0_17 = arith.constant 0 : index
    %c0_18 = arith.constant 0 : index
    %6 = vector.load %arg8[%c0_15, %c0_16, %c0_17, %c0_18] : memref<1x20x32x2xbf16, #tpu.memory_space<vmem>>, vector<1x20x1x2xbf16>
    tpu.vector_store %arg8[%c0_15, %c0_16, %c0_17, %c0_18], %5 {strides = array<i32>} : memref<1x20x32x2xbf16, #tpu.memory_space<vmem>>, vector<1x20x1x2xbf16>,
    %cst_19 = arith.constant 0.000000e+00 : bf16
    %7 = vector.broadcast %cst_19 : bf16 to vector<1x20x15x2xbf16>
    %c0_20 = arith.constant 0 : index
    %c0_21 = arith.constant 0 : index
    %c17 = arith.constant 17 : index
    %c0_22 = arith.constant 0 : index
    %8 = vector.load %arg8[%c0_20, %c0_21, %c17, %c0_22] : memref<1x20x32x2xbf16, #tpu.memory_space<vmem>>, vector<1x20x15x2xbf16>
    tpu.vector_store %arg8[%c0_20, %c0_21, %c17, %c0_22], %7 {strides = array<i32>} : memref<1x20x32x2xbf16, #tpu.memory_space<vmem>>, vector<1x20x15x2xbf16>,
    %c0_23 = arith.constant 0 : index
    %c2 = arith.constant 2 : index
    %c1 = arith.constant 1 : index
    %c0_24 = arith.constant 0 : index
    %9 = vector.load %arg8[%c0_23, %c2, %c1, %c0_24] : memref<1x20x32x2xbf16, #tpu.memory_space<vmem>>, vector<1x16x16x2xbf16>
    tpu.vector_store %arg8[%c0_23, %c2, %c1, %c0_24], %0 {strides = array<i32>} : memref<1x20x32x2xbf16, #tpu.memory_space<vmem>>, vector<1x16x16x2xbf16>,
    %cst_25 = arith.constant 0.000000e+00 : bf16
    %10 = vector.broadcast %cst_25 : bf16 to vector<1x2x16x2xbf16>
    %c0_26 = arith.constant 0 : index
    %c0_27 = arith.constant 0 : index
    %c0_28 = arith.constant 0 : index
    %c0_29 = arith.constant 0 : index
    %11 = vector.load %arg9[%c0_26, %c0_27, %c0_28, %c0_29] : memref<1x12x16x2xbf16, #tpu.memory_space<vmem>>, vector<1x2x16x2xbf16>
    tpu.vector_store %arg9[%c0_26, %c0_27, %c0_28, %c0_29], %10 {strides = array<i32>} : memref<1x12x16x2xbf16, #tpu.memory_space<vmem>>, vector<1x2x16x2xbf16>,
    %c0_30 = arith.constant 0 : index
    %c10 = arith.constant 10 : index
    %c0_31 = arith.constant 0 : index
    %c0_32 = arith.constant 0 : index
    %12 = vector.load %arg9[%c0_30, %c10, %c0_31, %c0_32] : memref<1x12x16x2xbf16, #tpu.memory_space<vmem>>, vector<1x2x16x2xbf16>
    tpu.vector_store %arg9[%c0_30, %c10, %c0_31, %c0_32], %10 {strides = array<i32>} : memref<1x12x16x2xbf16, #tpu.memory_space<vmem>>, vector<1x2x16x2xbf16>,
    %cst_33 = arith.constant 0.000000e+00 : bf16
    %13 = vector.broadcast %cst_33 : bf16 to vector<1x12x1x2xbf16>
    %c0_34 = arith.constant 0 : index
    %c0_35 = arith.constant 0 : index
    %c0_36 = arith.constant 0 : index
    %c0_37 = arith.constant 0 : index
    %14 = vector.load %arg9[%c0_34, %c0_35, %c0_36, %c0_37] : memref<1x12x16x2xbf16, #tpu.memory_space<vmem>>, vector<1x12x1x2xbf16>
    tpu.vector_store %arg9[%c0_34, %c0_35, %c0_36, %c0_37], %13 {strides = array<i32>} : memref<1x12x16x2xbf16, #tpu.memory_space<vmem>>, vector<1x12x1x2xbf16>,
    %cst_38 = arith.constant 0.000000e+00 : bf16
    %15 = vector.broadcast %cst_38 : bf16 to vector<1x12x7x2xbf16>
    %c0_39 = arith.constant 0 : index
    %c0_40 = arith.constant 0 : index
    %c9 = arith.constant 9 : index
    %c0_41 = arith.constant 0 : index
    %16 = vector.load %arg9[%c0_39, %c0_40, %c9, %c0_41] : memref<1x12x16x2xbf16, #tpu.memory_space<vmem>>, vector<1x12x7x2xbf16>
    tpu.vector_store %arg9[%c0_39, %c0_40, %c9, %c0_41], %15 {strides = array<i32>} : memref<1x12x16x2xbf16, #tpu.memory_space<vmem>>, vector<1x12x7x2xbf16>,
    %c0_42 = arith.constant 0 : index
    %c2_43 = arith.constant 2 : index
    %c1_44 = arith.constant 1 : index
    %c0_45 = arith.constant 0 : index
    %17 = vector.load %arg9[%c0_42, %c2_43, %c1_44, %c0_45] : memref<1x12x16x2xbf16, #tpu.memory_space<vmem>>, vector<1x8x8x2xbf16>
    tpu.vector_store %arg9[%c0_42, %c2_43, %c1_44, %c0_45], %1 {strides = array<i32>} : memref<1x12x16x2xbf16, #tpu.memory_space<vmem>>, vector<1x8x8x2xbf16>,
    %c0_46 = arith.constant 0 : index
    %c0_47 = arith.constant 0 : index
    %c0_48 = arith.constant 0 : index
    %c0_49 = arith.constant 0 : index
    %18 = vector.load %arg8[%c0_46, %c0_47, %c0_48, %c0_49] : memref<1x20x32x2xbf16, #tpu.memory_space<vmem>>, vector<1x20x32x2xbf16>
    %19 = vector.shape_cast %18 : vector<1x20x32x2xbf16> to vector<640x2xbf16>
    %20 = vector.extract_strided_slice %19 {offsets = [32, 0], sizes = [576, 2], strides = [1, 1]} : vector<640x2xbf16> to vector<576x2xbf16>
    %21 = vector.extract_strided_slice %19 {offsets = [33, 0], sizes = [576, 2], strides = [1, 1]} : vector<640x2xbf16> to vector<576x2xbf16>
    %22 = vector.extract_strided_slice %19 {offsets = [34, 0], sizes = [576, 2], strides = [1, 1]} : vector<640x2xbf16> to vector<576x2xbf16>
    %23 = tpu.concatenate %20, %21, %22 in 1 : vector<576x2xbf16>, vector<576x2xbf16>, vector<576x2xbf16> -> vector<576x6xbf16>
    %cst_50 = arith.constant 0.000000e+00 : f32
    %24 = vector.broadcast %cst_50 : f32 to vector<512x2xf32>
    %25 = vector.extract_strided_slice %23 {offsets = [0, 0], sizes = [512, 6], strides = [1, 1]} : vector<576x6xbf16> to vector<512x6xbf16>
    %c0_51 = arith.constant 0 : index
    %c0_52 = arith.constant 0 : index
    %c0_53 = arith.constant 0 : index
    %26 = vector.load %arg3[%c0_51, %c0_52, %c0_53] : memref<3x6x2xbf16, #tpu.memory_space<vmem>>, vector<1x6x2xbf16>
    %27 = vector.shape_cast %26 : vector<1x6x2xbf16> to vector<6x2xbf16>
    %cst_54 = arith.constant dense<0.000000e+00> : vector<512x2xf32>
    %28 = tpu.matmul %25, %27, %cst_54 {dimension_numbers = #tpu.dot_dimension_numbers<[1], [0], [0], [1], [0, 0, 1, 1], [], []>} : vector<512x6xbf16>, vector<6x2xbf16>, vector<512x2xf32> -> vector<512x2xf32>
    %29 = arith.addf %24, %28 : vector<512x2xf32>
    %30 = vector.extract_strided_slice %23 {offsets = [32, 0], sizes = [512, 6], strides = [1, 1]} : vector<576x6xbf16> to vector<512x6xbf16>
    %c1_55 = arith.constant 1 : index
    %c0_56 = arith.constant 0 : index
    %c0_57 = arith.constant 0 : index
    %31 = vector.load %arg3[%c1_55, %c0_56, %c0_57] : memref<3x6x2xbf16, #tpu.memory_space<vmem>>, vector<1x6x2xbf16>
    %32 = vector.shape_cast %31 : vector<1x6x2xbf16> to vector<6x2xbf16>
    %cst_58 = arith.constant dense<0.000000e+00> : vector<512x2xf32>
    %33 = tpu.matmul %30, %32, %cst_58 {dimension_numbers = #tpu.dot_dimension_numbers<[1], [0], [0], [1], [0, 0, 1, 1], [], []>} : vector<512x6xbf16>, vector<6x2xbf16>, vector<512x2xf32> -> vector<512x2xf32>
    %34 = arith.addf %29, %33 : vector<512x2xf32>
    %35 = vector.extract_strided_slice %23 {offsets = [64, 0], sizes = [512, 6], strides = [1, 1]} : vector<576x6xbf16> to vector<512x6xbf16>
    %c2_59 = arith.constant 2 : index
    %c0_60 = arith.constant 0 : index
    %c0_61 = arith.constant 0 : index
    %36 = vector.load %arg3[%c2_59, %c0_60, %c0_61] : memref<3x6x2xbf16, #tpu.memory_space<vmem>>, vector<1x6x2xbf16>
    %37 = vector.shape_cast %36 : vector<1x6x2xbf16> to vector<6x2xbf16>
    %cst_62 = arith.constant dense<0.000000e+00> : vector<512x2xf32>
    %38 = tpu.matmul %35, %37, %cst_62 {dimension_numbers = #tpu.dot_dimension_numbers<[1], [0], [0], [1], [0, 0, 1, 1], [], []>} : vector<512x6xbf16>, vector<6x2xbf16>, vector<512x2xf32> -> vector<512x2xf32>
    %39 = arith.addf %34, %38 : vector<512x2xf32>
    %40 = vector.shape_cast %39 : vector<512x2xf32> to vector<1x16x32x2xf32>
    %41 = vector.extract_strided_slice %40 {offsets = [0, 0, 0, 0], sizes = [1, 16, 16, 2], strides = [1, 1, 1, 1]} : vector<1x16x32x2xf32> to vector<1x16x16x2xf32>
    %c0_63 = arith.constant 0 : index
    %c0_64 = arith.constant 0 : index
    %c0_65 = arith.constant 0 : index
    %c0_66 = arith.constant 0 : index
    %42 = vector.load %arg9[%c0_63, %c0_64, %c0_65, %c0_66] : memref<1x12x16x2xbf16, #tpu.memory_space<vmem>>, vector<1x12x16x2xbf16>
    %43 = vector.shape_cast %42 : vector<1x12x16x2xbf16> to vector<192x2xbf16>
    %44 = vector.extract_strided_slice %43 {offsets = [16, 0], sizes = [160, 2], strides = [1, 1]} : vector<192x2xbf16> to vector<160x2xbf16>
    %45 = vector.extract_strided_slice %43 {offsets = [17, 0], sizes = [160, 2], strides = [1, 1]} : vector<192x2xbf16> to vector<160x2xbf16>
    %46 = vector.extract_strided_slice %43 {offsets = [18, 0], sizes = [160, 2], strides = [1, 1]} : vector<192x2xbf16> to vector<160x2xbf16>
    %47 = tpu.concatenate %44, %45, %46 in 1 : vector<160x2xbf16>, vector<160x2xbf16>, vector<160x2xbf16> -> vector<160x6xbf16>
    %cst_67 = arith.constant 0.000000e+00 : f32
    %48 = vector.broadcast %cst_67 : f32 to vector<128x4xf32>
    %49 = vector.extract_strided_slice %47 {offsets = [0, 0], sizes = [128, 6], strides = [1, 1]} : vector<160x6xbf16> to vector<128x6xbf16>
    %c0_68 = arith.constant 0 : index
    %c0_69 = arith.constant 0 : index
    %c0_70 = arith.constant 0 : index
    %50 = vector.load %arg4[%c0_68, %c0_69, %c0_70] : memref<3x6x4xbf16, #tpu.memory_space<vmem>>, vector<1x6x4xbf16>
    %51 = vector.shape_cast %50 : vector<1x6x4xbf16> to vector<6x4xbf16>
    %cst_71 = arith.constant dense<0.000000e+00> : vector<128x4xf32>
    %52 = tpu.matmul %49, %51, %cst_71 {dimension_numbers = #tpu.dot_dimension_numbers<[1], [0], [0], [1], [0, 0, 1, 1], [], []>} : vector<128x6xbf16>, vector<6x4xbf16>, vector<128x4xf32> -> vector<128x4xf32>
    %53 = arith.addf %48, %52 : vector<128x4xf32>
    %54 = vector.extract_strided_slice %47 {offsets = [16, 0], sizes = [128, 6], strides = [1, 1]} : vector<160x6xbf16> to vector<128x6xbf16>
    %c1_72 = arith.constant 1 : index
    %c0_73 = arith.constant 0 : index
    %c0_74 = arith.constant 0 : index
    %55 = vector.load %arg4[%c1_72, %c0_73, %c0_74] : memref<3x6x4xbf16, #tpu.memory_space<vmem>>, vector<1x6x4xbf16>
    %56 = vector.shape_cast %55 : vector<1x6x4xbf16> to vector<6x4xbf16>
    %cst_75 = arith.constant dense<0.000000e+00> : vector<128x4xf32>
    %57 = tpu.matmul %54, %56, %cst_75 {dimension_numbers = #tpu.dot_dimension_numbers<[1], [0], [0], [1], [0, 0, 1, 1], [], []>} : vector<128x6xbf16>, vector<6x4xbf16>, vector<128x4xf32> -> vector<128x4xf32>
    %58 = arith.addf %53, %57 : vector<128x4xf32>
    %59 = vector.extract_strided_slice %47 {offsets = [32, 0], sizes = [128, 6], strides = [1, 1]} : vector<160x6xbf16> to vector<128x6xbf16>
    %c2_76 = arith.constant 2 : index
    %c0_77 = arith.constant 0 : index
    %c0_78 = arith.constant 0 : index
    %60 = vector.load %arg4[%c2_76, %c0_77, %c0_78] : memref<3x6x4xbf16, #tpu.memory_space<vmem>>, vector<1x6x4xbf16>
    %61 = vector.shape_cast %60 : vector<1x6x4xbf16> to vector<6x4xbf16>
    %cst_79 = arith.constant dense<0.000000e+00> : vector<128x4xf32>
    %62 = tpu.matmul %59, %61, %cst_79 {dimension_numbers = #tpu.dot_dimension_numbers<[1], [0], [0], [1], [0, 0, 1, 1], [], []>} : vector<128x6xbf16>, vector<6x4xbf16>, vector<128x4xf32> -> vector<128x4xf32>
    %63 = arith.addf %58, %62 : vector<128x4xf32>
    %64 = vector.shape_cast %63 : vector<128x4xf32> to vector<1x8x16x4xf32>
    %65 = vector.extract_strided_slice %64 {offsets = [0, 0, 0, 0], sizes = [1, 8, 8, 4], strides = [1, 1, 1, 1]} : vector<1x8x16x4xf32> to vector<1x8x8x4xf32>
    %66 = vector.extract_strided_slice %65 {offsets = [0, 0, 0, 0], sizes = [1, 8, 8, 2], strides = [1, 1, 1, 1]} : vector<1x8x8x4xf32> to vector<1x8x8x2xf32>
    %67 = vector.extract_strided_slice %65 {offsets = [0, 0, 0, 2], sizes = [1, 8, 8, 2], strides = [1, 1, 1, 1]} : vector<1x8x8x4xf32> to vector<1x8x8x2xf32>
    %68 = arith.extf %0 : vector<1x16x16x2xbf16> to vector<1x16x16x2xf32>
    %69 = vector.shape_cast %68 : vector<1x16x16x2xf32> to vector<1x16x8x2x2xf32>
    %70 = vector.extract_strided_slice %69 {offsets = [0, 0, 0, 0, 0], sizes = [1, 16, 8, 1, 2], strides = [1, 1, 1, 1, 1]} : vector<1x16x8x2x2xf32> to vector<1x16x8x1x2xf32>
    %71 = vector.shape_cast %70 : vector<1x16x8x1x2xf32> to vector<1x16x8x2xf32>
    %72 = vector.extract_strided_slice %69 {offsets = [0, 0, 0, 1, 0], sizes = [1, 16, 8, 1, 2], strides = [1, 1, 1, 1, 1]} : vector<1x16x8x2x2xf32> to vector<1x16x8x1x2xf32>
    %73 = vector.shape_cast %72 : vector<1x16x8x1x2xf32> to vector<1x16x8x2xf32>
    %74 = arith.addf %71, %73 : vector<1x16x8x2xf32>
    %75 = vector.shape_cast %74 : vector<1x16x8x2xf32> to vector<1x8x2x8x2xf32>
    %76 = vector.extract_strided_slice %75 {offsets = [0, 0, 0, 0, 0], sizes = [1, 8, 1, 8, 2], strides = [1, 1, 1, 1, 1]} : vector<1x8x2x8x2xf32> to vector<1x8x1x8x2xf32>
    %77 = vector.shape_cast %76 : vector<1x8x1x8x2xf32> to vector<1x8x8x2xf32>
    %78 = vector.extract_strided_slice %75 {offsets = [0, 0, 1, 0, 0], sizes = [1, 8, 1, 8, 2], strides = [1, 1, 1, 1, 1]} : vector<1x8x2x8x2xf32> to vector<1x8x1x8x2xf32>
    %79 = vector.shape_cast %78 : vector<1x8x1x8x2xf32> to vector<1x8x8x2xf32>
    %80 = arith.addf %77, %79 : vector<1x8x8x2xf32>
    %cst_80 = arith.constant 0.000000e+00 : bf16
    %81 = vector.broadcast %cst_80 : bf16 to vector<1x2x16x2xbf16>
    %c0_81 = arith.constant 0 : index
    %c0_82 = arith.constant 0 : index
    %c0_83 = arith.constant 0 : index
    %c0_84 = arith.constant 0 : index
    %82 = vector.load %arg10[%c0_81, %c0_82, %c0_83, %c0_84] : memref<1x12x16x2xbf16, #tpu.memory_space<vmem>>, vector<1x2x16x2xbf16>
    tpu.vector_store %arg10[%c0_81, %c0_82, %c0_83, %c0_84], %81 {strides = array<i32>} : memref<1x12x16x2xbf16, #tpu.memory_space<vmem>>, vector<1x2x16x2xbf16>,
    %c0_85 = arith.constant 0 : index
    %c10_86 = arith.constant 10 : index
    %c0_87 = arith.constant 0 : index
    %c0_88 = arith.constant 0 : index
    %83 = vector.load %arg10[%c0_85, %c10_86, %c0_87, %c0_88] : memref<1x12x16x2xbf16, #tpu.memory_space<vmem>>, vector<1x2x16x2xbf16>
    tpu.vector_store %arg10[%c0_85, %c10_86, %c0_87, %c0_88], %81 {strides = array<i32>} : memref<1x12x16x2xbf16, #tpu.memory_space<vmem>>, vector<1x2x16x2xbf16>,
    %cst_89 = arith.constant 0.000000e+00 : bf16
    %84 = vector.broadcast %cst_89 : bf16 to vector<1x12x1x2xbf16>
    %c0_90 = arith.constant 0 : index
    %c0_91 = arith.constant 0 : index
    %c0_92 = arith.constant 0 : index
    %c0_93 = arith.constant 0 : index
    %85 = vector.load %arg10[%c0_90, %c0_91, %c0_92, %c0_93] : memref<1x12x16x2xbf16, #tpu.memory_space<vmem>>, vector<1x12x1x2xbf16>
    tpu.vector_store %arg10[%c0_90, %c0_91, %c0_92, %c0_93], %84 {strides = array<i32>} : memref<1x12x16x2xbf16, #tpu.memory_space<vmem>>, vector<1x12x1x2xbf16>,
    %cst_94 = arith.constant 0.000000e+00 : bf16
    %86 = vector.broadcast %cst_94 : bf16 to vector<1x12x7x2xbf16>
    %c0_95 = arith.constant 0 : index
    %c0_96 = arith.constant 0 : index
    %c9_97 = arith.constant 9 : index
    %c0_98 = arith.constant 0 : index
    %87 = vector.load %arg10[%c0_95, %c0_96, %c9_97, %c0_98] : memref<1x12x16x2xbf16, #tpu.memory_space<vmem>>, vector<1x12x7x2xbf16>
    tpu.vector_store %arg10[%c0_95, %c0_96, %c9_97, %c0_98], %86 {strides = array<i32>} : memref<1x12x16x2xbf16, #tpu.memory_space<vmem>>, vector<1x12x7x2xbf16>,
    %88 = arith.truncf %80 : vector<1x8x8x2xf32> to vector<1x8x8x2xbf16>
    %c0_99 = arith.constant 0 : index
    %c2_100 = arith.constant 2 : index
    %c1_101 = arith.constant 1 : index
    %c0_102 = arith.constant 0 : index
    %89 = vector.load %arg10[%c0_99, %c2_100, %c1_101, %c0_102] : memref<1x12x16x2xbf16, #tpu.memory_space<vmem>>, vector<1x8x8x2xbf16>
    tpu.vector_store %arg10[%c0_99, %c2_100, %c1_101, %c0_102], %88 {strides = array<i32>} : memref<1x12x16x2xbf16, #tpu.memory_space<vmem>>, vector<1x8x8x2xbf16>,
    %c0_103 = arith.constant 0 : index
    %c0_104 = arith.constant 0 : index
    %c0_105 = arith.constant 0 : index
    %c0_106 = arith.constant 0 : index
    %90 = vector.load %arg10[%c0_103, %c0_104, %c0_105, %c0_106] : memref<1x12x16x2xbf16, #tpu.memory_space<vmem>>, vector<1x12x16x2xbf16>
    %91 = vector.shape_cast %90 : vector<1x12x16x2xbf16> to vector<192x2xbf16>
    %92 = vector.extract_strided_slice %91 {offsets = [16, 0], sizes = [160, 2], strides = [1, 1]} : vector<192x2xbf16> to vector<160x2xbf16>
    %93 = vector.extract_strided_slice %91 {offsets = [17, 0], sizes = [160, 2], strides = [1, 1]} : vector<192x2xbf16> to vector<160x2xbf16>
    %94 = vector.extract_strided_slice %91 {offsets = [18, 0], sizes = [160, 2], strides = [1, 1]} : vector<192x2xbf16> to vector<160x2xbf16>
    %95 = tpu.concatenate %92, %93, %94 in 1 : vector<160x2xbf16>, vector<160x2xbf16>, vector<160x2xbf16> -> vector<160x6xbf16>
    %cst_107 = arith.constant 0.000000e+00 : f32
    %96 = vector.broadcast %cst_107 : f32 to vector<128x2xf32>
    %97 = vector.extract_strided_slice %95 {offsets = [0, 0], sizes = [128, 6], strides = [1, 1]} : vector<160x6xbf16> to vector<128x6xbf16>
    %c0_108 = arith.constant 0 : index
    %c0_109 = arith.constant 0 : index
    %c0_110 = arith.constant 0 : index
    %98 = vector.load %arg5[%c0_108, %c0_109, %c0_110] : memref<3x6x2xbf16, #tpu.memory_space<vmem>>, vector<1x6x2xbf16>
    %99 = vector.shape_cast %98 : vector<1x6x2xbf16> to vector<6x2xbf16>
    %cst_111 = arith.constant dense<0.000000e+00> : vector<128x2xf32>
    %100 = tpu.matmul %97, %99, %cst_111 {dimension_numbers = #tpu.dot_dimension_numbers<[1], [0], [0], [1], [0, 0, 1, 1], [], []>} : vector<128x6xbf16>, vector<6x2xbf16>, vector<128x2xf32> -> vector<128x2xf32>
    %101 = arith.addf %96, %100 : vector<128x2xf32>
    %102 = vector.extract_strided_slice %95 {offsets = [16, 0], sizes = [128, 6], strides = [1, 1]} : vector<160x6xbf16> to vector<128x6xbf16>
    %c1_112 = arith.constant 1 : index
    %c0_113 = arith.constant 0 : index
    %c0_114 = arith.constant 0 : index
    %103 = vector.load %arg5[%c1_112, %c0_113, %c0_114] : memref<3x6x2xbf16, #tpu.memory_space<vmem>>, vector<1x6x2xbf16>
    %104 = vector.shape_cast %103 : vector<1x6x2xbf16> to vector<6x2xbf16>
    %cst_115 = arith.constant dense<0.000000e+00> : vector<128x2xf32>
    %105 = tpu.matmul %102, %104, %cst_115 {dimension_numbers = #tpu.dot_dimension_numbers<[1], [0], [0], [1], [0, 0, 1, 1], [], []>} : vector<128x6xbf16>, vector<6x2xbf16>, vector<128x2xf32> -> vector<128x2xf32>
    %106 = arith.addf %101, %105 : vector<128x2xf32>
    %107 = vector.extract_strided_slice %95 {offsets = [32, 0], sizes = [128, 6], strides = [1, 1]} : vector<160x6xbf16> to vector<128x6xbf16>
    %c2_116 = arith.constant 2 : index
    %c0_117 = arith.constant 0 : index
    %c0_118 = arith.constant 0 : index
    %108 = vector.load %arg5[%c2_116, %c0_117, %c0_118] : memref<3x6x2xbf16, #tpu.memory_space<vmem>>, vector<1x6x2xbf16>
    %109 = vector.shape_cast %108 : vector<1x6x2xbf16> to vector<6x2xbf16>
    %cst_119 = arith.constant dense<0.000000e+00> : vector<128x2xf32>
    %110 = tpu.matmul %107, %109, %cst_119 {dimension_numbers = #tpu.dot_dimension_numbers<[1], [0], [0], [1], [0, 0, 1, 1], [], []>} : vector<128x6xbf16>, vector<6x2xbf16>, vector<128x2xf32> -> vector<128x2xf32>
    %111 = arith.addf %106, %110 : vector<128x2xf32>
    %112 = vector.shape_cast %111 : vector<128x2xf32> to vector<1x8x16x2xf32>
    %113 = vector.extract_strided_slice %112 {offsets = [0, 0, 0, 0], sizes = [1, 8, 8, 2], strides = [1, 1, 1, 1]} : vector<1x8x16x2xf32> to vector<1x8x8x2xf32>
    %114 = vector.shape_cast %67 : vector<1x8x8x2xf32> to vector<1x8x8x1x2xf32>
    %115 = vector.shape_cast %114 : vector<1x8x8x1x2xf32> to vector<1x8x8x1x2xf32>
    %116 = vector.broadcast %115 : vector<1x8x8x1x2xf32> to vector<1x8x8x2x2xf32>
    %117 = vector.shape_cast %116 : vector<1x8x8x2x2xf32> to vector<1x8x16x2xf32>
    %118 = vector.shape_cast %117 : vector<1x8x16x2xf32> to vector<1x8x1x16x2xf32>
    %119 = vector.shape_cast %118 : vector<1x8x1x16x2xf32> to vector<1x8x1x16x2xf32>
    %120 = vector.broadcast %119 : vector<1x8x1x16x2xf32> to vector<1x8x2x16x2xf32>
    %121 = vector.shape_cast %120 : vector<1x8x2x16x2xf32> to vector<1x16x16x2xf32>
    %122 = arith.addf %41, %121 : vector<1x16x16x2xf32>
    %123 = arith.addf %66, %113 : vector<1x8x8x2xf32>
    %124 = arith.truncf %122 : vector<1x16x16x2xf32> to vector<1x16x16x2xbf16>
    %125 = vector.shape_cast %124 : vector<1x16x16x2xbf16> to vector<1x16x32xbf16>
    %c0_120 = arith.constant 0 : index
    %c0_121 = arith.constant 0 : index
    %c0_122 = arith.constant 0 : index
    %126 = vector.load %arg6[%c0_120, %c0_121, %c0_122] : memref<1x16x32xbf16, #tpu.memory_space<vmem>>, vector<1x16x32xbf16>
    tpu.vector_store %arg6[%c0_120, %c0_121, %c0_122], %125 {strides = array<i32>} : memref<1x16x32xbf16, #tpu.memory_space<vmem>>, vector<1x16x32xbf16>,
    %127 = arith.truncf %123 : vector<1x8x8x2xf32> to vector<1x8x8x2xbf16>
    %128 = vector.shape_cast %127 : vector<1x8x8x2xbf16> to vector<1x8x16xbf16>
    %c0_123 = arith.constant 0 : index
    %c0_124 = arith.constant 0 : index
    %c0_125 = arith.constant 0 : index
    %129 = vector.load %arg7[%c0_123, %c0_124, %c0_125] : memref<1x8x16xbf16, #tpu.memory_space<vmem>>, vector<1x8x16xbf16>
    tpu.vector_store %arg7[%c0_123, %c0_124, %c0_125], %128 {strides = array<i32>} : memref<1x8x16xbf16, #tpu.memory_space<vmem>>, vector<1x8x16xbf16>,
    return
  }
  func.func @transform_0(%arg0: i32) -> (i32, i32, i32, i32) {
    %c0_i32 = arith.constant 0 : i32
    %c0_i32_0 = arith.constant 0 : i32
    %c0_i32_1 = arith.constant 0 : i32
    %c0_i32_2 = arith.constant 0 : i32
    return %arg0, %c0_i32, %c0_i32_0, %c0_i32_1 : i32, i32, i32, i32
  }
  func.func @transform_1(%arg0: i32) -> (i32, i32, i32, i32) {
    %c0_i32 = arith.constant 0 : i32
    %c0_i32_0 = arith.constant 0 : i32
    %c0_i32_1 = arith.constant 0 : i32
    %c0_i32_2 = arith.constant 0 : i32
    return %arg0, %c0_i32, %c0_i32_0, %c0_i32_1 : i32, i32, i32, i32
  }
  func.func @transform_2(%arg0: i32) -> (i32, i32, i32) {
    %c0_i32 = arith.constant 0 : i32
    %c0_i32_0 = arith.constant 0 : i32
    %c0_i32_1 = arith.constant 0 : i32
    %c0_i32_2 = arith.constant 0 : i32
    return %c0_i32, %c0_i32_0, %c0_i32_1 : i32, i32, i32
  }
  func.func @transform_3(%arg0: i32) -> (i32, i32, i32) {
    %c0_i32 = arith.constant 0 : i32
    %c0_i32_0 = arith.constant 0 : i32
    %c0_i32_1 = arith.constant 0 : i32
    %c0_i32_2 = arith.constant 0 : i32
    return %c0_i32, %c0_i32_0, %c0_i32_1 : i32, i32, i32
  }
  func.func @transform_4(%arg0: i32) -> (i32, i32, i32) {
    %c0_i32 = arith.constant 0 : i32
    %c0_i32_0 = arith.constant 0 : i32
    %c0_i32_1 = arith.constant 0 : i32
    %c0_i32_2 = arith.constant 0 : i32
    return %c0_i32, %c0_i32_0, %c0_i32_1 : i32, i32, i32
  }
  func.func @transform_5(%arg0: i32) -> (i32, i32, i32) {
    %c0_i32 = arith.constant 0 : i32
    %c0_i32_0 = arith.constant 0 : i32
    %c0_i32_1 = arith.constant 0 : i32
    return %arg0, %c0_i32, %c0_i32_0 : i32, i32, i32
  }
  func.func @transform_6(%arg0: i32) -> (i32, i32, i32) {
    %c0_i32 = arith.constant 0 : i32
    %c0_i32_0 = arith.constant 0 : i32
    %c0_i32_1 = arith.constant 0 : i32
    return %arg0, %c0_i32, %c0_i32_0 : i32, i32, i32
  }
}

</mosaic_0001>

<llo_original>
// kernel: octave_conv_forward.1
$region0: #{octave_conv_forward.1}
  #allocation0 [shape = 'u32[]', space=smem, size = 0x4, offset = 0x4, fixed_abs, tag = 'smem constant byte address 0x4 - core index']
  #allocation1 [shape = 'u32[72,128]{1,0:T(1,128)}', space=vmem, size = 0x9000, scoped, tag = 'internal scratch']
  #allocation2 [shape = 'bf16[1,20,32,2]{3,2,1,0:T(8,128)(2,1)}', space=vmem, size = 0x28000, scoped, tag = 'scratch operand']
  #allocation3 [shape = 'bf16[1,12,16,2]{3,2,1,0:T(8,128)(2,1)}', space=vmem, size = 0xc000, scoped, tag = 'scratch operand']
  #allocation4 [shape = 'bf16[1,12,16,2]{3,2,1,0:T(8,128)(2,1)}', space=vmem, size = 0xc000, scoped, tag = 'scratch operand']
  %s0 = inlined_call_operand.vmem [shape: bf16[2,16,16,2], index: 0, kind: input, shape index: {}]
  %s1 = inlined_call_operand.vmem [shape: bf16[2,8,8,2], index: 1, kind: input, shape index: {}]
  %s2 = inlined_call_operand.vmem [shape: bf16[3,6,2], index: 2, kind: input, shape index: {}]
  %s3 = inlined_call_operand.vmem [shape: bf16[3,6,4], index: 3, kind: input, shape index: {}]
  %s4 = inlined_call_operand.vmem [shape: bf16[3,6,2], index: 4, kind: input, shape index: {}]
  %s5 = inlined_call_operand.vmem [shape: bf16[2,16,32], index: 5, kind: output, shape index: {0}]
  %s6 = inlined_call_operand.vmem [shape: bf16[2,8,16], index: 6, kind: output, shape index: {1}]
  %7 = xla_tuple %s5, %s6
  %s8 = sld [smem:[#allocation0]]
  $region61: #{octave_conv_forward.1} parent=0
    _
  %s10 = ssub.s32 1, %s8
  %s11 = scalar_select 0, %s10, %s8
  loop: start=0, step=1, limit=4
  $region2: #{octave_conv_forward.1} parent=0 // loop_pre_header
    _
  $region3: #{octave_conv_forward.1} parent=0 // loop_header
    %s13 = sphi 0, %s17
    %p14 = scmp.ge.s32.totalorder %s13, 4
    %s23 = sphi 0, %s25
    %s26 = sphi 0, %s23
    %s27 = sphi 0, %s26
    %s43 = sphi 0, %s27
    %s49 = sphi 0, %s51
    %s52 = sphi 0, %s49
    %s53 = sphi 0, %s52
    %s69 = sphi 0, %s53
    %s73 = sphi 0, %s73
    %s75 = sphi 0, %s73
    %s76 = sphi 0, %s75
    %s90 = sphi 0, %s76
    %s94 = sphi 0, %s94
    %s96 = sphi 0, %s94
    %s97 = sphi 0, %s96
    %s111 = sphi 0, %s97
    %s115 = sphi 0, %s115
    %s117 = sphi 0, %s115
    %s118 = sphi 0, %s117
    %s132 = sphi 0, %s118
    %s138 = sphi 0, %s140
    %s141 = sphi 0, %s138
    %s142 = sphi 0, %s141
    %s158 = sphi 0, %s142
    %s164 = sphi 0, %s166
    %s167 = sphi 0, %s164
    %s168 = sphi 0, %s167
    %s184 = sphi 0, %s168
  $region4: #{octave_conv_forward.1} parent=0 // loop_header_branch
    %16 = sbr.rel (%p14) target = $region8
  $region5: #{octave_conv_forward.1} parent=0 // loop_body
    %s18 = ssub.s32 %s13, 1
    %s19 = ssub.s32 %s13, 2
    %s20 = sadd.s32 %s13, 1
    %s21 = ssub.s32 %s13, %s20
    %p22 = scmp.eq.s32.totalorder %s21, 0
    %s24 = sadd.s32 %s23, 1
    %s25 = scalar_select %p22, %s23, %s24
    %p28 = pneg %p22
    %p29 = scmp.eq.s32.totalorder %s13, 1
    %p30 = por %p28, %p29
    %p31 = scmp.ne.s32.totalorder %s23, %s26
    %p32 = scmp.eq.s32.totalorder %s13, 0
    %p33 = por %p31, %p32
    %p34 = scmp.ne.s32.totalorder %s23, %s26
    %p35 = scmp.eq.s32.totalorder %s18, 1
    %p36 = por %p34, %p35
    %p37 = scmp.ne.s32.totalorder %s26, %s27
    %p38 = scmp.eq.s32.totalorder %s18, 0
    %p39 = por %p37, %p38
    %p40 = scmp.ne.s32.totalorder %s26, %s27
    %p41 = scmp.eq.s32.totalorder %s19, 1
    %p42 = por %p40, %p41
    %p44 = scmp.ne.s32.totalorder %s27, %s43
    %p45 = scmp.eq.s32.totalorder %s19, 0
    %p46 = por %p44, %p45
    %s47 = ssub.s32 %s13, %s20
    %p48 = scmp.eq.s32.totalorder %s47, 0
    %s50 = sadd.s32 %s49, 1
    %s51 = scalar_select %p48, %s49, %s50
    %p54 = pneg %p48
    %p55 = scmp.eq.s32.totalorder %s13, 1
    %p56 = por %p54, %p55
    %p57 = scmp.ne.s32.totalorder %s49, %s52
    %p58 = scmp.eq.s32.totalorder %s13, 0
    %p59 = por %p57, %p58
    %p60 = scmp.ne.s32.totalorder %s49, %s52
    %p61 = scmp.eq.s32.totalorder %s18, 1
    %p62 = por %p60, %p61
    %p63 = scmp.ne.s32.totalorder %s52, %s53
    %p64 = scmp.eq.s32.totalorder %s18, 0
    %p65 = por %p63, %p64
    %p66 = scmp.ne.s32.totalorder %s52, %s53
    %p67 = scmp.eq.s32.totalorder %s19, 1
    %p68 = por %p66, %p67
    %p70 = scmp.ne.s32.totalorder %s53, %s69
    %p71 = scmp.eq.s32.totalorder %s19, 0
    %p72 = por %p70, %p71
    %s74 = sadd.s32 %s73, 1
    %p77 = scmp.eq.s32.totalorder %s13, 1
    %p78 = scmp.ne.s32.totalorder %s73, %s75
    %p79 = scmp.eq.s32.totalorder %s13, 0
    %p80 = por %p78, %p79
    %p81 = scmp.ne.s32.totalorder %s73, %s75
    %p82 = scmp.eq.s32.totalorder %s18, 1
    %p83 = por %p81, %p82
    %p84 = scmp.ne.s32.totalorder %s75, %s76
    %p85 = scmp.eq.s32.totalorder %s18, 0
    %p86 = por %p84, %p85
    %p87 = scmp.ne.s32.totalorder %s75, %s76
    %p88 = scmp.eq.s32.totalorder %s19, 1
    %p89 = por %p87, %p88
    %p91 = scmp.ne.s32.totalorder %s76, %s90
    %p92 = scmp.eq.s32.totalorder %s19, 0
    %p93 = por %p91, %p92
    %s95 = sadd.s32 %s94, 1
    %p98 = scmp.eq.s32.totalorder %s13, 1
    %p99 = scmp.ne.s32.totalorder %s94, %s96
    %p100 = scmp.eq.s32.totalorder %s13, 0
    %p101 = por %p99, %p100
    %p102 = scmp.ne.s32.totalorder %s94, %s96
    %p103 = scmp.eq.s32.totalorder %s18, 1
    %p104 = por %p102, %p103
    %p105 = scmp.ne.s32.totalorder %s96, %s97
    %p106 = scmp.eq.s32.totalorder %s18, 0
    %p107 = por %p105, %p106
    %p108 = scmp.ne.s32.totalorder %s96, %s97
    %p109 = scmp.eq.s32.totalorder %s19, 1
    %p110 = por %p108, %p109
    %p112 = scmp.ne.s32.totalorder %s97, %s111
    %p113 = scmp.eq.s32.totalorder %s19, 0
    %p114 = por %p112, %p113
    %s116 = sadd.s32 %s115, 1
    %p119 = scmp.eq.s32.totalorder %s13, 1
    %p120 = scmp.ne.s32.totalorder %s115, %s117
    %p121 = scmp.eq.s32.totalorder %s13, 0
    %p122 = por %p120, %p121
    %p123 = scmp.ne.s32.totalorder %s115, %s117
    %p124 = scmp.eq.s32.totalorder %s18, 1
    %p125 = por %p123, %p124
    %p126 = scmp.ne.s32.totalorder %s117, %s118
    %p127 = scmp.eq.s32.totalorder %s18, 0
    %p128 = por %p126, %p127
    %p129 = scmp.ne.s32.totalorder %s117, %s118
    %p130 = scmp.eq.s32.totalorder %s19, 1
    %p131 = por %p129, %p130
    %p133 = scmp.ne.s32.totalorder %s118, %s132
    %p134 = scmp.eq.s32.totalorder %s19, 0
    %p135 = por %p133, %p134
    %s136 = ssub.s32 %s13, %s20
    %p137 = scmp.eq.s32.totalorder %s136, 0
    %s139 = sadd.s32 %s138, 1
    %s140 = scalar_select %p137, %s138, %s139
    %p143 = pneg %p137
    %p144 = scmp.eq.s32.totalorder %s13, 1
    %p145 = por %p143, %p144
    %p146 = scmp.ne.s32.totalorder %s138, %s141
    %p147 = scmp.eq.s32.totalorder %s13, 0
    %p148 = por %p146, %p147
    %p149 = scmp.ne.s32.totalorder %s138, %s141
    %p150 = scmp.eq.s32.totalorder %s18, 1
    %p151 = por %p149, %p150
    %p152 = scmp.ne.s32.totalorder %s141, %s142
    %p153 = scmp.eq.s32.totalorder %s18, 0
    %p154 = por %p152, %p153
    %p155 = scmp.ne.s32.totalorder %s141, %s142
    %p156 = scmp.eq.s32.totalorder %s19, 1
    %p157 = por %p155, %p156
    %p159 = scmp.ne.s32.totalorder %s142, %s158
    %p160 = scmp.eq.s32.totalorder %s19, 0
    %p161 = por %p159, %p160
    %s162 = ssub.s32 %s13, %s20
    %p163 = scmp.eq.s32.totalorder %s162, 0
    %s165 = sadd.s32 %s164, 1
    %s166 = scalar_select %p163, %s164, %s165
    %p169 = pneg %p163
    %p170 = scmp.eq.s32.totalorder %s13, 1
    %p171 = por %p169, %p170
    %p172 = scmp.ne.s32.totalorder %s164, %s167
    %p173 = scmp.eq.s32.totalorder %s13, 0
    %p174 = por %p172, %p173
    %p175 = scmp.ne.s32.totalorder %s164, %s167
    %p176 = scmp.eq.s32.totalorder %s18, 1
    %p177 = por %p175, %p176
    %p178 = scmp.ne.s32.totalorder %s167, %s168
    %p179 = scmp.eq.s32.totalorder %s18, 0
    %p180 = por %p178, %p179
    %p181 = scmp.ne.s32.totalorder %s167, %s168
    %p182 = scmp.eq.s32.totalorder %s19, 1
    %p183 = por %p181, %p182
    %p185 = scmp.ne.s32.totalorder %s168, %s184
    %p186 = scmp.eq.s32.totalorder %s19, 0
    %p187 = por %p185, %p186
    %p188 = scmp.le.s32.totalorder 1, %s13
    %p189 = scmp.lt.s32.totalorder %s13, 3
    %p190 = pnand %p188, %p189
    %p191 = pneg %p190
    // Predicated region
    $region9: #{octave_conv_forward.1} parent=5 // pred_check
      _
    $region10: #{octave_conv_forward.1} parent=5 // pred_check_branch
      %193 = sbr.rel (%p190) target = $region12
    $region11: #{octave_conv_forward.1} parent=5 // pred_region
      %s194 = ssub.s32 %s13, 1
      // Predicated region
      $region13: #{octave_conv_forward.1} parent=11 // pred_check
        %p195 = pneg %p86
      $region14: #{octave_conv_forward.1} parent=11 // pred_check_branch
        %197 = sbr.rel (%p195) target = $region16
      $region15: #{octave_conv_forward.1} parent=11 // pred_region
        _
      $region16: #{octave_conv_forward.1} parent=11 // pred_fallthru
        _
      // Predicated region
      $region17: #{octave_conv_forward.1} parent=11 // pred_check
        %p198 = pneg %p107
      $region18: #{octave_conv_forward.1} parent=11 // pred_check_branch
        %200 = sbr.rel (%p198) target = $region20
      $region19: #{octave_conv_forward.1} parent=11 // pred_region
        _
      $region20: #{octave_conv_forward.1} parent=11 // pred_fallthru
        _
      // Predicated region
      $region21: #{octave_conv_forward.1} parent=11 // pred_check
        %p201 = pneg %p128
      $region22: #{octave_conv_forward.1} parent=11 // pred_check_branch
        %203 = sbr.rel (%p201) target = $region24
      $region23: #{octave_conv_forward.1} parent=11 // pred_region
        _
      $region24: #{octave_conv_forward.1} parent=11 // pred_fallthru
        _
    $region12: #{octave_conv_forward.1} parent=5 // pred_fallthru
      _
    %p204 = scmp.lt.s32.totalorder %s13, 2
    // Predicated region
    $region25: #{octave_conv_forward.1} parent=5 // pred_check
      %p205 = pneg %p204
    $region26: #{octave_conv_forward.1} parent=5 // pred_check_branch
      %207 = sbr.rel (%p205) target = $region28
    $region27: #{octave_conv_forward.1} parent=5 // pred_region
      // Predicated region
      $region29: #{octave_conv_forward.1} parent=27 // pred_check
        %p208 = pneg %p33
      $region30: #{octave_conv_forward.1} parent=27 // pred_check_branch
        %210 = sbr.rel (%p208) target = $region32
      $region31: #{octave_conv_forward.1} parent=27 // pred_region
        %p211 = scmp.lt.s32.totalorder %s13, 1
        %s212 = scalar_select %p211, %s13, 1
        %s213 = smul.addr %s212, 32
        %s214 = smul.addr %s213, 4
        %s215 = scalar_lea.vmem %s0, %s214
      $region32: #{octave_conv_forward.1} parent=27 // pred_fallthru
        _
      // Predicated region
      $region33: #{octave_conv_forward.1} parent=27 // pred_check
        %p216 = pneg %p59
      $region34: #{octave_conv_forward.1} parent=27 // pred_check_branch
        %218 = sbr.rel (%p216) target = $region36
      $region35: #{octave_conv_forward.1} parent=27 // pred_region
        %p219 = scmp.lt.s32.totalorder %s13, 1
        %s220 = scalar_select %p219, %s13, 1
        %s221 = smul.addr %s220, 8
        %s222 = smul.addr %s221, 4
        %s223 = scalar_lea.vmem %s1, %s222
      $region36: #{octave_conv_forward.1} parent=27 // pred_fallthru
        _
    $region28: #{octave_conv_forward.1} parent=5 // pred_fallthru
      _
    %p224 = scmp.le.s32.totalorder 1, %s13
    %p225 = scmp.lt.s32.totalorder %s13, 3
    %p226 = pnand %p224, %p225
    %p227 = pneg %p226
    // Predicated region
    $region37: #{octave_conv_forward.1} parent=5 // pred_check
      _
    $region38: #{octave_conv_forward.1} parent=5 // pred_check_branch
      %229 = sbr.rel (%p226) target = $region40
    $region39: #{octave_conv_forward.1} parent=5 // pred_region
      %s230 = ssub.s32 %s13, 1
      %p231 = scmp.lt.s32.totalorder %s18, 1
      %s232 = scalar_select %p231, %s18, 1
      %s233 = smul.addr %s232, 32
      %s234 = smul.addr %s233, 4
      %s235 = scalar_lea.vmem %s0, %s234
      %p236 = pneg %p39
      %p237 = pneg %p36
      %p238 = scmp.lt.s32.totalorder %s18, 1
      %s239 = scalar_select %p238, %s18, 1
      %s240 = smul.addr %s239, 8
      %s241 = smul.addr %s240, 4
      %s242 = scalar_lea.vmem %s1, %s241
      %p243 = pneg %p65
      %p244 = pneg %p62
      %p245 = pneg %p86
      %p246 = pneg %p83
      %p247 = pneg %p107
      %p248 = pneg %p104
      %p249 = pneg %p128
      %p250 = pneg %p125
      %p251 = pneg %p154
      %p252 = pneg %p151
      %p253 = scmp.lt.s32.totalorder %s18, 1
      %s254 = scalar_select %p253, %s18, 1
      %s255 = smul.addr %s254, 2
      %s256 = smul.addr %s255, 4
      %s257 = scalar_lea.vmem %s5, %s256
      %p258 = pneg %p180
      %p259 = pneg %p177
      %p260 = scmp.lt.s32.totalorder %s18, 1
      %s261 = scalar_select %p260, %s18, 1
      %s262 = smul.addr %s261, 4
      %s263 = scalar_lea.vmem %s6, %s262
      %p264 = scmp.lt.s32.totalorder %s18, 1
      %s265 = scalar_select %p264, %s18, 1
      %s266 = smul.addr %s265, 32
      %s267 = smul.addr %s266, 4
      %s268 = scalar_lea.vmem %s0, %s267
      %p269 = scmp.lt.s32.totalorder %s18, 1
      %s270 = scalar_select %p269, %s18, 1
      %s271 = smul.addr %s270, 8
      %s272 = smul.addr %s271, 4
      %s273 = scalar_lea.vmem %s1, %s272
      %p274 = scmp.lt.s32.totalorder %s18, 1
      %s275 = scalar_select %p274, %s18, 1
      %s276 = smul.addr %s275, 2
      %s277 = smul.addr %s276, 4
      %s278 = scalar_lea.vmem %s5, %s277
      %p279 = scmp.lt.s32.totalorder %s18, 1
      %s280 = scalar_select %p279, %s18, 1
      %s281 = smul.addr %s280, 4
      %s282 = scalar_lea.vmem %s6, %s281
      %v284 = vld [vmem:[%s268] sm:$0xf]
      %v285 = vld [vmem:[%s268 + $0x4] sm:$0xf]
      %v286 = vld [vmem:[%s268 + $0x8] sm:$0xf]
      %v287 = vld [vmem:[%s268 + $0xc] sm:$0xf]
      %v288 = vld [vmem:[%s268 + $0x10] sm:$0xf]
      %v289 = vld [vmem:[%s268 + $0x14] sm:$0xf]
      %v290 = vld [vmem:[%s268 + $0x18] sm:$0xf]
      %v291 = vld [vmem:[%s268 + $0x1c] sm:$0xf]
      %v292 = vld [vmem:[%s268 + $0x20] sm:$0xf]
      %v293 = vld [vmem:[%s268 + $0x24] sm:$0xf]
      %v294 = vld [vmem:[%s268 + $0x28] sm:$0xf]
      %v295 = vld [vmem:[%s268 + $0x2c] sm:$0xf]
      %v296 = vld [vmem:[%s268 + $0x30] sm:$0xf]
      %v297 = vld [vmem:[%s268 + $0x34] sm:$0xf]
      %v298 = vld [vmem:[%s268 + $0x38] sm:$0xf]
      %v299 = vld [vmem:[%s268 + $0x3c] sm:$0xf]
      %v300 = vld [vmem:[%s268 + $0x40] sm:$0xf]
      %v301 = vld [vmem:[%s268 + $0x44] sm:$0xf]
      %v302 = vld [vmem:[%s268 + $0x48] sm:$0xf]
      %v303 = vld [vmem:[%s268 + $0x4c] sm:$0xf]
      %v304 = vld [vmem:[%s268 + $0x50] sm:$0xf]
      %v305 = vld [vmem:[%s268 + $0x54] sm:$0xf]
      %v306 = vld [vmem:[%s268 + $0x58] sm:$0xf]
      %v307 = vld [vmem:[%s268 + $0x5c] sm:$0xf]
      %v308 = vld [vmem:[%s268 + $0x60] sm:$0xf]
      %v309 = vld [vmem:[%s268 + $0x64] sm:$0xf]
      %v310 = vld [vmem:[%s268 + $0x68] sm:$0xf]
      %v311 = vld [vmem:[%s268 + $0x6c] sm:$0xf]
      %v312 = vld [vmem:[%s268 + $0x70] sm:$0xf]
      %v313 = vld [vmem:[%s268 + $0x74] sm:$0xf]
      %v314 = vld [vmem:[%s268 + $0x78] sm:$0xf]
      %v315 = vld [vmem:[%s268 + $0x7c] sm:$0xf]
      %v316 = vld [vmem:[%s273] sm:$0xf]
      %v317 = vld [vmem:[%s273 + $0x4] sm:$0xf]
      %v318 = vld [vmem:[%s273 + $0x8] sm:$0xf]
      %v319 = vld [vmem:[%s273 + $0xc] sm:$0xf]
      %v320 = vld [vmem:[%s273 + $0x10] sm:$0xf]
      %v321 = vld [vmem:[%s273 + $0x14] sm:$0xf]
      %v322 = vld [vmem:[%s273 + $0x18] sm:$0xf]
      %v323 = vld [vmem:[%s273 + $0x1c] sm:$0xf]
      %vm324 = vcmask 11264
      %325 = vst.msk [vmem:[#allocation2] sm:$0xf] %vm324, 0
      %326 = vst.msk [vmem:[#allocation2 + $0x4] sm:$0xf] %vm324, 0
      %327 = vst.msk [vmem:[#allocation2 + $0x8] sm:$0xf] %vm324, 0
      %328 = vst.msk [vmem:[#allocation2 + $0xc] sm:$0xf] %vm324, 0
      %329 = vst.msk [vmem:[#allocation2 + $0x10] sm:$0xf] %vm324, 0
      %330 = vst.msk [vmem:[#allocation2 + $0x14] sm:$0xf] %vm324, 0
      %331 = vst.msk [vmem:[#allocation2 + $0x18] sm:$0xf] %vm324, 0
      %332 = vst.msk [vmem:[#allocation2 + $0x1c] sm:$0xf] %vm324, 0
      %s333 = scalar_lea.vmem [#allocation2], 288
      %334 = vst.msk [vmem:[%s333] sm:$0xf] %vm324, 0
      %335 = vst.msk [vmem:[%s333 + $0x4] sm:$0xf] %vm324, 0
      %336 = vst.msk [vmem:[%s333 + $0x8] sm:$0xf] %vm324, 0
      %337 = vst.msk [vmem:[%s333 + $0xc] sm:$0xf] %vm324, 0
      %338 = vst.msk [vmem:[%s333 + $0x10] sm:$0xf] %vm324, 0
      %339 = vst.msk [vmem:[%s333 + $0x14] sm:$0xf] %vm324, 0
      %340 = vst.msk [vmem:[%s333 + $0x18] sm:$0xf] %vm324, 0
      %341 = vst.msk [vmem:[%s333 + $0x1c] sm:$0xf] %vm324, 0
      %vm342 = vcmask 8192
      %vm343 = vsmask.f32 256
      %vm344 = vmand %vm342, %vm343
      %v345 = vld [vmem:[#allocation2] sm:$0x1]
      %v346 = vsel %vm344, 0, %v345
      %347 = vst [vmem:[#allocation2] sm:$0x1] %v346
      %v348 = vld [vmem:[#allocation2 + $0x10] sm:$0x1]
      %v349 = vsel %vm344, 0, %v348
      %350 = vst [vmem:[#allocation2 + $0x10] sm:$0x1] %v349
      %v351 = vld [vmem:[#allocation2 + $0x20] sm:$0x1]
      %v352 = vsel %vm344, 0, %v351
      %353 = vst [vmem:[#allocation2 + $0x20] sm:$0x1] %v352
      %v354 = vld [vmem:[#allocation2 + $0x30] sm:$0x1]
      %v355 = vsel %vm344, 0, %v354
      %356 = vst [vmem:[#allocation2 + $0x30] sm:$0x1] %v355
      %v357 = vld [vmem:[#allocation2 + $0x40] sm:$0x1]
      %v358 = vsel %vm344, 0, %v357
      %359 = vst [vmem:[#allocation2 + $0x40] sm:$0x1] %v358
      %v360 = vld [vmem:[#allocation2 + $0x50] sm:$0x1]
      %v361 = vsel %vm344, 0, %v360
      %362 = vst [vmem:[#allocation2 + $0x50] sm:$0x1] %v361
      %v363 = vld [vmem:[#allocation2 + $0x60] sm:$0x1]
      %v364 = vsel %vm344, 0, %v363
      %365 = vst [vmem:[#allocation2 + $0x60] sm:$0x1] %v364
      %v366 = vld [vmem:[#allocation2 + $0x70] sm:$0x1]
      %v367 = vsel %vm344, 0, %v366
      %368 = vst [vmem:[#allocation2 + $0x70] sm:$0x1] %v367
      %v369 = vld [vmem:[#allocation2 + $0x80] sm:$0x1]
      %v370 = vsel %vm344, 0, %v369
      %371 = vst [vmem:[#allocation2 + $0x80] sm:$0x1] %v370
      %v372 = vld [vmem:[#allocation2 + $0x90] sm:$0x1]
      %v373 = vsel %vm344, 0, %v372
      %374 = vst [vmem:[#allocation2 + $0x90] sm:$0x1] %v373
      %v375 = vld [vmem:[#allocation2 + $0xa0] sm:$0x1]
      %v376 = vsel %vm344, 0, %v375
      %377 = vst [vmem:[#allocation2 + $0xa0] sm:$0x1] %v376
      %v378 = vld [vmem:[#allocation2 + $0xb0] sm:$0x1]
      %v379 = vsel %vm344, 0, %v378
      %380 = vst [vmem:[#allocation2 + $0xb0] sm:$0x1] %v379
      %v381 = vld [vmem:[#allocation2 + $0xc0] sm:$0x1]
      %v382 = vsel %vm344, 0, %v381
      %383 = vst [vmem:[#allocation2 + $0xc0] sm:$0x1] %v382
      %v384 = vld [vmem:[#allocation2 + $0xd0] sm:$0x1]
      %v385 = vsel %vm344, 0, %v384
      %386 = vst [vmem:[#allocation2 + $0xd0] sm:$0x1] %v385
      %v387 = vld [vmem:[#allocation2 + $0xe0] sm:$0x1]
      %v388 = vsel %vm344, 0, %v387
      %389 = vst [vmem:[#allocation2 + $0xe0] sm:$0x1] %v388
      %v390 = vld [vmem:[#allocation2 + $0xf0] sm:$0x1]
      %v391 = vsel %vm344, 0, %v390
      %392 = vst [vmem:[#allocation2 + $0xf0] sm:$0x1] %v391
      %v393 = vld [vmem:[#allocation2 + $0x100] sm:$0x1]
      %v394 = vsel %vm344, 0, %v393
      %395 = vst [vmem:[#allocation2 + $0x100] sm:$0x1] %v394
      %v396 = vld [vmem:[#allocation2 + $0x110] sm:$0x1]
      %v397 = vsel %vm344, 0, %v396
      %398 = vst [vmem:[#allocation2 + $0x110] sm:$0x1] %v397
      %v399 = vld [vmem:[#allocation2 + $0x120] sm:$0x1]
      %v400 = vsel %vm344, 0, %v399
      %401 = vst [vmem:[#allocation2 + $0x120] sm:$0x1] %v400
      %v402 = vld [vmem:[#allocation2 + $0x130] sm:$0x1]
      %v403 = vsel %vm344, 0, %v402
      %404 = vst [vmem:[#allocation2 + $0x130] sm:$0x1] %v403
      %vm405 = vcmask 11264
      %vm406 = vsmask.f32 7938
      %vm407 = vmand %vm405, %vm406
      %v408 = vld [vmem:[#allocation2 + $0x8] sm:$0xf]
      %v409 = vsel %vm407, 0, %v408
      %410 = vst [vmem:[#allocation2 + $0x8] sm:$0xf] %v409
      %411 = vst.msk [vmem:[#allocation2 + $0xc] sm:$0xf] %vm324, 0
      %v412 = vld [vmem:[#allocation2 + $0x18] sm:$0xf]
      %v413 = vsel %vm407, 0, %v412
      %414 = vst [vmem:[#allocation2 + $0x18] sm:$0xf] %v413
      %415 = vst.msk [vmem:[#allocation2 + $0x1c] sm:$0xf] %vm324, 0
      %v416 = vld [vmem:[#allocation2 + $0x28] sm:$0xf]
      %v417 = vsel %vm407, 0, %v416
      %418 = vst [vmem:[#allocation2 + $0x28] sm:$0xf] %v417
      %419 = vst.msk [vmem:[#allocation2 + $0x2c] sm:$0xf] %vm324, 0
      %v420 = vld [vmem:[#allocation2 + $0x38] sm:$0xf]
      %v421 = vsel %vm407, 0, %v420
      %422 = vst [vmem:[#allocation2 + $0x38] sm:$0xf] %v421
      %423 = vst.msk [vmem:[#allocation2 + $0x3c] sm:$0xf] %vm324, 0
      %v424 = vld [vmem:[#allocation2 + $0x48] sm:$0xf]
      %v425 = vsel %vm407, 0, %v424
      %426 = vst [vmem:[#allocation2 + $0x48] sm:$0xf] %v425
      %427 = vst.msk [vmem:[#allocation2 + $0x4c] sm:$0xf] %vm324, 0
      %v428 = vld [vmem:[#allocation2 + $0x58] sm:$0xf]
      %v429 = vsel %vm407, 0, %v428
      %430 = vst [vmem:[#allocation2 + $0x58] sm:$0xf] %v429
      %431 = vst.msk [vmem:[#allocation2 + $0x5c] sm:$0xf] %vm324, 0
      %v432 = vld [vmem:[#allocation2 + $0x68] sm:$0xf]
      %v433 = vsel %vm407, 0, %v432
      %434 = vst [vmem:[#allocation2 + $0x68] sm:$0xf] %v433
      %435 = vst.msk [vmem:[#allocation2 + $0x6c] sm:$0xf] %vm324, 0
      %v436 = vld [vmem:[#allocation2 + $0x78] sm:$0xf]
      %v437 = vsel %vm407, 0, %v436
      %438 = vst [vmem:[#allocation2 + $0x78] sm:$0xf] %v437
      %439 = vst.msk [vmem:[#allocation2 + $0x7c] sm:$0xf] %vm324, 0
      %v440 = vld [vmem:[#allocation2 + $0x88] sm:$0xf]
      %v441 = vsel %vm407, 0, %v440
      %442 = vst [vmem:[#allocation2 + $0x88] sm:$0xf] %v441
      %443 = vst.msk [vmem:[#allocation2 + $0x8c] sm:$0xf] %vm324, 0
      %v444 = vld [vmem:[#allocation2 + $0x98] sm:$0xf]
      %v445 = vsel %vm407, 0, %v444
      %446 = vst [vmem:[#allocation2 + $0x98] sm:$0xf] %v445
      %447 = vst.msk [vmem:[#allocation2 + $0x9c] sm:$0xf] %vm324, 0
      %v448 = vld [vmem:[#allocation2 + $0xa8] sm:$0xf]
      %v449 = vsel %vm407, 0, %v448
      %450 = vst [vmem:[#allocation2 + $0xa8] sm:$0xf] %v449
      %451 = vst.msk [vmem:[#allocation2 + $0xac] sm:$0xf] %vm324, 0
      %v452 = vld [vmem:[#allocation2 + $0xb8] sm:$0xf]
      %v453 = vsel %vm407, 0, %v452
      %454 = vst [vmem:[#allocation2 + $0xb8] sm:$0xf] %v453
      %455 = vst.msk [vmem:[#allocation2 + $0xbc] sm:$0xf] %vm324, 0
      %v456 = vld [vmem:[#allocation2 + $0xc8] sm:$0xf]
      %v457 = vsel %vm407, 0, %v456
      %458 = vst [vmem:[#allocation2 + $0xc8] sm:$0xf] %v457
      %459 = vst.msk [vmem:[#allocation2 + $0xcc] sm:$0xf] %vm324, 0
      %v460 = vld [vmem:[#allocation2 + $0xd8] sm:$0xf]
      %v461 = vsel %vm407, 0, %v460
      %462 = vst [vmem:[#allocation2 + $0xd8] sm:$0xf] %v461
      %463 = vst.msk [vmem:[#allocation2 + $0xdc] sm:$0xf] %vm324, 0
      %v464 = vld [vmem:[#allocation2 + $0xe8] sm:$0xf]
      %v465 = vsel %vm407, 0, %v464
      %466 = vst [vmem:[#allocation2 + $0xe8] sm:$0xf] %v465
      %467 = vst.msk [vmem:[#allocation2 + $0xec] sm:$0xf] %vm324, 0
      %v468 = vld [vmem:[#allocation2 + $0xf8] sm:$0xf]
      %v469 = vsel %vm407, 0, %v468
      %470 = vst [vmem:[#allocation2 + $0xf8] sm:$0xf] %v469
      %471 = vst.msk [vmem:[#allocation2 + $0xfc] sm:$0xf] %vm324, 0
      %v472 = vld [vmem:[#allocation2 + $0x108] sm:$0xf]
      %v473 = vsel %vm407, 0, %v472
      %474 = vst [vmem:[#allocation2 + $0x108] sm:$0xf] %v473
      %475 = vst.msk [vmem:[#allocation2 + $0x10c] sm:$0xf] %vm324, 0
      %v476 = vld [vmem:[#allocation2 + $0x118] sm:$0xf]
      %v477 = vsel %vm407, 0, %v476
      %478 = vst [vmem:[#allocation2 + $0x118] sm:$0xf] %v477
      %479 = vst.msk [vmem:[#allocation2 + $0x11c] sm:$0xf] %vm324, 0
      %v480 = vld [vmem:[#allocation2 + $0x128] sm:$0xf]
      %v481 = vsel %vm407, 0, %v480
      %482 = vst [vmem:[#allocation2 + $0x128] sm:$0xf] %v481
      %483 = vst.msk [vmem:[#allocation2 + $0x12c] sm:$0xf] %vm324, 0
      %v484 = vld [vmem:[#allocation2 + $0x138] sm:$0xf]
      %v485 = vsel %vm407, 0, %v484
      %486 = vst [vmem:[#allocation2 + $0x138] sm:$0xf] %v485
      %487 = vst.msk [vmem:[#allocation2 + $0x13c] sm:$0xf] %vm324, 0
      %vm488 = vsmask.f32 4368
      %vm489 = vmor %vm343, %vm488
      %v491 = vshrl.u32 %v284, 16
      %v493 = vrot.slane %v491, 7
      %v494 = vshll.u32 %v284, 16
      %v496 = vor.u32 %v493, %v494
      %v497 = vrot.slane %v493, 4
      %v499 = vshrl.u32 %v285, 16
      %v501 = vrot.slane %v499, 7
      %v502 = vshll.u32 %v285, 16
      %v504 = vor.u32 %v501, %v502
      %v505 = vsel %vm489, %v497, %v504
      %v506 = vrot.slane %v501, 4
      %v508 = vshrl.u32 %v286, 16
      %v510 = vrot.slane %v508, 7
      %v511 = vshll.u32 %v286, 16
      %v513 = vor.u32 %v510, %v511
      %v514 = vrot.slane %v510, 4
      %v516 = vshrl.u32 %v287, 16
      %v518 = vrot.slane %v516, 7
      %v519 = vshll.u32 %v287, 16
      %v521 = vor.u32 %v518, %v519
      %v522 = vsel %vm489, %v514, %v521
      %v523 = vrot.slane %v518, 4
      %v525 = vshrl.u32 %v288, 16
      %v527 = vrot.slane %v525, 7
      %v528 = vshll.u32 %v288, 16
      %v530 = vor.u32 %v527, %v528
      %v531 = vrot.slane %v527, 4
      %v533 = vshrl.u32 %v289, 16
      %v535 = vrot.slane %v533, 7
      %v536 = vshll.u32 %v289, 16
      %v538 = vor.u32 %v535, %v536
      %v539 = vsel %vm489, %v531, %v538
      %v540 = vrot.slane %v535, 4
      %v542 = vshrl.u32 %v290, 16
      %v544 = vrot.slane %v542, 7
      %v545 = vshll.u32 %v290, 16
      %v547 = vor.u32 %v544, %v545
      %v548 = vrot.slane %v544, 4
      %v550 = vshrl.u32 %v291, 16
      %v552 = vrot.slane %v550, 7
      %v553 = vshll.u32 %v291, 16
      %v555 = vor.u32 %v552, %v553
      %v556 = vsel %vm489, %v548, %v555
      %v557 = vrot.slane %v552, 4
      %v559 = vshrl.u32 %v292, 16
      %v561 = vrot.slane %v559, 7
      %v562 = vshll.u32 %v292, 16
      %v564 = vor.u32 %v561, %v562
      %v565 = vrot.slane %v561, 4
      %v567 = vshrl.u32 %v293, 16
      %v569 = vrot.slane %v567, 7
      %v570 = vshll.u32 %v293, 16
      %v572 = vor.u32 %v569, %v570
      %v573 = vsel %vm489, %v565, %v572
      %v574 = vrot.slane %v569, 4
      %v576 = vshrl.u32 %v294, 16
      %v578 = vrot.slane %v576, 7
      %v579 = vshll.u32 %v294, 16
      %v581 = vor.u32 %v578, %v579
      %v582 = vrot.slane %v578, 4
      %v584 = vshrl.u32 %v295, 16
      %v586 = vrot.slane %v584, 7
      %v587 = vshll.u32 %v295, 16
      %v589 = vor.u32 %v586, %v587
      %v590 = vsel %vm489, %v582, %v589
      %v591 = vrot.slane %v586, 4
      %v593 = vshrl.u32 %v296, 16
      %v595 = vrot.slane %v593, 7
      %v596 = vshll.u32 %v296, 16
      %v598 = vor.u32 %v595, %v596
      %v599 = vrot.slane %v595, 4
      %v601 = vshrl.u32 %v297, 16
      %v603 = vrot.slane %v601, 7
      %v604 = vshll.u32 %v297, 16
      %v606 = vor.u32 %v603, %v604
      %v607 = vsel %vm489, %v599, %v606
      %v608 = vrot.slane %v603, 4
      %v610 = vshrl.u32 %v298, 16
      %v612 = vrot.slane %v610, 7
      %v613 = vshll.u32 %v298, 16
      %v615 = vor.u32 %v612, %v613
      %v616 = vrot.slane %v612, 4
      %v618 = vshrl.u32 %v299, 16
      %v620 = vrot.slane %v618, 7
      %v621 = vshll.u32 %v299, 16
      %v623 = vor.u32 %v620, %v621
      %v624 = vsel %vm489, %v616, %v623
      %v625 = vrot.slane %v620, 4
      %v627 = vshrl.u32 %v300, 16
      %v629 = vrot.slane %v627, 7
      %v630 = vshll.u32 %v300, 16
      %v632 = vor.u32 %v629, %v630
      %v633 = vrot.slane %v629, 4
      %v635 = vshrl.u32 %v301, 16
      %v637 = vrot.slane %v635, 7
      %v638 = vshll.u32 %v301, 16
      %v640 = vor.u32 %v637, %v638
      %v641 = vsel %vm489, %v633, %v640
      %v642 = vrot.slane %v637, 4
      %v644 = vshrl.u32 %v302, 16
      %v646 = vrot.slane %v644, 7
      %v647 = vshll.u32 %v302, 16
      %v649 = vor.u32 %v646, %v647
      %v650 = vrot.slane %v646, 4
      %v652 = vshrl.u32 %v303, 16
      %v654 = vrot.slane %v652, 7
      %v655 = vshll.u32 %v303, 16
      %v657 = vor.u32 %v654, %v655
      %v658 = vsel %vm489, %v650, %v657
      %v659 = vrot.slane %v654, 4
      %v661 = vshrl.u32 %v304, 16
      %v663 = vrot.slane %v661, 7
      %v664 = vshll.u32 %v304, 16
      %v666 = vor.u32 %v663, %v664
      %v667 = vrot.slane %v663, 4
      %v669 = vshrl.u32 %v305, 16
      %v671 = vrot.slane %v669, 7
      %v672 = vshll.u32 %v305, 16
      %v674 = vor.u32 %v671, %v672
      %v675 = vsel %vm489, %v667, %v674
      %v676 = vrot.slane %v671, 4
      %v678 = vshrl.u32 %v306, 16
      %v680 = vrot.slane %v678, 7
      %v681 = vshll.u32 %v306, 16
      %v683 = vor.u32 %v680, %v681
      %v684 = vrot.slane %v680, 4
      %v686 = vshrl.u32 %v307, 16
      %v688 = vrot.slane %v686, 7
      %v689 = vshll.u32 %v307, 16
      %v691 = vor.u32 %v688, %v689
      %v692 = vsel %vm489, %v684, %v691
      %v693 = vrot.slane %v688, 4
      %v695 = vshrl.u32 %v308, 16
      %v697 = vrot.slane %v695, 7
      %v698 = vshll.u32 %v308, 16
      %v700 = vor.u32 %v697, %v698
      %v701 = vrot.slane %v697, 4
      %v703 = vshrl.u32 %v309, 16
      %v705 = vrot.slane %v703, 7
      %v706 = vshll.u32 %v309, 16
      %v708 = vor.u32 %v705, %v706
      %v709 = vsel %vm489, %v701, %v708
      %v710 = vrot.slane %v705, 4
      %v712 = vshrl.u32 %v310, 16
      %v714 = vrot.slane %v712, 7
      %v715 = vshll.u32 %v310, 16
      %v717 = vor.u32 %v714, %v715
      %v718 = vrot.slane %v714, 4
      %v720 = vshrl.u32 %v311, 16
      %v722 = vrot.slane %v720, 7
      %v723 = vshll.u32 %v311, 16
      %v725 = vor.u32 %v722, %v723
      %v726 = vsel %vm489, %v718, %v725
      %v727 = vrot.slane %v722, 4
      %v729 = vshrl.u32 %v312, 16
      %v731 = vrot.slane %v729, 7
      %v732 = vshll.u32 %v312, 16
      %v734 = vor.u32 %v731, %v732
      %v735 = vrot.slane %v731, 4
      %v737 = vshrl.u32 %v313, 16
      %v739 = vrot.slane %v737, 7
      %v740 = vshll.u32 %v313, 16
      %v742 = vor.u32 %v739, %v740
      %v743 = vsel %vm489, %v735, %v742
      %v744 = vrot.slane %v739, 4
      %v746 = vshrl.u32 %v314, 16
      %v748 = vrot.slane %v746, 7
      %v749 = vshll.u32 %v314, 16
      %v751 = vor.u32 %v748, %v749
      %v752 = vrot.slane %v748, 4
      %v754 = vshrl.u32 %v315, 16
      %v756 = vrot.slane %v754, 7
      %v757 = vshll.u32 %v315, 16
      %v759 = vor.u32 %v756, %v757
      %v760 = vsel %vm489, %v752, %v759
      %v761 = vrot.slane %v756, 4
      %s810 = scalar_lea.vmem [#allocation2], 32
      %v811 = vld [vmem:[%s810] sm:$0xf]
      %v812 = vsel %vm407, %v496, %v811
      %813 = vst [vmem:[%s810] sm:$0xf] %v812
      %814 = vst.msk [vmem:[%s810 + $0x4] sm:$0xf] %vm324, %v505
      %v815 = vld [vmem:[%s810 + $0x8] sm:$0x1]
      %v816 = vsel %vm344, %v506, %v815
      %817 = vst [vmem:[%s810 + $0x8] sm:$0x1] %v816
      %v818 = vld [vmem:[%s810 + $0x10] sm:$0xf]
      %v819 = vsel %vm407, %v513, %v818
      %820 = vst [vmem:[%s810 + $0x10] sm:$0xf] %v819
      %821 = vst.msk [vmem:[%s810 + $0x14] sm:$0xf] %vm324, %v522
      %v822 = vld [vmem:[%s810 + $0x18] sm:$0x1]
      %v823 = vsel %vm344, %v523, %v822
      %824 = vst [vmem:[%s810 + $0x18] sm:$0x1] %v823
      %v825 = vld [vmem:[%s810 + $0x20] sm:$0xf]
      %v826 = vsel %vm407, %v530, %v825
      %827 = vst [vmem:[%s810 + $0x20] sm:$0xf] %v826
      %828 = vst.msk [vmem:[%s810 + $0x24] sm:$0xf] %vm324, %v539
      %v829 = vld [vmem:[%s810 + $0x28] sm:$0x1]
      %v830 = vsel %vm344, %v540, %v829
      %831 = vst [vmem:[%s810 + $0x28] sm:$0x1] %v830
      %v832 = vld [vmem:[%s810 + $0x30] sm:$0xf]
      %v833 = vsel %vm407, %v547, %v832
      %834 = vst [vmem:[%s810 + $0x30] sm:$0xf] %v833
      %835 = vst.msk [vmem:[%s810 + $0x34] sm:$0xf] %vm324, %v556
      %v836 = vld [vmem:[%s810 + $0x38] sm:$0x1]
      %v837 = vsel %vm344, %v557, %v836
      %838 = vst [vmem:[%s810 + $0x38] sm:$0x1] %v837
      %v839 = vld [vmem:[%s810 + $0x40] sm:$0xf]
      %v840 = vsel %vm407, %v564, %v839
      %841 = vst [vmem:[%s810 + $0x40] sm:$0xf] %v840
      %842 = vst.msk [vmem:[%s810 + $0x44] sm:$0xf] %vm324, %v573
      %v843 = vld [vmem:[%s810 + $0x48] sm:$0x1]
      %v844 = vsel %vm344, %v574, %v843
      %845 = vst [vmem:[%s810 + $0x48] sm:$0x1] %v844
      %v846 = vld [vmem:[%s810 + $0x50] sm:$0xf]
      %v847 = vsel %vm407, %v581, %v846
      %848 = vst [vmem:[%s810 + $0x50] sm:$0xf] %v847
      %849 = vst.msk [vmem:[%s810 + $0x54] sm:$0xf] %vm324, %v590
      %v850 = vld [vmem:[%s810 + $0x58] sm:$0x1]
      %v851 = vsel %vm344, %v591, %v850
      %852 = vst [vmem:[%s810 + $0x58] sm:$0x1] %v851
      %v853 = vld [vmem:[%s810 + $0x60] sm:$0xf]
      %v854 = vsel %vm407, %v598, %v853
      %855 = vst [vmem:[%s810 + $0x60] sm:$0xf] %v854
      %856 = vst.msk [vmem:[%s810 + $0x64] sm:$0xf] %vm324, %v607
      %v857 = vld [vmem:[%s810 + $0x68] sm:$0x1]
      %v858 = vsel %vm344, %v608, %v857
      %859 = vst [vmem:[%s810 + $0x68] sm:$0x1] %v858
      %v860 = vld [vmem:[%s810 + $0x70] sm:$0xf]
      %v861 = vsel %vm407, %v615, %v860
      %862 = vst [vmem:[%s810 + $0x70] sm:$0xf] %v861
      %863 = vst.msk [vmem:[%s810 + $0x74] sm:$0xf] %vm324, %v624
      %v864 = vld [vmem:[%s810 + $0x78] sm:$0x1]
      %v865 = vsel %vm344, %v625, %v864
      %866 = vst [vmem:[%s810 + $0x78] sm:$0x1] %v865
      %v867 = vld [vmem:[%s810 + $0x80] sm:$0xf]
      %v868 = vsel %vm407, %v632, %v867
      %869 = vst [vmem:[%s810 + $0x80] sm:$0xf] %v868
      %870 = vst.msk [vmem:[%s810 + $0x84] sm:$0xf] %vm324, %v641
      %v871 = vld [vmem:[%s810 + $0x88] sm:$0x1]
      %v872 = vsel %vm344, %v642, %v871
      %873 = vst [vmem:[%s810 + $0x88] sm:$0x1] %v872
      %v874 = vld [vmem:[%s810 + $0x90] sm:$0xf]
      %v875 = vsel %vm407, %v649, %v874
      %876 = vst [vmem:[%s810 + $0x90] sm:$0xf] %v875
      %877 = vst.msk [vmem:[%s810 + $0x94] sm:$0xf] %vm324, %v658
      %v878 = vld [vmem:[%s810 + $0x98] sm:$0x1]
      %v879 = vsel %vm344, %v659, %v878
      %880 = vst [vmem:[%s810 + $0x98] sm:$0x1] %v879
      %v881 = vld [vmem:[%s810 + $0xa0] sm:$0xf]
      %v882 = vsel %vm407, %v666, %v881
      %883 = vst [vmem:[%s810 + $0xa0] sm:$0xf] %v882
      %884 = vst.msk [vmem:[%s810 + $0xa4] sm:$0xf] %vm324, %v675
      %v885 = vld [vmem:[%s810 + $0xa8] sm:$0x1]
      %v886 = vsel %vm344, %v676, %v885
      %887 = vst [vmem:[%s810 + $0xa8] sm:$0x1] %v886
      %v888 = vld [vmem:[%s810 + $0xb0] sm:$0xf]
      %v889 = vsel %vm407, %v683, %v888
      %890 = vst [vmem:[%s810 + $0xb0] sm:$0xf] %v889
      %891 = vst.msk [vmem:[%s810 + $0xb4] sm:$0xf] %vm324, %v692
      %v892 = vld [vmem:[%s810 + $0xb8] sm:$0x1]
      %v893 = vsel %vm344, %v693, %v892
      %894 = vst [vmem:[%s810 + $0xb8] sm:$0x1] %v893
      %v895 = vld [vmem:[%s810 + $0xc0] sm:$0xf]
      %v896 = vsel %vm407, %v700, %v895
      %897 = vst [vmem:[%s810 + $0xc0] sm:$0xf] %v896
      %898 = vst.msk [vmem:[%s810 + $0xc4] sm:$0xf] %vm324, %v709
      %v899 = vld [vmem:[%s810 + $0xc8] sm:$0x1]
      %v900 = vsel %vm344, %v710, %v899
      %901 = vst [vmem:[%s810 + $0xc8] sm:$0x1] %v900
      %v902 = vld [vmem:[%s810 + $0xd0] sm:$0xf]
      %v903 = vsel %vm407, %v717, %v902
      %904 = vst [vmem:[%s810 + $0xd0] sm:$0xf] %v903
      %905 = vst.msk [vmem:[%s810 + $0xd4] sm:$0xf] %vm324, %v726
      %v906 = vld [vmem:[%s810 + $0xd8] sm:$0x1]
      %v907 = vsel %vm344, %v727, %v906
      %908 = vst [vmem:[%s810 + $0xd8] sm:$0x1] %v907
      %v909 = vld [vmem:[%s810 + $0xe0] sm:$0xf]
      %v910 = vsel %vm407, %v734, %v909
      %911 = vst [vmem:[%s810 + $0xe0] sm:$0xf] %v910
      %912 = vst.msk [vmem:[%s810 + $0xe4] sm:$0xf] %vm324, %v743
      %v913 = vld [vmem:[%s810 + $0xe8] sm:$0x1]
      %v914 = vsel %vm344, %v744, %v913
      %915 = vst [vmem:[%s810 + $0xe8] sm:$0x1] %v914
      %v916 = vld [vmem:[%s810 + $0xf0] sm:$0xf]
      %v917 = vsel %vm407, %v751, %v916
      %918 = vst [vmem:[%s810 + $0xf0] sm:$0xf] %v917
      %919 = vst.msk [vmem:[%s810 + $0xf4] sm:$0xf] %vm324, %v760
      %v920 = vld [vmem:[%s810 + $0xf8] sm:$0x1]
      %v921 = vsel %vm344, %v761, %v920
      %922 = vst [vmem:[%s810 + $0xf8] sm:$0x1] %v921
      %923 = vst.msk [vmem:[#allocation3] sm:$0xf] %vm324, 0
      %924 = vst.msk [vmem:[#allocation3 + $0x4] sm:$0xf] %vm324, 0
      %925 = vst.msk [vmem:[#allocation3 + $0x8] sm:$0xf] %vm324, 0
      %926 = vst.msk [vmem:[#allocation3 + $0xc] sm:$0xf] %vm324, 0
      %s927 = scalar_lea.vmem [#allocation3], 80
      %928 = vst.msk [vmem:[%s927] sm:$0xf] %vm324, 0
      %929 = vst.msk [vmem:[%s927 + $0x4] sm:$0xf] %vm324, 0
      %930 = vst.msk [vmem:[%s927 + $0x8] sm:$0xf] %vm324, 0
      %931 = vst.msk [vmem:[%s927 + $0xc] sm:$0xf] %vm324, 0
      %v932 = vld [vmem:[#allocation3] sm:$0x1]
      %v933 = vsel %vm344, 0, %v932
      %934 = vst [vmem:[#allocation3] sm:$0x1] %v933
      %v935 = vld [vmem:[#allocation3 + $0x8] sm:$0x1]
      %v936 = vsel %vm344, 0, %v935
      %937 = vst [vmem:[#allocation3 + $0x8] sm:$0x1] %v936
      %v938 = vld [vmem:[#allocation3 + $0x10] sm:$0x1]
      %v939 = vsel %vm344, 0, %v938
      %940 = vst [vmem:[#allocation3 + $0x10] sm:$0x1] %v939
      %v941 = vld [vmem:[#allocation3 + $0x18] sm:$0x1]
      %v942 = vsel %vm344, 0, %v941
      %943 = vst [vmem:[#allocation3 + $0x18] sm:$0x1] %v942
      %v944 = vld [vmem:[#allocation3 + $0x20] sm:$0x1]
      %v945 = vsel %vm344, 0, %v944
      %946 = vst [vmem:[#allocation3 + $0x20] sm:$0x1] %v945
      %v947 = vld [vmem:[#allocation3 + $0x28] sm:$0x1]
      %v948 = vsel %vm344, 0, %v947
      %949 = vst [vmem:[#allocation3 + $0x28] sm:$0x1] %v948
      %v950 = vld [vmem:[#allocation3 + $0x30] sm:$0x1]
      %v951 = vsel %vm344, 0, %v950
      %952 = vst [vmem:[#allocation3 + $0x30] sm:$0x1] %v951
      %v953 = vld [vmem:[#allocation3 + $0x38] sm:$0x1]
      %v954 = vsel %vm344, 0, %v953
      %955 = vst [vmem:[#allocation3 + $0x38] sm:$0x1] %v954
      %v956 = vld [vmem:[#allocation3 + $0x40] sm:$0x1]
      %v957 = vsel %vm344, 0, %v956
      %958 = vst [vmem:[#allocation3 + $0x40] sm:$0x1] %v957
      %v959 = vld [vmem:[#allocation3 + $0x48] sm:$0x1]
      %v960 = vsel %vm344, 0, %v959
      %961 = vst [vmem:[#allocation3 + $0x48] sm:$0x1] %v960
      %v962 = vld [vmem:[#allocation3 + $0x50] sm:$0x1]
      %v963 = vsel %vm344, 0, %v962
      %964 = vst [vmem:[#allocation3 + $0x50] sm:$0x1] %v963
      %v965 = vld [vmem:[#allocation3 + $0x58] sm:$0x1]
      %v966 = vsel %vm344, 0, %v965
      %967 = vst [vmem:[#allocation3 + $0x58] sm:$0x1] %v966
      %v968 = vld [vmem:[#allocation3 + $0x4] sm:$0xf]
      %v969 = vsel %vm407, 0, %v968
      %970 = vst [vmem:[#allocation3 + $0x4] sm:$0xf] %v969
      %v971 = vld [vmem:[#allocation3 + $0xc] sm:$0xf]
      %v972 = vsel %vm407, 0, %v971
      %973 = vst [vmem:[#allocation3 + $0xc] sm:$0xf] %v972
      %v974 = vld [vmem:[#allocation3 + $0x14] sm:$0xf]
      %v975 = vsel %vm407, 0, %v974
      %976 = vst [vmem:[#allocation3 + $0x14] sm:$0xf] %v975
      %v977 = vld [vmem:[#allocation3 + $0x1c] sm:$0xf]
      %v978 = vsel %vm407, 0, %v977
      %979 = vst [vmem:[#allocation3 + $0x1c] sm:$0xf] %v978
      %v980 = vld [vmem:[#allocation3 + $0x24] sm:$0xf]
      %v981 = vsel %vm407, 0, %v980
      %982 = vst [vmem:[#allocation3 + $0x24] sm:$0xf] %v981
      %v983 = vld [vmem:[#allocation3 + $0x2c] sm:$0xf]
      %v984 = vsel %vm407, 0, %v983
      %985 = vst [vmem:[#allocation3 + $0x2c] sm:$0xf] %v984
      %v986 = vld [vmem:[#allocation3 + $0x34] sm:$0xf]
      %v987 = vsel %vm407, 0, %v986
      %988 = vst [vmem:[#allocation3 + $0x34] sm:$0xf] %v987
      %v989 = vld [vmem:[#allocation3 + $0x3c] sm:$0xf]
      %v990 = vsel %vm407, 0, %v989
      %991 = vst [vmem:[#allocation3 + $0x3c] sm:$0xf] %v990
      %v992 = vld [vmem:[#allocation3 + $0x44] sm:$0xf]
      %v993 = vsel %vm407, 0, %v992
      %994 = vst [vmem:[#allocation3 + $0x44] sm:$0xf] %v993
      %v995 = vld [vmem:[#allocation3 + $0x4c] sm:$0xf]
      %v996 = vsel %vm407, 0, %v995
      %997 = vst [vmem:[#allocation3 + $0x4c] sm:$0xf] %v996
      %v998 = vld [vmem:[#allocation3 + $0x54] sm:$0xf]
      %v999 = vsel %vm407, 0, %v998
      %1000 = vst [vmem:[#allocation3 + $0x54] sm:$0xf] %v999
      %v1001 = vld [vmem:[#allocation3 + $0x5c] sm:$0xf]
      %v1002 = vsel %vm407, 0, %v1001
      %1003 = vst [vmem:[#allocation3 + $0x5c] sm:$0xf] %v1002
      %v1005 = vshrl.u32 %v316, 16
      %v1007 = vrot.slane %v1005, 7
      %v1008 = vshll.u32 %v316, 16
      %v1010 = vor.u32 %v1007, %v1008
      %v1011 = vrot.slane %v1007, 4
      %v1013 = vshrl.u32 %v317, 16
      %v1015 = vrot.slane %v1013, 7
      %v1016 = vshll.u32 %v317, 16
      %v1018 = vor.u32 %v1015, %v1016
      %v1019 = vrot.slane %v1015, 4
      %v1021 = vshrl.u32 %v318, 16
      %v1023 = vrot.slane %v1021, 7
      %v1024 = vshll.u32 %v318, 16
      %v1026 = vor.u32 %v1023, %v1024
      %v1027 = vrot.slane %v1023, 4
      %v1029 = vshrl.u32 %v319, 16
      %v1031 = vrot.slane %v1029, 7
      %v1032 = vshll.u32 %v319, 16
      %v1034 = vor.u32 %v1031, %v1032
      %v1035 = vrot.slane %v1031, 4
      %v1037 = vshrl.u32 %v320, 16
      %v1039 = vrot.slane %v1037, 7
      %v1040 = vshll.u32 %v320, 16
      %v1042 = vor.u32 %v1039, %v1040
      %v1043 = vrot.slane %v1039, 4
      %v1045 = vshrl.u32 %v321, 16
      %v1047 = vrot.slane %v1045, 7
      %v1048 = vshll.u32 %v321, 16
      %v1050 = vor.u32 %v1047, %v1048
      %v1051 = vrot.slane %v1047, 4
      %v1053 = vshrl.u32 %v322, 16
      %v1055 = vrot.slane %v1053, 7
      %v1056 = vshll.u32 %v322, 16
      %v1058 = vor.u32 %v1055, %v1056
      %v1059 = vrot.slane %v1055, 4
      %v1061 = vshrl.u32 %v323, 16
      %v1063 = vrot.slane %v1061, 7
      %v1064 = vshll.u32 %v323, 16
      %v1066 = vor.u32 %v1063, %v1064
      %v1067 = vrot.slane %v1063, 4
      %s1084 = scalar_lea.vmem [#allocation3], 16
      %v1085 = vld [vmem:[%s1084] sm:$0xf]
      %v1086 = vsel %vm407, %v1010, %v1085
      %1087 = vst [vmem:[%s1084] sm:$0xf] %v1086
      %v1088 = vld [vmem:[%s1084 + $0x4] sm:$0x1]
      %v1089 = vsel %vm344, %v1011, %v1088
      %1090 = vst [vmem:[%s1084 + $0x4] sm:$0x1] %v1089
      %v1091 = vld [vmem:[%s1084 + $0x8] sm:$0xf]
      %v1092 = vsel %vm407, %v1018, %v1091
      %1093 = vst [vmem:[%s1084 + $0x8] sm:$0xf] %v1092
      %v1094 = vld [vmem:[%s1084 + $0xc] sm:$0x1]
      %v1095 = vsel %vm344, %v1019, %v1094
      %1096 = vst [vmem:[%s1084 + $0xc] sm:$0x1] %v1095
      %v1097 = vld [vmem:[%s1084 + $0x10] sm:$0xf]
      %v1098 = vsel %vm407, %v1026, %v1097
      %1099 = vst [vmem:[%s1084 + $0x10] sm:$0xf] %v1098
      %v1100 = vld [vmem:[%s1084 + $0x14] sm:$0x1]
      %v1101 = vsel %vm344, %v1027, %v1100
      %1102 = vst [vmem:[%s1084 + $0x14] sm:$0x1] %v1101
      %v1103 = vld [vmem:[%s1084 + $0x18] sm:$0xf]
      %v1104 = vsel %vm407, %v1034, %v1103
      %1105 = vst [vmem:[%s1084 + $0x18] sm:$0xf] %v1104
      %v1106 = vld [vmem:[%s1084 + $0x1c] sm:$0x1]
      %v1107 = vsel %vm344, %v1035, %v1106
      %1108 = vst [vmem:[%s1084 + $0x1c] sm:$0x1] %v1107
      %v1109 = vld [vmem:[%s1084 + $0x20] sm:$0xf]
      %v1110 = vsel %vm407, %v1042, %v1109
      %1111 = vst [vmem:[%s1084 + $0x20] sm:$0xf] %v1110
      %v1112 = vld [vmem:[%s1084 + $0x24] sm:$0x1]
      %v1113 = vsel %vm344, %v1043, %v1112
      %1114 = vst [vmem:[%s1084 + $0x24] sm:$0x1] %v1113
      %v1115 = vld [vmem:[%s1084 + $0x28] sm:$0xf]
      %v1116 = vsel %vm407, %v1050, %v1115
      %1117 = vst [vmem:[%s1084 + $0x28] sm:$0xf] %v1116
      %v1118 = vld [vmem:[%s1084 + $0x2c] sm:$0x1]
      %v1119 = vsel %vm344, %v1051, %v1118
      %1120 = vst [vmem:[%s1084 + $0x2c] sm:$0x1] %v1119
      %v1121 = vld [vmem:[%s1084 + $0x30] sm:$0xf]
      %v1122 = vsel %vm407, %v1058, %v1121
      %1123 = vst [vmem:[%s1084 + $0x30] sm:$0xf] %v1122
      %v1124 = vld [vmem:[%s1084 + $0x34] sm:$0x1]
      %v1125 = vsel %vm344, %v1059, %v1124
      %1126 = vst [vmem:[%s1084 + $0x34] sm:$0x1] %v1125
      %v1127 = vld [vmem:[%s1084 + $0x38] sm:$0xf]
      %v1128 = vsel %vm407, %v1066, %v1127
      %1129 = vst [vmem:[%s1084 + $0x38] sm:$0xf] %v1128
      %v1130 = vld [vmem:[%s1084 + $0x3c] sm:$0x1]
      %v1131 = vsel %vm344, %v1067, %v1130
      %1132 = vst [vmem:[%s1084 + $0x3c] sm:$0x1] %v1131
      %v1133 = vld [vmem:[#allocation2 + $0x10] sm:$0xf]
      %v1134 = vld [vmem:[#allocation2 + $0x14] sm:$0xf]
      %v1135 = vld [vmem:[#allocation2 + $0x18] sm:$0xf]
      %v1136 = vld [vmem:[#allocation2 + $0x1c] sm:$0xf]
      %v1137 = vld [vmem:[#allocation2 + $0x20] sm:$0xf]
      %v1138 = vld [vmem:[#allocation2 + $0x24] sm:$0xf]
      %v1139 = vld [vmem:[#allocation2 + $0x28] sm:$0xf]
      %v1140 = vld [vmem:[#allocation2 + $0x2c] sm:$0xf]
      %v1141 = vld [vmem:[#allocation2 + $0x30] sm:$0xf]
      %v1142 = vld [vmem:[#allocation2 + $0x34] sm:$0xf]
      %v1143 = vld [vmem:[#allocation2 + $0x38] sm:$0xf]
      %v1144 = vld [vmem:[#allocation2 + $0x3c] sm:$0xf]
      %v1145 = vld [vmem:[#allocation2 + $0x40] sm:$0xf]
      %v1146 = vld [vmem:[#allocation2 + $0x44] sm:$0xf]
      %v1147 = vld [vmem:[#allocation2 + $0x48] sm:$0xf]
      %v1148 = vld [vmem:[#allocation2 + $0x4c] sm:$0xf]
      %v1149 = vld [vmem:[#allocation2 + $0x50] sm:$0xf]
      %v1150 = vld [vmem:[#allocation2 + $0x54] sm:$0xf]
      %v1151 = vld [vmem:[#allocation2 + $0x58] sm:$0xf]
      %v1152 = vld [vmem:[#allocation2 + $0x5c] sm:$0xf]
      %v1153 = vld [vmem:[#allocation2 + $0x60] sm:$0xf]
      %v1154 = vld [vmem:[#allocation2 + $0x64] sm:$0xf]
      %v1155 = vld [vmem:[#allocation2 + $0x68] sm:$0xf]
      %v1156 = vld [vmem:[#allocation2 + $0x6c] sm:$0xf]
      %v1157 = vld [vmem:[#allocation2 + $0x70] sm:$0xf]
      %v1158 = vld [vmem:[#allocation2 + $0x74] sm:$0xf]
      %v1159 = vld [vmem:[#allocation2 + $0x78] sm:$0xf]
      %v1160 = vld [vmem:[#allocation2 + $0x7c] sm:$0xf]
      %v1161 = vld [vmem:[#allocation2 + $0x80] sm:$0xf]
      %v1162 = vld [vmem:[#allocation2 + $0x84] sm:$0xf]
      %v1163 = vld [vmem:[#allocation2 + $0x88] sm:$0xf]
      %v1164 = vld [vmem:[#allocation2 + $0x8c] sm:$0xf]
      %v1165 = vld [vmem:[#allocation2 + $0x90] sm:$0xf]
      %v1166 = vld [vmem:[#allocation2 + $0x94] sm:$0xf]
      %v1167 = vld [vmem:[#allocation2 + $0x98] sm:$0xf]
      %v1168 = vld [vmem:[#allocation2 + $0x9c] sm:$0xf]
      %v1169 = vld [vmem:[#allocation2 + $0xa0] sm:$0xf]
      %v1170 = vld [vmem:[#allocation2 + $0xa4] sm:$0xf]
      %v1171 = vld [vmem:[#allocation2 + $0xa8] sm:$0xf]
      %v1172 = vld [vmem:[#allocation2 + $0xac] sm:$0xf]
      %v1173 = vld [vmem:[#allocation2 + $0xb0] sm:$0xf]
      %v1174 = vld [vmem:[#allocation2 + $0xb4] sm:$0xf]
      %v1175 = vld [vmem:[#allocation2 + $0xb8] sm:$0xf]
      %v1176 = vld [vmem:[#allocation2 + $0xbc] sm:$0xf]
      %v1177 = vld [vmem:[#allocation2 + $0xc0] sm:$0xf]
      %v1178 = vld [vmem:[#allocation2 + $0xc4] sm:$0xf]
      %v1179 = vld [vmem:[#allocation2 + $0xc8] sm:$0xf]
      %v1180 = vld [vmem:[#allocation2 + $0xcc] sm:$0xf]
      %v1181 = vld [vmem:[#allocation2 + $0xd0] sm:$0xf]
      %v1182 = vld [vmem:[#allocation2 + $0xd4] sm:$0xf]
      %v1183 = vld [vmem:[#allocation2 + $0xd8] sm:$0xf]
      %v1184 = vld [vmem:[#allocation2 + $0xdc] sm:$0xf]
      %v1185 = vld [vmem:[#allocation2 + $0xe0] sm:$0xf]
      %v1186 = vld [vmem:[#allocation2 + $0xe4] sm:$0xf]
      %v1187 = vld [vmem:[#allocation2 + $0xe8] sm:$0xf]
      %v1188 = vld [vmem:[#allocation2 + $0xec] sm:$0xf]
      %v1189 = vld [vmem:[#allocation2 + $0xf0] sm:$0xf]
      %v1190 = vld [vmem:[#allocation2 + $0xf4] sm:$0xf]
      %v1191 = vld [vmem:[#allocation2 + $0xf8] sm:$0xf]
      %v1192 = vld [vmem:[#allocation2 + $0xfc] sm:$0xf]
      %v1193 = vld [vmem:[#allocation2 + $0x100] sm:$0xf]
      %v1194 = vld [vmem:[#allocation2 + $0x104] sm:$0xf]
      %v1195 = vld [vmem:[#allocation2 + $0x108] sm:$0xf]
      %v1196 = vld [vmem:[#allocation2 + $0x10c] sm:$0xf]
      %v1197 = vld [vmem:[#allocation2 + $0x110] sm:$0xf]
      %v1198 = vld [vmem:[#allocation2 + $0x114] sm:$0xf]
      %v1199 = vld [vmem:[#allocation2 + $0x118] sm:$0xf]
      %v1200 = vld [vmem:[#allocation2 + $0x11c] sm:$0xf]
      %v1201 = vld [vmem:[#allocation2 + $0x120] sm:$0xf]
      %v1202 = vld [vmem:[#allocation2 + $0x124] sm:$0xf]
      %v1203 = vld [vmem:[#allocation2 + $0x128] sm:$0xf]
      %v1204 = vld [vmem:[#allocation2 + $0x12c] sm:$0xf]
      %v1205 = vld [vmem:[#allocation2 + $0x130] sm:$0xf]
      %v1278 = vunpack.c.l.b16 %v1133
      %v1279 = vunpack.c.l.b16 %v1134
      %v1280 = vunpack.c.l.b16 %v1135
      %v1281 = vunpack.c.l.b16 %v1136
      %v1282 = vunpack.c.l.b16 %v1137
      %v1283 = vunpack.c.l.b16 %v1138
      %v1284 = vunpack.c.l.b16 %v1139
      %v1285 = vunpack.c.l.b16 %v1140
      %v1286 = vunpack.c.l.b16 %v1141
      %v1287 = vunpack.c.l.b16 %v1142
      %v1288 = vunpack.c.l.b16 %v1143
      %v1289 = vunpack.c.l.b16 %v1144
      %v1290 = vunpack.c.l.b16 %v1145
      %v1291 = vunpack.c.l.b16 %v1146
      %v1292 = vunpack.c.l.b16 %v1147
      %v1293 = vunpack.c.l.b16 %v1148
      %v1294 = vunpack.c.l.b16 %v1149
      %v1295 = vunpack.c.l.b16 %v1150
      %v1296 = vunpack.c.l.b16 %v1151
      %v1297 = vunpack.c.l.b16 %v1152
      %v1298 = vunpack.c.l.b16 %v1153
      %v1299 = vunpack.c.l.b16 %v1154
      %v1300 = vunpack.c.l.b16 %v1155
      %v1301 = vunpack.c.l.b16 %v1156
      %v1302 = vunpack.c.l.b16 %v1157
      %v1303 = vunpack.c.l.b16 %v1158
      %v1304 = vunpack.c.l.b16 %v1159
      %v1305 = vunpack.c.l.b16 %v1160
      %v1306 = vunpack.c.l.b16 %v1161
      %v1307 = vunpack.c.l.b16 %v1162
      %v1308 = vunpack.c.l.b16 %v1163
      %v1309 = vunpack.c.l.b16 %v1164
      %v1310 = vunpack.c.l.b16 %v1165
      %v1311 = vunpack.c.l.b16 %v1166
      %v1312 = vunpack.c.l.b16 %v1167
      %v1313 = vunpack.c.l.b16 %v1168
      %v1314 = vunpack.c.l.b16 %v1169
      %v1315 = vunpack.c.l.b16 %v1170
      %v1316 = vunpack.c.l.b16 %v1171
      %v1317 = vunpack.c.l.b16 %v1172
      %v1318 = vunpack.c.l.b16 %v1173
      %v1319 = vunpack.c.l.b16 %v1174
      %v1320 = vunpack.c.l.b16 %v1175
      %v1321 = vunpack.c.l.b16 %v1176
      %v1322 = vunpack.c.l.b16 %v1177
      %v1323 = vunpack.c.l.b16 %v1178
      %v1324 = vunpack.c.l.b16 %v1179
      %v1325 = vunpack.c.l.b16 %v1180
      %v1326 = vunpack.c.l.b16 %v1181
      %v1327 = vunpack.c.l.b16 %v1182
      %v1328 = vunpack.c.l.b16 %v1183
      %v1329 = vunpack.c.l.b16 %v1184
      %v1330 = vunpack.c.l.b16 %v1185
      %v1331 = vunpack.c.l.b16 %v1186
      %v1332 = vunpack.c.l.b16 %v1187
      %v1333 = vunpack.c.l.b16 %v1188
      %v1334 = vunpack.c.l.b16 %v1189
      %v1335 = vunpack.c.l.b16 %v1190
      %v1336 = vunpack.c.l.b16 %v1191
      %v1337 = vunpack.c.l.b16 %v1192
      %v1338 = vunpack.c.l.b16 %v1193
      %v1339 = vunpack.c.l.b16 %v1194
      %v1340 = vunpack.c.l.b16 %v1195
      %v1341 = vunpack.c.l.b16 %v1196
      %v1342 = vunpack.c.l.b16 %v1197
      %v1343 = vunpack.c.l.b16 %v1198
      %v1344 = vunpack.c.l.b16 %v1199
      %v1345 = vunpack.c.l.b16 %v1200
      %v1346 = vunpack.c.l.b16 %v1201
      %v1347 = vunpack.c.l.b16 %v1202
      %v1348 = vunpack.c.l.b16 %v1203
      %v1349 = vunpack.c.l.b16 %v1204
      %v1350 = vpack.c.b16 %v1279, %v1278
      %v1351 = vpack.c.b16 %v1281, %v1280
      %v1352 = vpack.c.b16 %v1283, %v1282
      %v1353 = vpack.c.b16 %v1285, %v1284
      %v1354 = vpack.c.b16 %v1287, %v1286
      %v1355 = vpack.c.b16 %v1289, %v1288
      %v1356 = vpack.c.b16 %v1291, %v1290
      %v1357 = vpack.c.b16 %v1293, %v1292
      %v1358 = vpack.c.b16 %v1295, %v1294
      %v1359 = vpack.c.b16 %v1297, %v1296
      %v1360 = vpack.c.b16 %v1299, %v1298
      %v1361 = vpack.c.b16 %v1301, %v1300
      %v1362 = vpack.c.b16 %v1303, %v1302
      %v1363 = vpack.c.b16 %v1305, %v1304
      %v1364 = vpack.c.b16 %v1307, %v1306
      %v1365 = vpack.c.b16 %v1309, %v1308
      %v1366 = vpack.c.b16 %v1311, %v1310
      %v1367 = vpack.c.b16 %v1313, %v1312
      %v1368 = vpack.c.b16 %v1315, %v1314
      %v1369 = vpack.c.b16 %v1317, %v1316
      %v1370 = vpack.c.b16 %v1319, %v1318
      %v1371 = vpack.c.b16 %v1321, %v1320
      %v1372 = vpack.c.b16 %v1323, %v1322
      %v1373 = vpack.c.b16 %v1325, %v1324
      %v1374 = vpack.c.b16 %v1327, %v1326
      %v1375 = vpack.c.b16 %v1329, %v1328
      %v1376 = vpack.c.b16 %v1331, %v1330
      %v1377 = vpack.c.b16 %v1333, %v1332
      %v1378 = vpack.c.b16 %v1335, %v1334
      %v1379 = vpack.c.b16 %v1337, %v1336
      %v1380 = vpack.c.b16 %v1339, %v1338
      %v1381 = vpack.c.b16 %v1341, %v1340
      %v1382 = vpack.c.b16 %v1343, %v1342
      %v1383 = vpack.c.b16 %v1345, %v1344
      %v1384 = vpack.c.b16 %v1347, %v1346
      %v1385 = vpack.c.b16 %v1349, %v1348
      %v1387 = vunpack.c.l.b16 %v1205
      %v1388 = vpack.c.b16 %v1387, %v1387
      %vm1389 = vsmask.f32 7424
      %v1391 = vshrl.u32 %v1350, 16
      %v1393 = vshll.u32 %v1350, 16
      %v1395 = vrot.slane %v1393, 1
      %v1396 = vor.u32 %v1391, %v1395
      %v1398 = vshll.u32 %v1351, 16
      %v1400 = vrot.slane %v1398, 1
      %v1401 = vsel %vm1389, %v1396, %v1400
      %v1402 = vshrl.u32 %v1351, 16
      %v1404 = vor.u32 %v1402, %v1400
      %v1406 = vshll.u32 %v1352, 16
      %v1408 = vrot.slane %v1406, 1
      %v1409 = vsel %vm1389, %v1404, %v1408
      %v1410 = vshrl.u32 %v1352, 16
      %v1412 = vor.u32 %v1410, %v1408
      %v1414 = vshll.u32 %v1353, 16
      %v1416 = vrot.slane %v1414, 1
      %v1417 = vsel %vm1389, %v1412, %v1416
      %v1418 = vshrl.u32 %v1353, 16
      %v1420 = vor.u32 %v1418, %v1416
      %v1422 = vshll.u32 %v1354, 16
      %v1424 = vrot.slane %v1422, 1
      %v1425 = vsel %vm1389, %v1420, %v1424
      %v1426 = vshrl.u32 %v1354, 16
      %v1428 = vor.u32 %v1426, %v1424
      %v1430 = vshll.u32 %v1355, 16
      %v1432 = vrot.slane %v1430, 1
      %v1433 = vsel %vm1389, %v1428, %v1432
      %v1434 = vshrl.u32 %v1355, 16
      %v1436 = vor.u32 %v1434, %v1432
      %v1438 = vshll.u32 %v1356, 16
      %v1440 = vrot.slane %v1438, 1
      %v1441 = vsel %vm1389, %v1436, %v1440
      %v1442 = vshrl.u32 %v1356, 16
      %v1444 = vor.u32 %v1442, %v1440
      %v1446 = vshll.u32 %v1357, 16
      %v1448 = vrot.slane %v1446, 1
      %v1449 = vsel %vm1389, %v1444, %v1448
      %v1450 = vshrl.u32 %v1357, 16
      %v1452 = vor.u32 %v1450, %v1448
      %v1454 = vshll.u32 %v1358, 16
      %v1456 = vrot.slane %v1454, 1
      %v1457 = vsel %vm1389, %v1452, %v1456
      %v1458 = vshrl.u32 %v1358, 16
      %v1460 = vor.u32 %v1458, %v1456
      %v1462 = vshll.u32 %v1359, 16
      %v1464 = vrot.slane %v1462, 1
      %v1465 = vsel %vm1389, %v1460, %v1464
      %v1466 = vshrl.u32 %v1359, 16
      %v1468 = vor.u32 %v1466, %v1464
      %v1470 = vshll.u32 %v1360, 16
      %v1472 = vrot.slane %v1470, 1
      %v1473 = vsel %vm1389, %v1468, %v1472
      %v1474 = vshrl.u32 %v1360, 16
      %v1476 = vor.u32 %v1474, %v1472
      %v1478 = vshll.u32 %v1361, 16
      %v1480 = vrot.slane %v1478, 1
      %v1481 = vsel %vm1389, %v1476, %v1480
      %v1482 = vshrl.u32 %v1361, 16
      %v1484 = vor.u32 %v1482, %v1480
      %v1486 = vshll.u32 %v1362, 16
      %v1488 = vrot.slane %v1486, 1
      %v1489 = vsel %vm1389, %v1484, %v1488
      %v1490 = vshrl.u32 %v1362, 16
      %v1492 = vor.u32 %v1490, %v1488
      %v1494 = vshll.u32 %v1363, 16
      %v1496 = vrot.slane %v1494, 1
      %v1497 = vsel %vm1389, %v1492, %v1496
      %v1498 = vshrl.u32 %v1363, 16
      %v1500 = vor.u32 %v1498, %v1496
      %v1502 = vshll.u32 %v1364, 16
      %v1504 = vrot.slane %v1502, 1
      %v1505 = vsel %vm1389, %v1500, %v1504
      %v1506 = vshrl.u32 %v1364, 16
      %v1508 = vor.u32 %v1506, %v1504
      %v1510 = vshll.u32 %v1365, 16
      %v1512 = vrot.slane %v1510, 1
      %v1513 = vsel %vm1389, %v1508, %v1512
      %v1514 = vshrl.u32 %v1365, 16
      %v1516 = vor.u32 %v1514, %v1512
      %v1518 = vshll.u32 %v1366, 16
      %v1520 = vrot.slane %v1518, 1
      %v1521 = vsel %vm1389, %v1516, %v1520
      %v1522 = vshrl.u32 %v1366, 16
      %v1524 = vor.u32 %v1522, %v1520
      %v1526 = vshll.u32 %v1367, 16
      %v1528 = vrot.slane %v1526, 1
      %v1529 = vsel %vm1389, %v1524, %v1528
      %v1530 = vshrl.u32 %v1367, 16
      %v1532 = vor.u32 %v1530, %v1528
      %v1534 = vshll.u32 %v1368, 16
      %v1536 = vrot.slane %v1534, 1
      %v1537 = vsel %vm1389, %v1532, %v1536
      %v1538 = vshrl.u32 %v1368, 16
      %v1540 = vor.u32 %v1538, %v1536
      %v1542 = vshll.u32 %v1369, 16
      %v1544 = vrot.slane %v1542, 1
      %v1545 = vsel %vm1389, %v1540, %v1544
      %v1546 = vshrl.u32 %v1369, 16
      %v1548 = vor.u32 %v1546, %v1544
      %v1550 = vshll.u32 %v1370, 16
      %v1552 = vrot.slane %v1550, 1
      %v1553 = vsel %vm1389, %v1548, %v1552
      %v1554 = vshrl.u32 %v1370, 16
      %v1556 = vor.u32 %v1554, %v1552
      %v1558 = vshll.u32 %v1371, 16
      %v1560 = vrot.slane %v1558, 1
      %v1561 = vsel %vm1389, %v1556, %v1560
      %v1562 = vshrl.u32 %v1371, 16
      %v1564 = vor.u32 %v1562, %v1560
      %v1566 = vshll.u32 %v1372, 16
      %v1568 = vrot.slane %v1566, 1
      %v1569 = vsel %vm1389, %v1564, %v1568
      %v1570 = vshrl.u32 %v1372, 16
      %v1572 = vor.u32 %v1570, %v1568
      %v1574 = vshll.u32 %v1373, 16
      %v1576 = vrot.slane %v1574, 1
      %v1577 = vsel %vm1389, %v1572, %v1576
      %v1578 = vshrl.u32 %v1373, 16
      %v1580 = vor.u32 %v1578, %v1576
      %v1582 = vshll.u32 %v1374, 16
      %v1584 = vrot.slane %v1582, 1
      %v1585 = vsel %vm1389, %v1580, %v1584
      %v1586 = vshrl.u32 %v1374, 16
      %v1588 = vor.u32 %v1586, %v1584
      %v1590 = vshll.u32 %v1375, 16
      %v1592 = vrot.slane %v1590, 1
      %v1593 = vsel %vm1389, %v1588, %v1592
      %v1594 = vshrl.u32 %v1375, 16
      %v1596 = vor.u32 %v1594, %v1592
      %v1598 = vshll.u32 %v1376, 16
      %v1600 = vrot.slane %v1598, 1
      %v1601 = vsel %vm1389, %v1596, %v1600
      %v1602 = vshrl.u32 %v1376, 16
      %v1604 = vor.u32 %v1602, %v1600
      %v1606 = vshll.u32 %v1377, 16
      %v1608 = vrot.slane %v1606, 1
      %v1609 = vsel %vm1389, %v1604, %v1608
      %v1610 = vshrl.u32 %v1377, 16
      %v1612 = vor.u32 %v1610, %v1608
      %v1614 = vshll.u32 %v1378, 16
      %v1616 = vrot.slane %v1614, 1
      %v1617 = vsel %vm1389, %v1612, %v1616
      %v1618 = vshrl.u32 %v1378, 16
      %v1620 = vor.u32 %v1618, %v1616
      %v1622 = vshll.u32 %v1379, 16
      %v1624 = vrot.slane %v1622, 1
      %v1625 = vsel %vm1389, %v1620, %v1624
      %v1626 = vshrl.u32 %v1379, 16
      %v1628 = vor.u32 %v1626, %v1624
      %v1630 = vshll.u32 %v1380, 16
      %v1632 = vrot.slane %v1630, 1
      %v1633 = vsel %vm1389, %v1628, %v1632
      %v1634 = vshrl.u32 %v1380, 16
      %v1636 = vor.u32 %v1634, %v1632
      %v1638 = vshll.u32 %v1381, 16
      %v1640 = vrot.slane %v1638, 1
      %v1641 = vsel %vm1389, %v1636, %v1640
      %v1642 = vshrl.u32 %v1381, 16
      %v1644 = vor.u32 %v1642, %v1640
      %v1646 = vshll.u32 %v1382, 16
      %v1648 = vrot.slane %v1646, 1
      %v1649 = vsel %vm1389, %v1644, %v1648
      %v1650 = vshrl.u32 %v1382, 16
      %v1652 = vor.u32 %v1650, %v1648
      %v1654 = vshll.u32 %v1383, 16
      %v1656 = vrot.slane %v1654, 1
      %v1657 = vsel %vm1389, %v1652, %v1656
      %v1658 = vshrl.u32 %v1383, 16
      %v1660 = vor.u32 %v1658, %v1656
      %v1662 = vshll.u32 %v1384, 16
      %v1664 = vrot.slane %v1662, 1
      %v1665 = vsel %vm1389, %v1660, %v1664
      %v1666 = vshrl.u32 %v1384, 16
      %v1668 = vor.u32 %v1666, %v1664
      %v1670 = vshll.u32 %v1385, 16
      %v1672 = vrot.slane %v1670, 1
      %v1673 = vsel %vm1389, %v1668, %v1672
      %v1674 = vshrl.u32 %v1385, 16
      %v1676 = vor.u32 %v1674, %v1672
      %v1678 = vshll.u32 %v1388, 16
      %v1680 = vrot.slane %v1678, 1
      %v1681 = vsel %vm1389, %v1676, %v1680
      %1682 = vrot.lane.b32.xlu0 %v1401, 2
      %v1683 = vpop.permute.xlu0 %1682
      %1684 = vrot.lane.b32.xlu0 %v1409, 2
      %v1685 = vpop.permute.xlu0 %1684
      %1686 = vrot.lane.b32.xlu0 %v1417, 2
      %v1687 = vpop.permute.xlu0 %1686
      %1688 = vrot.lane.b32.xlu0 %v1425, 2
      %v1689 = vpop.permute.xlu0 %1688
      %1690 = vrot.lane.b32.xlu0 %v1433, 2
      %v1691 = vpop.permute.xlu0 %1690
      %1692 = vrot.lane.b32.xlu0 %v1441, 2
      %v1693 = vpop.permute.xlu0 %1692
      %1694 = vrot.lane.b32.xlu0 %v1449, 2
      %v1695 = vpop.permute.xlu0 %1694
      %1696 = vrot.lane.b32.xlu0 %v1457, 2
      %v1697 = vpop.permute.xlu0 %1696
      %1698 = vrot.lane.b32.xlu0 %v1465, 2
      %v1699 = vpop.permute.xlu0 %1698
      %1700 = vrot.lane.b32.xlu0 %v1473, 2
      %v1701 = vpop.permute.xlu0 %1700
      %1702 = vrot.lane.b32.xlu0 %v1481, 2
      %v1703 = vpop.permute.xlu0 %1702
      %1704 = vrot.lane.b32.xlu0 %v1489, 2
      %v1705 = vpop.permute.xlu0 %1704
      %1706 = vrot.lane.b32.xlu0 %v1497, 2
      %v1707 = vpop.permute.xlu0 %1706
      %1708 = vrot.lane.b32.xlu0 %v1505, 2
      %v1709 = vpop.permute.xlu0 %1708
      %1710 = vrot.lane.b32.xlu0 %v1513, 2
      %v1711 = vpop.permute.xlu0 %1710
      %1712 = vrot.lane.b32.xlu0 %v1521, 2
      %v1713 = vpop.permute.xlu0 %1712
      %1714 = vrot.lane.b32.xlu0 %v1529, 2
      %v1715 = vpop.permute.xlu0 %1714
      %1716 = vrot.lane.b32.xlu0 %v1537, 2
      %v1717 = vpop.permute.xlu0 %1716
      %1718 = vrot.lane.b32.xlu0 %v1545, 2
      %v1719 = vpop.permute.xlu0 %1718
      %1720 = vrot.lane.b32.xlu0 %v1553, 2
      %v1721 = vpop.permute.xlu0 %1720
      %1722 = vrot.lane.b32.xlu0 %v1561, 2
      %v1723 = vpop.permute.xlu0 %1722
      %1724 = vrot.lane.b32.xlu0 %v1569, 2
      %v1725 = vpop.permute.xlu0 %1724
      %1726 = vrot.lane.b32.xlu0 %v1577, 2
      %v1727 = vpop.permute.xlu0 %1726
      %1728 = vrot.lane.b32.xlu0 %v1585, 2
      %v1729 = vpop.permute.xlu0 %1728
      %1730 = vrot.lane.b32.xlu0 %v1593, 2
      %v1731 = vpop.permute.xlu0 %1730
      %1732 = vrot.lane.b32.xlu0 %v1601, 2
      %v1733 = vpop.permute.xlu0 %1732
      %1734 = vrot.lane.b32.xlu0 %v1609, 2
      %v1735 = vpop.permute.xlu0 %1734
      %1736 = vrot.lane.b32.xlu0 %v1617, 2
      %v1737 = vpop.permute.xlu0 %1736
      %1738 = vrot.lane.b32.xlu0 %v1625, 2
      %v1739 = vpop.permute.xlu0 %1738
      %1740 = vrot.lane.b32.xlu0 %v1633, 2
      %v1741 = vpop.permute.xlu0 %1740
      %1742 = vrot.lane.b32.xlu0 %v1641, 2
      %v1743 = vpop.permute.xlu0 %1742
      %1744 = vrot.lane.b32.xlu0 %v1649, 2
      %v1745 = vpop.permute.xlu0 %1744
      %1746 = vrot.lane.b32.xlu0 %v1657, 2
      %v1747 = vpop.permute.xlu0 %1746
      %1748 = vrot.lane.b32.xlu0 %v1665, 2
      %v1749 = vpop.permute.xlu0 %1748
      %1750 = vrot.lane.b32.xlu0 %v1673, 2
      %v1751 = vpop.permute.xlu0 %1750
      %1752 = vrot.lane.b32.xlu0 %v1681, 2
      %v1753 = vpop.permute.xlu0 %1752
      %vm1754 = vcmask 1046528
      %v1755 = vrot.slane %v1350, 1
      %v1756 = vrot.slane %v1351, 1
      %v1757 = vsel %vm1754, %v1755, %v1756
      %v1758 = vrot.slane %v1352, 1
      %v1759 = vsel %vm1754, %v1756, %v1758
      %v1760 = vrot.slane %v1353, 1
      %v1761 = vsel %vm1754, %v1758, %v1760
      %v1762 = vrot.slane %v1354, 1
      %v1763 = vsel %vm1754, %v1760, %v1762
      %v1764 = vrot.slane %v1355, 1
      %v1765 = vsel %vm1754, %v1762, %v1764
      %v1766 = vrot.slane %v1356, 1
      %v1767 = vsel %vm1754, %v1764, %v1766
      %v1768 = vrot.slane %v1357, 1
      %v1769 = vsel %vm1754, %v1766, %v1768
      %v1770 = vrot.slane %v1358, 1
      %v1771 = vsel %vm1754, %v1768, %v1770
      %v1772 = vrot.slane %v1359, 1
      %v1773 = vsel %vm1754, %v1770, %v1772
      %v1774 = vrot.slane %v1360, 1
      %v1775 = vsel %vm1754, %v1772, %v1774
      %v1776 = vrot.slane %v1361, 1
      %v1777 = vsel %vm1754, %v1774, %v1776
      %v1778 = vrot.slane %v1362, 1
      %v1779 = vsel %vm1754, %v1776, %v1778
      %v1780 = vrot.slane %v1363, 1
      %v1781 = vsel %vm1754, %v1778, %v1780
      %v1782 = vrot.slane %v1364, 1
      %v1783 = vsel %vm1754, %v1780, %v1782
      %v1784 = vrot.slane %v1365, 1
      %v1785 = vsel %vm1754, %v1782, %v1784
      %v1786 = vrot.slane %v1366, 1
      %v1787 = vsel %vm1754, %v1784, %v1786
      %v1788 = vrot.slane %v1367, 1
      %v1789 = vsel %vm1754, %v1786, %v1788
      %v1790 = vrot.slane %v1368, 1
      %v1791 = vsel %vm1754, %v1788, %v1790
      %v1792 = vrot.slane %v1369, 1
      %v1793 = vsel %vm1754, %v1790, %v1792
      %v1794 = vrot.slane %v1370, 1
      %v1795 = vsel %vm1754, %v1792, %v1794
      %v1796 = vrot.slane %v1371, 1
      %v1797 = vsel %vm1754, %v1794, %v1796
      %v1798 = vrot.slane %v1372, 1
      %v1799 = vsel %vm1754, %v1796, %v1798
      %v1800 = vrot.slane %v1373, 1
      %v1801 = vsel %vm1754, %v1798, %v1800
      %v1802 = vrot.slane %v1374, 1
      %v1803 = vsel %vm1754, %v1800, %v1802
      %v1804 = vrot.slane %v1375, 1
      %v1805 = vsel %vm1754, %v1802, %v1804
      %v1806 = vrot.slane %v1376, 1
      %v1807 = vsel %vm1754, %v1804, %v1806
      %v1808 = vrot.slane %v1377, 1
      %v1809 = vsel %vm1754, %v1806, %v1808
      %v1810 = vrot.slane %v1378, 1
      %v1811 = vsel %vm1754, %v1808, %v1810
      %v1812 = vrot.slane %v1379, 1
      %v1813 = vsel %vm1754, %v1810, %v1812
      %v1814 = vrot.slane %v1380, 1
      %v1815 = vsel %vm1754, %v1812, %v1814
      %v1816 = vrot.slane %v1381, 1
      %v1817 = vsel %vm1754, %v1814, %v1816
      %v1818 = vrot.slane %v1382, 1
      %v1819 = vsel %vm1754, %v1816, %v1818
      %v1820 = vrot.slane %v1383, 1
      %v1821 = vsel %vm1754, %v1818, %v1820
      %v1822 = vrot.slane %v1384, 1
      %v1823 = vsel %vm1754, %v1820, %v1822
      %v1824 = vrot.slane %v1385, 1
      %v1825 = vsel %vm1754, %v1822, %v1824
      %v1826 = vrot.slane %v1388, 1
      %v1827 = vsel %vm1754, %v1824, %v1826
      %1828 = vrot.lane.b32.xlu0 %v1757, 4
      %v1829 = vpop.permute.xlu0 %1828
      %1830 = vrot.lane.b32.xlu0 %v1759, 4
      %v1831 = vpop.permute.xlu0 %1830
      %1832 = vrot.lane.b32.xlu0 %v1761, 4
      %v1833 = vpop.permute.xlu0 %1832
      %1834 = vrot.lane.b32.xlu0 %v1763, 4
      %v1835 = vpop.permute.xlu0 %1834
      %1836 = vrot.lane.b32.xlu0 %v1765, 4
      %v1837 = vpop.permute.xlu0 %1836
      %1838 = vrot.lane.b32.xlu0 %v1767, 4
      %v1839 = vpop.permute.xlu0 %1838
      %1840 = vrot.lane.b32.xlu0 %v1769, 4
      %v1841 = vpop.permute.xlu0 %1840
      %1842 = vrot.lane.b32.xlu0 %v1771, 4
      %v1843 = vpop.permute.xlu0 %1842
      %1844 = vrot.lane.b32.xlu0 %v1773, 4
      %v1845 = vpop.permute.xlu0 %1844
      %1846 = vrot.lane.b32.xlu0 %v1775, 4
      %v1847 = vpop.permute.xlu0 %1846
      %1848 = vrot.lane.b32.xlu0 %v1777, 4
      %v1849 = vpop.permute.xlu0 %1848
      %1850 = vrot.lane.b32.xlu0 %v1779, 4
      %v1851 = vpop.permute.xlu0 %1850
      %1852 = vrot.lane.b32.xlu0 %v1781, 4
      %v1853 = vpop.permute.xlu0 %1852
      %1854 = vrot.lane.b32.xlu0 %v1783, 4
      %v1855 = vpop.permute.xlu0 %1854
      %1856 = vrot.lane.b32.xlu0 %v1785, 4
      %v1857 = vpop.permute.xlu0 %1856
      %1858 = vrot.lane.b32.xlu0 %v1787, 4
      %v1859 = vpop.permute.xlu0 %1858
      %1860 = vrot.lane.b32.xlu0 %v1789, 4
      %v1861 = vpop.permute.xlu0 %1860
      %1862 = vrot.lane.b32.xlu0 %v1791, 4
      %v1863 = vpop.permute.xlu0 %1862
      %1864 = vrot.lane.b32.xlu0 %v1793, 4
      %v1865 = vpop.permute.xlu0 %1864
      %1866 = vrot.lane.b32.xlu0 %v1795, 4
      %v1867 = vpop.permute.xlu0 %1866
      %1868 = vrot.lane.b32.xlu0 %v1797, 4
      %v1869 = vpop.permute.xlu0 %1868
      %1870 = vrot.lane.b32.xlu0 %v1799, 4
      %v1871 = vpop.permute.xlu0 %1870
      %1872 = vrot.lane.b32.xlu0 %v1801, 4
      %v1873 = vpop.permute.xlu0 %1872
      %1874 = vrot.lane.b32.xlu0 %v1803, 4
      %v1875 = vpop.permute.xlu0 %1874
      %1876 = vrot.lane.b32.xlu0 %v1805, 4
      %v1877 = vpop.permute.xlu0 %1876
      %1878 = vrot.lane.b32.xlu0 %v1807, 4
      %v1879 = vpop.permute.xlu0 %1878
      %1880 = vrot.lane.b32.xlu0 %v1809, 4
      %v1881 = vpop.permute.xlu0 %1880
      %1882 = vrot.lane.b32.xlu0 %v1811, 4
      %v1883 = vpop.permute.xlu0 %1882
      %1884 = vrot.lane.b32.xlu0 %v1813, 4
      %v1885 = vpop.permute.xlu0 %1884
      %1886 = vrot.lane.b32.xlu0 %v1815, 4
      %v1887 = vpop.permute.xlu0 %1886
      %1888 = vrot.lane.b32.xlu0 %v1817, 4
      %v1889 = vpop.permute.xlu0 %1888
      %1890 = vrot.lane.b32.xlu0 %v1819, 4
      %v1891 = vpop.permute.xlu0 %1890
      %1892 = vrot.lane.b32.xlu0 %v1821, 4
      %v1893 = vpop.permute.xlu0 %1892
      %1894 = vrot.lane.b32.xlu0 %v1823, 4
      %v1895 = vpop.permute.xlu0 %1894
      %1896 = vrot.lane.b32.xlu0 %v1825, 4
      %v1897 = vpop.permute.xlu0 %1896
      %1898 = vrot.lane.b32.xlu0 %v1827, 4
      %v1899 = vpop.permute.xlu0 %1898
      %vm1900 = vcmask 15360
      %v1902 = vsel %vm1900, %v1350, %v1683
      %v1904 = vsel %vm1900, %v1351, %v1685
      %v1906 = vsel %vm1900, %v1352, %v1687
      %v1908 = vsel %vm1900, %v1353, %v1689
      %v1910 = vsel %vm1900, %v1354, %v1691
      %v1912 = vsel %vm1900, %v1355, %v1693
      %v1914 = vsel %vm1900, %v1356, %v1695
      %v1916 = vsel %vm1900, %v1357, %v1697
      %v1918 = vsel %vm1900, %v1358, %v1699
      %v1920 = vsel %vm1900, %v1359, %v1701
      %v1922 = vsel %vm1900, %v1360, %v1703
      %v1924 = vsel %vm1900, %v1361, %v1705
      %v1926 = vsel %vm1900, %v1362, %v1707
      %v1928 = vsel %vm1900, %v1363, %v1709
      %v1930 = vsel %vm1900, %v1364, %v1711
      %v1932 = vsel %vm1900, %v1365, %v1713
      %v1934 = vsel %vm1900, %v1366, %v1715
      %v1936 = vsel %vm1900, %v1367, %v1717
      %v1938 = vsel %vm1900, %v1368, %v1719
      %v1940 = vsel %vm1900, %v1369, %v1721
      %v1942 = vsel %vm1900, %v1370, %v1723
      %v1944 = vsel %vm1900, %v1371, %v1725
      %v1946 = vsel %vm1900, %v1372, %v1727
      %v1948 = vsel %vm1900, %v1373, %v1729
      %v1950 = vsel %vm1900, %v1374, %v1731
      %v1952 = vsel %vm1900, %v1375, %v1733
      %v1954 = vsel %vm1900, %v1376, %v1735
      %v1956 = vsel %vm1900, %v1377, %v1737
      %v1958 = vsel %vm1900, %v1378, %v1739
      %v1960 = vsel %vm1900, %v1379, %v1741
      %v1962 = vsel %vm1900, %v1380, %v1743
      %v1964 = vsel %vm1900, %v1381, %v1745
      %v1966 = vsel %vm1900, %v1382, %v1747
      %v1968 = vsel %vm1900, %v1383, %v1749
      %v1970 = vsel %vm1900, %v1384, %v1751
      %v1972 = vsel %vm1900, %v1385, %v1753
      %vm1973 = vcmask 31744
      %v1975 = vsel %vm1973, %v1902, %v1829
      %v1977 = vsel %vm1973, %v1904, %v1831
      %v1979 = vsel %vm1973, %v1906, %v1833
      %v1981 = vsel %vm1973, %v1908, %v1835
      %v1983 = vsel %vm1973, %v1910, %v1837
      %v1985 = vsel %vm1973, %v1912, %v1839
      %v1987 = vsel %vm1973, %v1914, %v1841
      %v1989 = vsel %vm1973, %v1916, %v1843
      %v1991 = vsel %vm1973, %v1918, %v1845
      %v1993 = vsel %vm1973, %v1920, %v1847
      %v1995 = vsel %vm1973, %v1922, %v1849
      %v1997 = vsel %vm1973, %v1924, %v1851
      %v1999 = vsel %vm1973, %v1926, %v1853
      %v2001 = vsel %vm1973, %v1928, %v1855
      %v2003 = vsel %vm1973, %v1930, %v1857
      %v2005 = vsel %vm1973, %v1932, %v1859
      %v2007 = vsel %vm1973, %v1934, %v1861
      %v2009 = vsel %vm1973, %v1936, %v1863
      %v2011 = vsel %vm1973, %v1938, %v1865
      %v2013 = vsel %vm1973, %v1940, %v1867
      %v2015 = vsel %vm1973, %v1942, %v1869
      %v2017 = vsel %vm1973, %v1944, %v1871
      %v2019 = vsel %vm1973, %v1946, %v1873
      %v2021 = vsel %vm1973, %v1948, %v1875
      %v2023 = vsel %vm1973, %v1950, %v1877
      %v2025 = vsel %vm1973, %v1952, %v1879
      %v2027 = vsel %vm1973, %v1954, %v1881
      %v2029 = vsel %vm1973, %v1956, %v1883
      %v2031 = vsel %vm1973, %v1958, %v1885
      %v2033 = vsel %vm1973, %v1960, %v1887
      %v2035 = vsel %vm1973, %v1962, %v1889
      %v2037 = vsel %vm1973, %v1964, %v1891
      %v2039 = vsel %vm1973, %v1966, %v1893
      %v2041 = vsel %vm1973, %v1968, %v1895
      %v2043 = vsel %vm1973, %v1970, %v1897
      %v2045 = vsel %vm1973, %v1972, %v1899
      %v2046 = vld [vmem:[%s2] sm:$0x7]
      %s2047 = scalar_lea.vmem %s2, 4
      %v2048 = vld [vmem:[%s2047] sm:$0x7]
      %vm2049 = vcmask 48128
      %v2050 = vsel %vm2049, %v1979, 0
      %v2052 = vsel %vm2049, %v1981, 0
      %v2054 = vsel %vm2049, %v1983, 0
      %v2056 = vsel %vm2049, %v1985, 0
      %v2058 = vsel %vm2049, %v1987, 0
      %v2060 = vsel %vm2049, %v1989, 0
      %v2062 = vsel %vm2049, %v1991, 0
      %v2064 = vsel %vm2049, %v1993, 0
      %v2066 = vsel %vm2049, %v1995, 0
      %v2068 = vsel %vm2049, %v1997, 0
      %v2070 = vsel %vm2049, %v1999, 0
      %v2072 = vsel %vm2049, %v2001, 0
      %v2074 = vsel %vm2049, %v2003, 0
      %v2076 = vsel %vm2049, %v2005, 0
      %v2078 = vsel %vm2049, %v2007, 0
      %v2080 = vsel %vm2049, %v2009, 0
      %v2082 = vsel %vm2049, %v2011, 0
      %v2084 = vsel %vm2049, %v2013, 0
      %v2086 = vsel %vm2049, %v2015, 0
      %v2088 = vsel %vm2049, %v2017, 0
      %v2090 = vsel %vm2049, %v2019, 0
      %v2092 = vsel %vm2049, %v2021, 0
      %v2094 = vsel %vm2049, %v2023, 0
      %v2096 = vsel %vm2049, %v2025, 0
      %v2098 = vsel %vm2049, %v2027, 0
      %v2100 = vsel %vm2049, %v2029, 0
      %v2102 = vsel %vm2049, %v2031, 0
      %v2104 = vsel %vm2049, %v2033, 0
      %v2106 = vsel %vm2049, %v2035, 0
      %v2108 = vsel %vm2049, %v2037, 0
      %v2110 = vsel %vm2049, %v2039, 0
      %v2112 = vsel %vm2049, %v2041, 0
      %vm2114 = vcmask 1042432
      %v2116 = vsel %vm2114, %v2048, 0
      %2118 = vmatpush.bf16.msra.mxu0 0
      %2119 = vmatpush.bf16.msra.mxu0 0
      %2120 = vmatpush.bf16.msra.mxu0 0
      %2121 = vmatpush.bf16.msra.mxu0 0
      %2122 = vmatpush.bf16.msra.mxu0 0
      %2123 = vmatpush.bf16.msra.mxu0 0
      %2124 = vmatpush.bf16.msra.mxu0 0
      %2125 = vmatpush.bf16.msra.mxu0 %v2116
      %2126 = vmatmul.bf16.gmra.mxu0 %v2050
      %v2127 = vpop.f32.mrf.mxu0
      %v2128 = vadd.f32 0.0, %v2127
      %v2129 = vpop.f32.mrf.mxu0
      %v2130 = vadd.f32 0.0, %v2129
      %2131 = vmatmul.bf16.gmra.mxu0 %v2052
      %v2132 = vpop.f32.mrf.mxu0
      %v2133 = vpop.f32.mrf.mxu0
      %2134 = vmatmul.bf16.gmra.mxu0 %v2054
      %v2135 = vpop.f32.mrf.mxu0
      %v2136 = vadd.f32 0.0, %v2135
      %v2137 = vpop.f32.mrf.mxu0
      %v2138 = vadd.f32 0.0, %v2137
      %2139 = vmatmul.bf16.gmra.mxu0 %v2056
      %v2140 = vpop.f32.mrf.mxu0
      %v2141 = vpop.f32.mrf.mxu0
      %2142 = vmatmul.bf16.gmra.mxu0 %v2058
      %v2143 = vpop.f32.mrf.mxu0
      %v2144 = vadd.f32 0.0, %v2143
      %v2145 = vpop.f32.mrf.mxu0
      %v2146 = vadd.f32 0.0, %v2145
      %2147 = vmatmul.bf16.gmra.mxu0 %v2060
      %v2148 = vpop.f32.mrf.mxu0
      %v2149 = vpop.f32.mrf.mxu0
      %2150 = vmatmul.bf16.gmra.mxu0 %v2062
      %v2151 = vpop.f32.mrf.mxu0
      %v2152 = vadd.f32 0.0, %v2151
      %v2153 = vpop.f32.mrf.mxu0
      %v2154 = vadd.f32 0.0, %v2153
      %2155 = vmatmul.bf16.gmra.mxu0 %v2064
      %v2156 = vpop.f32.mrf.mxu0
      %v2157 = vpop.f32.mrf.mxu0
      %2158 = vmatmul.bf16.gmra.mxu0 %v2066
      %v2159 = vpop.f32.mrf.mxu0
      %v2160 = vadd.f32 0.0, %v2159
      %v2161 = vpop.f32.mrf.mxu0
      %v2162 = vadd.f32 0.0, %v2161
      %2163 = vmatmul.bf16.gmra.mxu0 %v2068
      %v2164 = vpop.f32.mrf.mxu0
      %v2165 = vpop.f32.mrf.mxu0
      %2166 = vmatmul.bf16.gmra.mxu0 %v2070
      %v2167 = vpop.f32.mrf.mxu0
      %v2168 = vadd.f32 0.0, %v2167
      %v2169 = vpop.f32.mrf.mxu0
      %v2170 = vadd.f32 0.0, %v2169
      %2171 = vmatmul.bf16.gmra.mxu0 %v2072
      %v2172 = vpop.f32.mrf.mxu0
      %v2173 = vpop.f32.mrf.mxu0
      %2174 = vmatmul.bf16.gmra.mxu0 %v2074
      %v2175 = vpop.f32.mrf.mxu0
      %v2176 = vadd.f32 0.0, %v2175
      %v2177 = vpop.f32.mrf.mxu0
      %v2178 = vadd.f32 0.0, %v2177
      %2179 = vmatmul.bf16.gmra.mxu0 %v2076
      %v2180 = vpop.f32.mrf.mxu0
      %v2181 = vpop.f32.mrf.mxu0
      %2182 = vmatmul.bf16.gmra.mxu0 %v2078
      %v2183 = vpop.f32.mrf.mxu0
      %v2184 = vadd.f32 0.0, %v2183
      %v2185 = vpop.f32.mrf.mxu0
      %v2186 = vadd.f32 0.0, %v2185
      %2187 = vmatmul.bf16.gmra.mxu0 %v2080
      %v2188 = vpop.f32.mrf.mxu0
      %v2189 = vpop.f32.mrf.mxu0
      %2190 = vmatmul.bf16.gmra.mxu0 %v2082
      %v2191 = vpop.f32.mrf.mxu0
      %v2192 = vadd.f32 0.0, %v2191
      %v2193 = vpop.f32.mrf.mxu0
      %v2194 = vadd.f32 0.0, %v2193
      %2195 = vmatmul.bf16.gmra.mxu0 %v2084
      %v2196 = vpop.f32.mrf.mxu0
      %v2197 = vpop.f32.mrf.mxu0
      %2198 = vmatmul.bf16.gmra.mxu0 %v2086
      %v2199 = vpop.f32.mrf.mxu0
      %v2200 = vadd.f32 0.0, %v2199
      %v2201 = vpop.f32.mrf.mxu0
      %v2202 = vadd.f32 0.0, %v2201
      %2203 = vmatmul.bf16.gmra.mxu0 %v2088
      %v2204 = vpop.f32.mrf.mxu0
      %v2205 = vpop.f32.mrf.mxu0
      %2206 = vmatmul.bf16.gmra.mxu0 %v2090
      %v2207 = vpop.f32.mrf.mxu0
      %v2208 = vadd.f32 0.0, %v2207
      %v2209 = vpop.f32.mrf.mxu0
      %v2210 = vadd.f32 0.0, %v2209
      %2211 = vmatmul.bf16.gmra.mxu0 %v2092
      %v2212 = vpop.f32.mrf.mxu0
      %v2213 = vpop.f32.mrf.mxu0
      %2214 = vmatmul.bf16.gmra.mxu0 %v2094
      %v2215 = vpop.f32.mrf.mxu0
      %v2216 = vadd.f32 0.0, %v2215
      %v2217 = vpop.f32.mrf.mxu0
      %v2218 = vadd.f32 0.0, %v2217
      %2219 = vmatmul.bf16.gmra.mxu0 %v2096
      %v2220 = vpop.f32.mrf.mxu0
      %v2221 = vpop.f32.mrf.mxu0
      %2222 = vmatmul.bf16.gmra.mxu0 %v2098
      %v2223 = vpop.f32.mrf.mxu0
      %v2224 = vadd.f32 0.0, %v2223
      %v2225 = vpop.f32.mrf.mxu0
      %v2226 = vadd.f32 0.0, %v2225
      %2227 = vmatmul.bf16.gmra.mxu0 %v2100
      %v2228 = vpop.f32.mrf.mxu0
      %v2229 = vpop.f32.mrf.mxu0
      %2230 = vmatmul.bf16.gmra.mxu0 %v2102
      %v2231 = vpop.f32.mrf.mxu0
      %v2232 = vadd.f32 0.0, %v2231
      %v2233 = vpop.f32.mrf.mxu0
      %v2234 = vadd.f32 0.0, %v2233
      %2235 = vmatmul.bf16.gmra.mxu0 %v2104
      %v2236 = vpop.f32.mrf.mxu0
      %v2237 = vpop.f32.mrf.mxu0
      %2238 = vmatmul.bf16.gmra.mxu0 %v2106
      %v2239 = vpop.f32.mrf.mxu0
      %v2240 = vadd.f32 0.0, %v2239
      %v2241 = vpop.f32.mrf.mxu0
      %v2242 = vadd.f32 0.0, %v2241
      %2243 = vmatmul.bf16.gmra.mxu0 %v2108
      %v2244 = vpop.f32.mrf.mxu0
      %v2245 = vpop.f32.mrf.mxu0
      %2246 = vmatmul.bf16.gmra.mxu0 %v2110
      %v2247 = vpop.f32.mrf.mxu0
      %v2248 = vadd.f32 0.0, %v2247
      %v2249 = vpop.f32.mrf.mxu0
      %v2250 = vadd.f32 0.0, %v2249
      %2251 = vmatmul.bf16.gmra.mxu0 %v2112
      %v2252 = vpop.f32.mrf.mxu0
      %v2253 = vpop.f32.mrf.mxu0
      %2254 = vdwg.mxu0
      %v2255 = vsel %vm2049, %v1975, 0
      %v2257 = vsel %vm2049, %v1977, 0
      %v2260 = vsel %vm2114, %v2046, 0
      %2262 = vmatpush.bf16.msra.mxu0 0
      %2263 = vmatpush.bf16.msra.mxu0 0
      %2264 = vmatpush.bf16.msra.mxu0 0
      %2265 = vmatpush.bf16.msra.mxu0 0
      %2266 = vmatpush.bf16.msra.mxu0 0
      %2267 = vmatpush.bf16.msra.mxu0 0
      %2268 = vmatpush.bf16.msra.mxu0 0
      %2269 = vmatpush.bf16.msra.mxu0 %v2260
      %2270 = vmatmul.bf16.gmra.mxu0 %v2255
      %v2271 = vpop.f32.mrf.mxu0
      %v2272 = vadd.f32 %v2128, %v2271
      %v2273 = vpop.f32.mrf.mxu0
      %v2274 = vadd.f32 %v2130, %v2273
      %2275 = vmatmul.bf16.gmra.mxu0 %v2257
      %v2276 = vpop.f32.mrf.mxu0
      %v2277 = vpop.f32.mrf.mxu0
      %2278 = vmatmul.bf16.gmra.mxu0 %v2050
      %v2279 = vpop.f32.mrf.mxu0
      %v2280 = vadd.f32 %v2136, %v2279
      %v2281 = vpop.f32.mrf.mxu0
      %v2282 = vadd.f32 %v2138, %v2281
      %2283 = vmatmul.bf16.gmra.mxu0 %v2052
      %v2284 = vpop.f32.mrf.mxu0
      %v2285 = vpop.f32.mrf.mxu0
      %2286 = vmatmul.bf16.gmra.mxu0 %v2054
      %v2287 = vpop.f32.mrf.mxu0
      %v2288 = vadd.f32 %v2144, %v2287
      %v2289 = vpop.f32.mrf.mxu0
      %v2290 = vadd.f32 %v2146, %v2289
      %2291 = vmatmul.bf16.gmra.mxu0 %v2056
      %v2292 = vpop.f32.mrf.mxu0
      %v2293 = vpop.f32.mrf.mxu0
      %2294 = vmatmul.bf16.gmra.mxu0 %v2058
      %v2295 = vpop.f32.mrf.mxu0
      %v2296 = vadd.f32 %v2152, %v2295
      %v2297 = vpop.f32.mrf.mxu0
      %v2298 = vadd.f32 %v2154, %v2297
      %2299 = vmatmul.bf16.gmra.mxu0 %v2060
      %v2300 = vpop.f32.mrf.mxu0
      %v2301 = vpop.f32.mrf.mxu0
      %2302 = vmatmul.bf16.gmra.mxu0 %v2062
      %v2303 = vpop.f32.mrf.mxu0
      %v2304 = vadd.f32 %v2160, %v2303
      %v2305 = vpop.f32.mrf.mxu0
      %v2306 = vadd.f32 %v2162, %v2305
      %2307 = vmatmul.bf16.gmra.mxu0 %v2064
      %v2308 = vpop.f32.mrf.mxu0
      %v2309 = vpop.f32.mrf.mxu0
      %2310 = vmatmul.bf16.gmra.mxu0 %v2066
      %v2311 = vpop.f32.mrf.mxu0
      %v2312 = vadd.f32 %v2168, %v2311
      %v2313 = vpop.f32.mrf.mxu0
      %v2314 = vadd.f32 %v2170, %v2313
      %2315 = vmatmul.bf16.gmra.mxu0 %v2068
      %v2316 = vpop.f32.mrf.mxu0
      %v2317 = vpop.f32.mrf.mxu0
      %2318 = vmatmul.bf16.gmra.mxu0 %v2070
      %v2319 = vpop.f32.mrf.mxu0
      %v2320 = vadd.f32 %v2176, %v2319
      %v2321 = vpop.f32.mrf.mxu0
      %v2322 = vadd.f32 %v2178, %v2321
      %2323 = vmatmul.bf16.gmra.mxu0 %v2072
      %v2324 = vpop.f32.mrf.mxu0
      %v2325 = vpop.f32.mrf.mxu0
      %2326 = vmatmul.bf16.gmra.mxu0 %v2074
      %v2327 = vpop.f32.mrf.mxu0
      %v2328 = vadd.f32 %v2184, %v2327
      %v2329 = vpop.f32.mrf.mxu0
      %v2330 = vadd.f32 %v2186, %v2329
      %2331 = vmatmul.bf16.gmra.mxu0 %v2076
      %v2332 = vpop.f32.mrf.mxu0
      %v2333 = vpop.f32.mrf.mxu0
      %2334 = vmatmul.bf16.gmra.mxu0 %v2078
      %v2335 = vpop.f32.mrf.mxu0
      %v2336 = vadd.f32 %v2192, %v2335
      %v2337 = vpop.f32.mrf.mxu0
      %v2338 = vadd.f32 %v2194, %v2337
      %2339 = vmatmul.bf16.gmra.mxu0 %v2080
      %v2340 = vpop.f32.mrf.mxu0
      %v2341 = vpop.f32.mrf.mxu0
      %2342 = vmatmul.bf16.gmra.mxu0 %v2082
      %v2343 = vpop.f32.mrf.mxu0
      %v2344 = vadd.f32 %v2200, %v2343
      %v2345 = vpop.f32.mrf.mxu0
      %v2346 = vadd.f32 %v2202, %v2345
      %2347 = vmatmul.bf16.gmra.mxu0 %v2084
      %v2348 = vpop.f32.mrf.mxu0
      %v2349 = vpop.f32.mrf.mxu0
      %2350 = vmatmul.bf16.gmra.mxu0 %v2086
      %v2351 = vpop.f32.mrf.mxu0
      %v2352 = vadd.f32 %v2208, %v2351
      %v2353 = vpop.f32.mrf.mxu0
      %v2354 = vadd.f32 %v2210, %v2353
      %2355 = vmatmul.bf16.gmra.mxu0 %v2088
      %v2356 = vpop.f32.mrf.mxu0
      %v2357 = vpop.f32.mrf.mxu0
      %2358 = vmatmul.bf16.gmra.mxu0 %v2090
      %v2359 = vpop.f32.mrf.mxu0
      %v2360 = vadd.f32 %v2216, %v2359
      %v2361 = vpop.f32.mrf.mxu0
      %v2362 = vadd.f32 %v2218, %v2361
      %2363 = vmatmul.bf16.gmra.mxu0 %v2092
      %v2364 = vpop.f32.mrf.mxu0
      %v2365 = vpop.f32.mrf.mxu0
      %2366 = vmatmul.bf16.gmra.mxu0 %v2094
      %v2367 = vpop.f32.mrf.mxu0
      %v2368 = vadd.f32 %v2224, %v2367
      %v2369 = vpop.f32.mrf.mxu0
      %v2370 = vadd.f32 %v2226, %v2369
      %2371 = vmatmul.bf16.gmra.mxu0 %v2096
      %v2372 = vpop.f32.mrf.mxu0
      %v2373 = vpop.f32.mrf.mxu0
      %2374 = vmatmul.bf16.gmra.mxu0 %v2098
      %v2375 = vpop.f32.mrf.mxu0
      %v2376 = vadd.f32 %v2232, %v2375
      %v2377 = vpop.f32.mrf.mxu0
      %v2378 = vadd.f32 %v2234, %v2377
      %2379 = vmatmul.bf16.gmra.mxu0 %v2100
      %v2380 = vpop.f32.mrf.mxu0
      %v2381 = vpop.f32.mrf.mxu0
      %2382 = vmatmul.bf16.gmra.mxu0 %v2102
      %v2383 = vpop.f32.mrf.mxu0
      %v2384 = vadd.f32 %v2240, %v2383
      %v2385 = vpop.f32.mrf.mxu0
      %v2386 = vadd.f32 %v2242, %v2385
      %2387 = vmatmul.bf16.gmra.mxu0 %v2104
      %v2388 = vpop.f32.mrf.mxu0
      %v2389 = vpop.f32.mrf.mxu0
      %2390 = vmatmul.bf16.gmra.mxu0 %v2106
      %v2391 = vpop.f32.mrf.mxu0
      %v2392 = vadd.f32 %v2248, %v2391
      %v2393 = vpop.f32.mrf.mxu0
      %v2394 = vadd.f32 %v2250, %v2393
      %2395 = vmatmul.bf16.gmra.mxu0 %v2108
      %v2396 = vpop.f32.mrf.mxu0
      %v2397 = vpop.f32.mrf.mxu0
      %2398 = vdwg.mxu0
      %s2399 = scalar_lea.vmem %s2, 8
      %v2400 = vld [vmem:[%s2399] sm:$0x7]
      %v2401 = vsel %vm2049, %v2043, 0
      %v2403 = vsel %vm2049, %v2045, 0
      %v2406 = vsel %vm2114, %v2400, 0
      %2408 = vmatpush.bf16.msra.mxu0 0
      %2409 = vmatpush.bf16.msra.mxu0 0
      %2410 = vmatpush.bf16.msra.mxu0 0
      %2411 = vmatpush.bf16.msra.mxu0 0
      %2412 = vmatpush.bf16.msra.mxu0 0
      %2413 = vmatpush.bf16.msra.mxu0 0
      %2414 = vmatpush.bf16.msra.mxu0 0
      %2415 = vmatpush.bf16.msra.mxu0 %v2406
      %2416 = vmatmul.bf16.gmra.mxu0 %v2054
      %v2417 = vpop.f32.mrf.mxu0
      %v2418 = vadd.f32 0.0, %v2417
      %v2419 = vpop.f32.mrf.mxu0
      %v2420 = vadd.f32 0.0, %v2419
      %2421 = vmatmul.bf16.gmra.mxu0 %v2056
      %v2422 = vpop.f32.mrf.mxu0
      %v2423 = vpop.f32.mrf.mxu0
      %2424 = vmatmul.bf16.gmra.mxu0 %v2058
      %v2425 = vpop.f32.mrf.mxu0
      %v2426 = vadd.f32 0.0, %v2425
      %v2427 = vpop.f32.mrf.mxu0
      %v2428 = vadd.f32 0.0, %v2427
      %2429 = vmatmul.bf16.gmra.mxu0 %v2060
      %v2430 = vpop.f32.mrf.mxu0
      %v2431 = vpop.f32.mrf.mxu0
      %2432 = vmatmul.bf16.gmra.mxu0 %v2062
      %v2433 = vpop.f32.mrf.mxu0
      %v2434 = vadd.f32 0.0, %v2433
      %v2435 = vpop.f32.mrf.mxu0
      %v2436 = vadd.f32 0.0, %v2435
      %2437 = vmatmul.bf16.gmra.mxu0 %v2064
      %v2438 = vpop.f32.mrf.mxu0
      %v2439 = vpop.f32.mrf.mxu0
      %2440 = vmatmul.bf16.gmra.mxu0 %v2066
      %v2441 = vpop.f32.mrf.mxu0
      %v2442 = vadd.f32 0.0, %v2441
      %v2443 = vpop.f32.mrf.mxu0
      %v2444 = vadd.f32 0.0, %v2443
      %2445 = vmatmul.bf16.gmra.mxu0 %v2068
      %v2446 = vpop.f32.mrf.mxu0
      %v2447 = vpop.f32.mrf.mxu0
      %2448 = vmatmul.bf16.gmra.mxu0 %v2070
      %v2449 = vpop.f32.mrf.mxu0
      %v2450 = vadd.f32 0.0, %v2449
      %v2451 = vpop.f32.mrf.mxu0
      %v2452 = vadd.f32 0.0, %v2451
      %2453 = vmatmul.bf16.gmra.mxu0 %v2072
      %v2454 = vpop.f32.mrf.mxu0
      %v2455 = vpop.f32.mrf.mxu0
      %2456 = vmatmul.bf16.gmra.mxu0 %v2074
      %v2457 = vpop.f32.mrf.mxu0
      %v2458 = vadd.f32 0.0, %v2457
      %v2459 = vpop.f32.mrf.mxu0
      %v2460 = vadd.f32 0.0, %v2459
      %2461 = vmatmul.bf16.gmra.mxu0 %v2076
      %v2462 = vpop.f32.mrf.mxu0
      %v2463 = vpop.f32.mrf.mxu0
      %2464 = vmatmul.bf16.gmra.mxu0 %v2078
      %v2465 = vpop.f32.mrf.mxu0
      %v2466 = vadd.f32 0.0, %v2465
      %v2467 = vpop.f32.mrf.mxu0
      %v2468 = vadd.f32 0.0, %v2467
      %2469 = vmatmul.bf16.gmra.mxu0 %v2080
      %v2470 = vpop.f32.mrf.mxu0
      %v2471 = vpop.f32.mrf.mxu0
      %2472 = vmatmul.bf16.gmra.mxu0 %v2082
      %v2473 = vpop.f32.mrf.mxu0
      %v2474 = vadd.f32 0.0, %v2473
      %v2475 = vpop.f32.mrf.mxu0
      %v2476 = vadd.f32 0.0, %v2475
      %2477 = vmatmul.bf16.gmra.mxu0 %v2084
      %v2478 = vpop.f32.mrf.mxu0
      %v2479 = vpop.f32.mrf.mxu0
      %2480 = vmatmul.bf16.gmra.mxu0 %v2086
      %v2481 = vpop.f32.mrf.mxu0
      %v2482 = vadd.f32 0.0, %v2481
      %v2483 = vpop.f32.mrf.mxu0
      %v2484 = vadd.f32 0.0, %v2483
      %2485 = vmatmul.bf16.gmra.mxu0 %v2088
      %v2486 = vpop.f32.mrf.mxu0
      %v2487 = vpop.f32.mrf.mxu0
      %2488 = vmatmul.bf16.gmra.mxu0 %v2090
      %v2489 = vpop.f32.mrf.mxu0
      %v2490 = vadd.f32 0.0, %v2489
      %v2491 = vpop.f32.mrf.mxu0
      %v2492 = vadd.f32 0.0, %v2491
      %2493 = vmatmul.bf16.gmra.mxu0 %v2092
      %v2494 = vpop.f32.mrf.mxu0
      %v2495 = vpop.f32.mrf.mxu0
      %2496 = vmatmul.bf16.gmra.mxu0 %v2094
      %v2497 = vpop.f32.mrf.mxu0
      %v2498 = vadd.f32 0.0, %v2497
      %v2499 = vpop.f32.mrf.mxu0
      %v2500 = vadd.f32 0.0, %v2499
      %2501 = vmatmul.bf16.gmra.mxu0 %v2096
      %v2502 = vpop.f32.mrf.mxu0
      %v2503 = vpop.f32.mrf.mxu0
      %2504 = vmatmul.bf16.gmra.mxu0 %v2098
      %v2505 = vpop.f32.mrf.mxu0
      %v2506 = vadd.f32 0.0, %v2505
      %v2507 = vpop.f32.mrf.mxu0
      %v2508 = vadd.f32 0.0, %v2507
      %2509 = vmatmul.bf16.gmra.mxu0 %v2100
      %v2510 = vpop.f32.mrf.mxu0
      %v2511 = vpop.f32.mrf.mxu0
      %2512 = vmatmul.bf16.gmra.mxu0 %v2102
      %v2513 = vpop.f32.mrf.mxu0
      %v2514 = vadd.f32 0.0, %v2513
      %v2515 = vpop.f32.mrf.mxu0
      %v2516 = vadd.f32 0.0, %v2515
      %2517 = vmatmul.bf16.gmra.mxu0 %v2104
      %v2518 = vpop.f32.mrf.mxu0
      %v2519 = vpop.f32.mrf.mxu0
      %2520 = vmatmul.bf16.gmra.mxu0 %v2106
      %v2521 = vpop.f32.mrf.mxu0
      %v2522 = vadd.f32 0.0, %v2521
      %v2523 = vpop.f32.mrf.mxu0
      %v2524 = vadd.f32 0.0, %v2523
      %2525 = vmatmul.bf16.gmra.mxu0 %v2108
      %v2526 = vpop.f32.mrf.mxu0
      %v2527 = vpop.f32.mrf.mxu0
      %2528 = vmatmul.bf16.gmra.mxu0 %v2110
      %v2529 = vpop.f32.mrf.mxu0
      %v2530 = vadd.f32 0.0, %v2529
      %v2531 = vpop.f32.mrf.mxu0
      %v2532 = vadd.f32 0.0, %v2531
      %2533 = vmatmul.bf16.gmra.mxu0 %v2112
      %v2534 = vpop.f32.mrf.mxu0
      %v2535 = vpop.f32.mrf.mxu0
      %2536 = vmatmul.bf16.gmra.mxu0 %v2401
      %v2537 = vpop.f32.mrf.mxu0
      %v2538 = vadd.f32 0.0, %v2537
      %v2539 = vpop.f32.mrf.mxu0
      %v2540 = vadd.f32 0.0, %v2539
      %2541 = vmatmul.bf16.gmra.mxu0 %v2403
      %v2542 = vpop.f32.mrf.mxu0
      %v2543 = vpop.f32.mrf.mxu0
      %2544 = vdwg.mxu0
      %v2545 = vadd.f32 %v2272, %v2418
      %v2546 = vadd.f32 %v2274, %v2420
      %v2547 = vadd.f32 %v2280, %v2426
      %v2548 = vadd.f32 %v2282, %v2428
      %v2549 = vadd.f32 %v2288, %v2434
      %v2550 = vadd.f32 %v2290, %v2436
      %v2551 = vadd.f32 %v2296, %v2442
      %v2552 = vadd.f32 %v2298, %v2444
      %v2553 = vadd.f32 %v2304, %v2450
      %v2554 = vadd.f32 %v2306, %v2452
      %v2555 = vadd.f32 %v2312, %v2458
      %v2556 = vadd.f32 %v2314, %v2460
      %v2557 = vadd.f32 %v2320, %v2466
      %v2558 = vadd.f32 %v2322, %v2468
      %v2559 = vadd.f32 %v2328, %v2474
      %v2560 = vadd.f32 %v2330, %v2476
      %v2561 = vadd.f32 %v2336, %v2482
      %v2562 = vadd.f32 %v2338, %v2484
      %v2563 = vadd.f32 %v2344, %v2490
      %v2564 = vadd.f32 %v2346, %v2492
      %v2565 = vadd.f32 %v2352, %v2498
      %v2566 = vadd.f32 %v2354, %v2500
      %v2567 = vadd.f32 %v2360, %v2506
      %v2568 = vadd.f32 %v2362, %v2508
      %v2569 = vadd.f32 %v2368, %v2514
      %v2570 = vadd.f32 %v2370, %v2516
      %v2571 = vadd.f32 %v2376, %v2522
      %v2572 = vadd.f32 %v2378, %v2524
      %v2573 = vadd.f32 %v2384, %v2530
      %v2574 = vadd.f32 %v2386, %v2532
      %v2575 = vadd.f32 %v2392, %v2538
      %v2576 = vadd.f32 %v2394, %v2540
      %v2577 = vld [vmem:[#allocation3 + $0x8] sm:$0xf]
      %v2578 = vld [vmem:[#allocation3 + $0xc] sm:$0xf]
      %v2579 = vld [vmem:[#allocation3 + $0x10] sm:$0xf]
      %v2580 = vld [vmem:[#allocation3 + $0x14] sm:$0xf]
      %v2581 = vld [vmem:[#allocation3 + $0x18] sm:$0xf]
      %v2582 = vld [vmem:[#allocation3 + $0x1c] sm:$0xf]
      %v2583 = vld [vmem:[#allocation3 + $0x20] sm:$0xf]
      %v2584 = vld [vmem:[#allocation3 + $0x24] sm:$0xf]
      %v2585 = vld [vmem:[#allocation3 + $0x28] sm:$0xf]
      %v2586 = vld [vmem:[#allocation3 + $0x2c] sm:$0xf]
      %v2587 = vld [vmem:[#allocation3 + $0x30] sm:$0xf]
      %v2588 = vld [vmem:[#allocation3 + $0x34] sm:$0xf]
      %v2589 = vld [vmem:[#allocation3 + $0x38] sm:$0xf]
      %v2590 = vld [vmem:[#allocation3 + $0x3c] sm:$0xf]
      %v2591 = vld [vmem:[#allocation3 + $0x40] sm:$0xf]
      %v2592 = vld [vmem:[#allocation3 + $0x44] sm:$0xf]
      %v2593 = vld [vmem:[#allocation3 + $0x48] sm:$0xf]
      %v2594 = vld [vmem:[#allocation3 + $0x4c] sm:$0xf]
      %v2595 = vld [vmem:[#allocation3 + $0x50] sm:$0xf]
      %v2596 = vld [vmem:[#allocation3 + $0x54] sm:$0xf]
      %v2597 = vld [vmem:[#allocation3 + $0x58] sm:$0xf]
      %v2618 = vunpack.c.l.b16 %v2577
      %v2619 = vunpack.c.l.b16 %v2578
      %v2620 = vunpack.c.l.b16 %v2579
      %v2621 = vunpack.c.l.b16 %v2580
      %v2622 = vunpack.c.l.b16 %v2581
      %v2623 = vunpack.c.l.b16 %v2582
      %v2624 = vunpack.c.l.b16 %v2583
      %v2625 = vunpack.c.l.b16 %v2584
      %v2626 = vunpack.c.l.b16 %v2585
      %v2627 = vunpack.c.l.b16 %v2586
      %v2628 = vunpack.c.l.b16 %v2587
      %v2629 = vunpack.c.l.b16 %v2588
      %v2630 = vunpack.c.l.b16 %v2589
      %v2631 = vunpack.c.l.b16 %v2590
      %v2632 = vunpack.c.l.b16 %v2591
      %v2633 = vunpack.c.l.b16 %v2592
      %v2634 = vunpack.c.l.b16 %v2593
      %v2635 = vunpack.c.l.b16 %v2594
      %v2636 = vunpack.c.l.b16 %v2595
      %v2637 = vunpack.c.l.b16 %v2596
      %v2638 = vpack.c.b16 %v2619, %v2618
      %v2639 = vpack.c.b16 %v2621, %v2620
      %v2640 = vpack.c.b16 %v2623, %v2622
      %v2641 = vpack.c.b16 %v2625, %v2624
      %v2642 = vpack.c.b16 %v2627, %v2626
      %v2643 = vpack.c.b16 %v2629, %v2628
      %v2644 = vpack.c.b16 %v2631, %v2630
      %v2645 = vpack.c.b16 %v2633, %v2632
      %v2646 = vpack.c.b16 %v2635, %v2634
      %v2647 = vpack.c.b16 %v2637, %v2636
      %v2649 = vunpack.c.l.b16 %v2597
      %v2650 = vpack.c.b16 %v2649, %v2649
      %v2652 = vshrl.u32 %v2638, 16
      %v2654 = vshll.u32 %v2638, 16
      %v2656 = vrot.slane %v2654, 1
      %v2657 = vor.u32 %v2652, %v2656
      %v2659 = vshll.u32 %v2639, 16
      %v2661 = vrot.slane %v2659, 1
      %v2662 = vsel %vm1389, %v2657, %v2661
      %v2663 = vshrl.u32 %v2639, 16
      %v2665 = vor.u32 %v2663, %v2661
      %v2667 = vshll.u32 %v2640, 16
      %v2669 = vrot.slane %v2667, 1
      %v2670 = vsel %vm1389, %v2665, %v2669
      %v2671 = vshrl.u32 %v2640, 16
      %v2673 = vor.u32 %v2671, %v2669
      %v2675 = vshll.u32 %v2641, 16
      %v2677 = vrot.slane %v2675, 1
      %v2678 = vsel %vm1389, %v2673, %v2677
      %v2679 = vshrl.u32 %v2641, 16
      %v2681 = vor.u32 %v2679, %v2677
      %v2683 = vshll.u32 %v2642, 16
      %v2685 = vrot.slane %v2683, 1
      %v2686 = vsel %vm1389, %v2681, %v2685
      %v2687 = vshrl.u32 %v2642, 16
      %v2689 = vor.u32 %v2687, %v2685
      %v2691 = vshll.u32 %v2643, 16
      %v2693 = vrot.slane %v2691, 1
      %v2694 = vsel %vm1389, %v2689, %v2693
      %v2695 = vshrl.u32 %v2643, 16
      %v2697 = vor.u32 %v2695, %v2693
      %v2699 = vshll.u32 %v2644, 16
      %v2701 = vrot.slane %v2699, 1
      %v2702 = vsel %vm1389, %v2697, %v2701
      %v2703 = vshrl.u32 %v2644, 16
      %v2705 = vor.u32 %v2703, %v2701
      %v2707 = vshll.u32 %v2645, 16
      %v2709 = vrot.slane %v2707, 1
      %v2710 = vsel %vm1389, %v2705, %v2709
      %v2711 = vshrl.u32 %v2645, 16
      %v2713 = vor.u32 %v2711, %v2709
      %v2715 = vshll.u32 %v2646, 16
      %v2717 = vrot.slane %v2715, 1
      %v2718 = vsel %vm1389, %v2713, %v2717
      %v2719 = vshrl.u32 %v2646, 16
      %v2721 = vor.u32 %v2719, %v2717
      %v2723 = vshll.u32 %v2647, 16
      %v2725 = vrot.slane %v2723, 1
      %v2726 = vsel %vm1389, %v2721, %v2725
      %v2727 = vshrl.u32 %v2647, 16
      %v2729 = vor.u32 %v2727, %v2725
      %v2731 = vshll.u32 %v2650, 16
      %v2733 = vrot.slane %v2731, 1
      %v2734 = vsel %vm1389, %v2729, %v2733
      %2735 = vrot.lane.b32.xlu0 %v2662, 2
      %v2736 = vpop.permute.xlu0 %2735
      %2737 = vrot.lane.b32.xlu0 %v2670, 2
      %v2738 = vpop.permute.xlu0 %2737
      %2739 = vrot.lane.b32.xlu0 %v2678, 2
      %v2740 = vpop.permute.xlu0 %2739
      %2741 = vrot.lane.b32.xlu0 %v2686, 2
      %v2742 = vpop.permute.xlu0 %2741
      %2743 = vrot.lane.b32.xlu0 %v2694, 2
      %v2744 = vpop.permute.xlu0 %2743
      %2745 = vrot.lane.b32.xlu0 %v2702, 2
      %v2746 = vpop.permute.xlu0 %2745
      %2747 = vrot.lane.b32.xlu0 %v2710, 2
      %v2748 = vpop.permute.xlu0 %2747
      %2749 = vrot.lane.b32.xlu0 %v2718, 2
      %v2750 = vpop.permute.xlu0 %2749
      %2751 = vrot.lane.b32.xlu0 %v2726, 2
      %v2752 = vpop.permute.xlu0 %2751
      %2753 = vrot.lane.b32.xlu0 %v2734, 2
      %v2754 = vpop.permute.xlu0 %2753
      %v2755 = vrot.slane %v2638, 1
      %v2756 = vrot.slane %v2639, 1
      %v2757 = vsel %vm1754, %v2755, %v2756
      %v2758 = vrot.slane %v2640, 1
      %v2759 = vsel %vm1754, %v2756, %v2758
      %v2760 = vrot.slane %v2641, 1
      %v2761 = vsel %vm1754, %v2758, %v2760
      %v2762 = vrot.slane %v2642, 1
      %v2763 = vsel %vm1754, %v2760, %v2762
      %v2764 = vrot.slane %v2643, 1
      %v2765 = vsel %vm1754, %v2762, %v2764
      %v2766 = vrot.slane %v2644, 1
      %v2767 = vsel %vm1754, %v2764, %v2766
      %v2768 = vrot.slane %v2645, 1
      %v2769 = vsel %vm1754, %v2766, %v2768
      %v2770 = vrot.slane %v2646, 1
      %v2771 = vsel %vm1754, %v2768, %v2770
      %v2772 = vrot.slane %v2647, 1
      %v2773 = vsel %vm1754, %v2770, %v2772
      %v2774 = vrot.slane %v2650, 1
      %v2775 = vsel %vm1754, %v2772, %v2774
      %2776 = vrot.lane.b32.xlu0 %v2757, 4
      %v2777 = vpop.permute.xlu0 %2776
      %2778 = vrot.lane.b32.xlu0 %v2759, 4
      %v2779 = vpop.permute.xlu0 %2778
      %2780 = vrot.lane.b32.xlu0 %v2761, 4
      %v2781 = vpop.permute.xlu0 %2780
      %2782 = vrot.lane.b32.xlu0 %v2763, 4
      %v2783 = vpop.permute.xlu0 %2782
      %2784 = vrot.lane.b32.xlu0 %v2765, 4
      %v2785 = vpop.permute.xlu0 %2784
      %2786 = vrot.lane.b32.xlu0 %v2767, 4
      %v2787 = vpop.permute.xlu0 %2786
      %2788 = vrot.lane.b32.xlu0 %v2769, 4
      %v2789 = vpop.permute.xlu0 %2788
      %2790 = vrot.lane.b32.xlu0 %v2771, 4
      %v2791 = vpop.permute.xlu0 %2790
      %2792 = vrot.lane.b32.xlu0 %v2773, 4
      %v2793 = vpop.permute.xlu0 %2792
      %2794 = vrot.lane.b32.xlu0 %v2775, 4
      %v2795 = vpop.permute.xlu0 %2794
      %v2797 = vsel %vm1900, %v2638, %v2736
      %v2799 = vsel %vm1900, %v2639, %v2738
      %v2801 = vsel %vm1900, %v2640, %v2740
      %v2803 = vsel %vm1900, %v2641, %v2742
      %v2805 = vsel %vm1900, %v2642, %v2744
      %v2807 = vsel %vm1900, %v2643, %v2746
      %v2809 = vsel %vm1900, %v2644, %v2748
      %v2811 = vsel %vm1900, %v2645, %v2750
      %v2813 = vsel %vm1900, %v2646, %v2752
      %v2815 = vsel %vm1900, %v2647, %v2754
      %v2817 = vsel %vm1973, %v2797, %v2777
      %v2819 = vsel %vm1973, %v2799, %v2779
      %v2821 = vsel %vm1973, %v2801, %v2781
      %v2823 = vsel %vm1973, %v2803, %v2783
      %v2825 = vsel %vm1973, %v2805, %v2785
      %v2827 = vsel %vm1973, %v2807, %v2787
      %v2829 = vsel %vm1973, %v2809, %v2789
      %v2831 = vsel %vm1973, %v2811, %v2791
      %v2833 = vsel %vm1973, %v2813, %v2793
      %v2835 = vsel %vm1973, %v2815, %v2795
      %v2836 = vld [vmem:[%s3] sm:$0x7]
      %s2837 = scalar_lea.vmem %s3, 4
      %v2838 = vld [vmem:[%s2837] sm:$0x7]
      %v2839 = vsel %vm2049, %v2819, 0
      %v2841 = vsel %vm2049, %v2821, 0
      %v2843 = vsel %vm2049, %v2823, 0
      %v2845 = vsel %vm2049, %v2825, 0
      %v2847 = vsel %vm2049, %v2827, 0
      %v2849 = vsel %vm2049, %v2829, 0
      %v2851 = vsel %vm2049, %v2831, 0
      %v2853 = vsel %vm2049, %v2833, 0
      %v2856 = vsel %vm2114, %v2838, 0
      %2858 = vmatpush.bf16.msra.mxu0 0
      %2859 = vmatpush.bf16.msra.mxu0 0
      %2860 = vmatpush.bf16.msra.mxu0 0
      %2861 = vmatpush.bf16.msra.mxu0 0
      %2862 = vmatpush.bf16.msra.mxu0 0
      %2863 = vmatpush.bf16.msra.mxu0 0
      %2864 = vmatpush.bf16.msra.mxu0 0
      %2865 = vmatpush.bf16.msra.mxu0 %v2856
      %2866 = vmatmul.bf16.gmra.mxu0 %v2839
      %v2867 = vpop.f32.mrf.mxu0
      %v2868 = vadd.f32 0.0, %v2867
      %v2869 = vpop.f32.mrf.mxu0
      %2870 = vmatmul.bf16.gmra.mxu0 %v2841
      %v2871 = vpop.f32.mrf.mxu0
      %v2872 = vadd.f32 0.0, %v2871
      %v2873 = vpop.f32.mrf.mxu0
      %2874 = vmatmul.bf16.gmra.mxu0 %v2843
      %v2875 = vpop.f32.mrf.mxu0
      %v2876 = vadd.f32 0.0, %v2875
      %v2877 = vpop.f32.mrf.mxu0
      %2878 = vmatmul.bf16.gmra.mxu0 %v2845
      %v2879 = vpop.f32.mrf.mxu0
      %v2880 = vadd.f32 0.0, %v2879
      %v2881 = vpop.f32.mrf.mxu0
      %2882 = vmatmul.bf16.gmra.mxu0 %v2847
      %v2883 = vpop.f32.mrf.mxu0
      %v2884 = vadd.f32 0.0, %v2883
      %v2885 = vpop.f32.mrf.mxu0
      %2886 = vmatmul.bf16.gmra.mxu0 %v2849
      %v2887 = vpop.f32.mrf.mxu0
      %v2888 = vadd.f32 0.0, %v2887
      %v2889 = vpop.f32.mrf.mxu0
      %2890 = vmatmul.bf16.gmra.mxu0 %v2851
      %v2891 = vpop.f32.mrf.mxu0
      %v2892 = vadd.f32 0.0, %v2891
      %v2893 = vpop.f32.mrf.mxu0
      %2894 = vmatmul.bf16.gmra.mxu0 %v2853
      %v2895 = vpop.f32.mrf.mxu0
      %v2896 = vadd.f32 0.0, %v2895
      %v2897 = vpop.f32.mrf.mxu0
      %2898 = vdwg.mxu0
      %v2899 = vsel %vm2049, %v2817, 0
      %v2902 = vsel %vm2114, %v2836, 0
      %2904 = vmatpush.bf16.msra.mxu0 0
      %2905 = vmatpush.bf16.msra.mxu0 0
      %2906 = vmatpush.bf16.msra.mxu0 0
      %2907 = vmatpush.bf16.msra.mxu0 0
      %2908 = vmatpush.bf16.msra.mxu0 0
      %2909 = vmatpush.bf16.msra.mxu0 0
      %2910 = vmatpush.bf16.msra.mxu0 0
      %2911 = vmatpush.bf16.msra.mxu0 %v2902
      %2912 = vmatmul.bf16.gmra.mxu0 %v2899
      %v2913 = vpop.f32.mrf.mxu0
      %v2914 = vadd.f32 %v2868, %v2913
      %v2915 = vpop.f32.mrf.mxu0
      %2916 = vmatmul.bf16.gmra.mxu0 %v2839
      %v2917 = vpop.f32.mrf.mxu0
      %v2918 = vadd.f32 %v2872, %v2917
      %v2919 = vpop.f32.mrf.mxu0
      %2920 = vmatmul.bf16.gmra.mxu0 %v2841
      %v2921 = vpop.f32.mrf.mxu0
      %v2922 = vadd.f32 %v2876, %v2921
      %v2923 = vpop.f32.mrf.mxu0
      %2924 = vmatmul.bf16.gmra.mxu0 %v2843
      %v2925 = vpop.f32.mrf.mxu0
      %v2926 = vadd.f32 %v2880, %v2925
      %v2927 = vpop.f32.mrf.mxu0
      %2928 = vmatmul.bf16.gmra.mxu0 %v2845
      %v2929 = vpop.f32.mrf.mxu0
      %v2930 = vadd.f32 %v2884, %v2929
      %v2931 = vpop.f32.mrf.mxu0
      %2932 = vmatmul.bf16.gmra.mxu0 %v2847
      %v2933 = vpop.f32.mrf.mxu0
      %v2934 = vadd.f32 %v2888, %v2933
      %v2935 = vpop.f32.mrf.mxu0
      %2936 = vmatmul.bf16.gmra.mxu0 %v2849
      %v2937 = vpop.f32.mrf.mxu0
      %v2938 = vadd.f32 %v2892, %v2937
      %v2939 = vpop.f32.mrf.mxu0
      %2940 = vmatmul.bf16.gmra.mxu0 %v2851
      %v2941 = vpop.f32.mrf.mxu0
      %v2942 = vadd.f32 %v2896, %v2941
      %v2943 = vpop.f32.mrf.mxu0
      %2944 = vdwg.mxu0
      %s2945 = scalar_lea.vmem %s3, 8
      %v2946 = vld [vmem:[%s2945] sm:$0x7]
      %v2947 = vsel %vm2049, %v2835, 0
      %v2950 = vsel %vm2114, %v2946, 0
      %2952 = vmatpush.bf16.msra.mxu0 0
      %2953 = vmatpush.bf16.msra.mxu0 0
      %2954 = vmatpush.bf16.msra.mxu0 0
      %2955 = vmatpush.bf16.msra.mxu0 0
      %2956 = vmatpush.bf16.msra.mxu0 0
      %2957 = vmatpush.bf16.msra.mxu0 0
      %2958 = vmatpush.bf16.msra.mxu0 0
      %2959 = vmatpush.bf16.msra.mxu0 %v2950
      %2960 = vmatmul.bf16.gmra.mxu0 %v2841
      %v2961 = vpop.f32.mrf.mxu0
      %v2962 = vadd.f32 0.0, %v2961
      %v2963 = vpop.f32.mrf.mxu0
      %2964 = vmatmul.bf16.gmra.mxu0 %v2843
      %v2965 = vpop.f32.mrf.mxu0
      %v2966 = vadd.f32 0.0, %v2965
      %v2967 = vpop.f32.mrf.mxu0
      %2968 = vmatmul.bf16.gmra.mxu0 %v2845
      %v2969 = vpop.f32.mrf.mxu0
      %v2970 = vadd.f32 0.0, %v2969
      %v2971 = vpop.f32.mrf.mxu0
      %2972 = vmatmul.bf16.gmra.mxu0 %v2847
      %v2973 = vpop.f32.mrf.mxu0
      %v2974 = vadd.f32 0.0, %v2973
      %v2975 = vpop.f32.mrf.mxu0
      %2976 = vmatmul.bf16.gmra.mxu0 %v2849
      %v2977 = vpop.f32.mrf.mxu0
      %v2978 = vadd.f32 0.0, %v2977
      %v2979 = vpop.f32.mrf.mxu0
      %2980 = vmatmul.bf16.gmra.mxu0 %v2851
      %v2981 = vpop.f32.mrf.mxu0
      %v2982 = vadd.f32 0.0, %v2981
      %v2983 = vpop.f32.mrf.mxu0
      %2984 = vmatmul.bf16.gmra.mxu0 %v2853
      %v2985 = vpop.f32.mrf.mxu0
      %v2986 = vadd.f32 0.0, %v2985
      %v2987 = vpop.f32.mrf.mxu0
      %2988 = vmatmul.bf16.gmra.mxu0 %v2947
      %v2989 = vpop.f32.mrf.mxu0
      %v2990 = vadd.f32 0.0, %v2989
      %v2991 = vpop.f32.mrf.mxu0
      %2992 = vdwg.mxu0
      %v2993 = vadd.f32 %v2914, %v2962
      %v2994 = vadd.f32 %v2918, %v2966
      %v2995 = vadd.f32 %v2922, %v2970
      %v2996 = vadd.f32 %v2926, %v2974
      %v2997 = vadd.f32 %v2930, %v2978
      %v2998 = vadd.f32 %v2934, %v2982
      %v2999 = vadd.f32 %v2938, %v2986
      %v3000 = vadd.f32 %v2942, %v2990
      %v3001 = vunpack.c.l.bf16 %v284
      %v3002 = vunpack.c.l.bf16 %v285
      %v3003 = vunpack.c.l.bf16 %v286
      %v3004 = vunpack.c.l.bf16 %v287
      %v3005 = vunpack.c.l.bf16 %v288
      %v3006 = vunpack.c.l.bf16 %v289
      %v3007 = vunpack.c.l.bf16 %v290
      %v3008 = vunpack.c.l.bf16 %v291
      %v3009 = vunpack.c.l.bf16 %v292
      %v3010 = vunpack.c.l.bf16 %v293
      %v3011 = vunpack.c.l.bf16 %v294
      %v3012 = vunpack.c.l.bf16 %v295
      %v3013 = vunpack.c.l.bf16 %v296
      %v3014 = vunpack.c.l.bf16 %v297
      %v3015 = vunpack.c.l.bf16 %v298
      %v3016 = vunpack.c.l.bf16 %v299
      %v3017 = vunpack.c.l.bf16 %v300
      %v3018 = vunpack.c.l.bf16 %v301
      %v3019 = vunpack.c.l.bf16 %v302
      %v3020 = vunpack.c.l.bf16 %v303
      %v3021 = vunpack.c.l.bf16 %v304
      %v3022 = vunpack.c.l.bf16 %v305
      %v3023 = vunpack.c.l.bf16 %v306
      %v3024 = vunpack.c.l.bf16 %v307
      %v3025 = vunpack.c.l.bf16 %v308
      %v3026 = vunpack.c.l.bf16 %v309
      %v3027 = vunpack.c.l.bf16 %v310
      %v3028 = vunpack.c.l.bf16 %v311
      %v3029 = vunpack.c.l.bf16 %v312
      %v3030 = vunpack.c.l.bf16 %v313
      %v3031 = vunpack.c.l.bf16 %v314
      %v3032 = vunpack.c.l.bf16 %v315
      %v3065 = vrot.slane %v3001, 2
      %v3066 = vrot.slane %v3001, 4
      %v3067 = vrot.slane %v3001, 6
      %v3068 = vrot.slane %v3002, 2
      %v3069 = vrot.slane %v3002, 4
      %v3070 = vrot.slane %v3002, 6
      %v3071 = vrot.slane %v3003, 2
      %v3072 = vrot.slane %v3003, 4
      %v3073 = vrot.slane %v3003, 6
      %v3074 = vrot.slane %v3004, 2
      %v3075 = vrot.slane %v3004, 4
      %v3076 = vrot.slane %v3004, 6
      %v3077 = vrot.slane %v3005, 2
      %v3078 = vrot.slane %v3005, 4
      %v3079 = vrot.slane %v3005, 6
      %v3080 = vrot.slane %v3006, 2
      %v3081 = vrot.slane %v3006, 4
      %v3082 = vrot.slane %v3006, 6
      %v3083 = vrot.slane %v3007, 2
      %v3084 = vrot.slane %v3007, 4
      %v3085 = vrot.slane %v3007, 6
      %v3086 = vrot.slane %v3008, 2
      %v3087 = vrot.slane %v3008, 4
      %v3088 = vrot.slane %v3008, 6
      %v3089 = vrot.slane %v3009, 2
      %v3090 = vrot.slane %v3009, 4
      %v3091 = vrot.slane %v3009, 6
      %v3092 = vrot.slane %v3010, 2
      %v3093 = vrot.slane %v3010, 4
      %v3094 = vrot.slane %v3010, 6
      %v3095 = vrot.slane %v3011, 2
      %v3096 = vrot.slane %v3011, 4
      %v3097 = vrot.slane %v3011, 6
      %v3098 = vrot.slane %v3012, 2
      %v3099 = vrot.slane %v3012, 4
      %v3100 = vrot.slane %v3012, 6
      %v3101 = vrot.slane %v3013, 2
      %v3102 = vrot.slane %v3013, 4
      %v3103 = vrot.slane %v3013, 6
      %v3104 = vrot.slane %v3014, 2
      %v3105 = vrot.slane %v3014, 4
      %v3106 = vrot.slane %v3014, 6
      %v3107 = vrot.slane %v3015, 2
      %v3108 = vrot.slane %v3015, 4
      %v3109 = vrot.slane %v3015, 6
      %v3110 = vrot.slane %v3016, 2
      %v3111 = vrot.slane %v3016, 4
      %v3112 = vrot.slane %v3016, 6
      %v3113 = vrot.slane %v3017, 2
      %v3114 = vrot.slane %v3017, 4
      %v3115 = vrot.slane %v3017, 6
      %v3116 = vrot.slane %v3018, 2
      %v3117 = vrot.slane %v3018, 4
      %v3118 = vrot.slane %v3018, 6
      %v3119 = vrot.slane %v3019, 2
      %v3120 = vrot.slane %v3019, 4
      %v3121 = vrot.slane %v3019, 6
      %v3122 = vrot.slane %v3020, 2
      %v3123 = vrot.slane %v3020, 4
      %v3124 = vrot.slane %v3020, 6
      %v3125 = vrot.slane %v3021, 2
      %v3126 = vrot.slane %v3021, 4
      %v3127 = vrot.slane %v3021, 6
      %v3128 = vrot.slane %v3022, 2
      %v3129 = vrot.slane %v3022, 4
      %v3130 = vrot.slane %v3022, 6
      %v3131 = vrot.slane %v3023, 2
      %v3132 = vrot.slane %v3023, 4
      %v3133 = vrot.slane %v3023, 6
      %v3134 = vrot.slane %v3024, 2
      %v3135 = vrot.slane %v3024, 4
      %v3136 = vrot.slane %v3024, 6
      %v3137 = vrot.slane %v3025, 2
      %v3138 = vrot.slane %v3025, 4
      %v3139 = vrot.slane %v3025, 6
      %v3140 = vrot.slane %v3026, 2
      %v3141 = vrot.slane %v3026, 4
      %v3142 = vrot.slane %v3026, 6
      %v3143 = vrot.slane %v3027, 2
      %v3144 = vrot.slane %v3027, 4
      %v3145 = vrot.slane %v3027, 6
      %v3146 = vrot.slane %v3028, 2
      %v3147 = vrot.slane %v3028, 4
      %v3148 = vrot.slane %v3028, 6
      %v3149 = vrot.slane %v3029, 2
      %v3150 = vrot.slane %v3029, 4
      %v3151 = vrot.slane %v3029, 6
      %v3152 = vrot.slane %v3030, 2
      %v3153 = vrot.slane %v3030, 4
      %v3154 = vrot.slane %v3030, 6
      %v3155 = vrot.slane %v3031, 2
      %v3156 = vrot.slane %v3031, 4
      %v3157 = vrot.slane %v3031, 6
      %v3158 = vrot.slane %v3032, 2
      %v3159 = vrot.slane %v3032, 4
      %v3160 = vrot.slane %v3032, 6
      %v3257 = vrot.slane %v3001, 7
      %v3258 = vrot.slane %v3257, 2
      %v3259 = vrot.slane %v3065, 7
      %v3260 = vrot.slane %v3259, 2
      %v3261 = vrot.slane %v3066, 7
      %v3262 = vrot.slane %v3261, 2
      %v3263 = vrot.slane %v3067, 7
      %v3264 = vrot.slane %v3263, 2
      %v3265 = vrot.slane %v3002, 7
      %v3266 = vrot.slane %v3265, 2
      %v3267 = vrot.slane %v3068, 7
      %v3268 = vrot.slane %v3267, 2
      %v3269 = vrot.slane %v3069, 7
      %v3270 = vrot.slane %v3269, 2
      %v3271 = vrot.slane %v3070, 7
      %v3272 = vrot.slane %v3271, 2
      %v3273 = vrot.slane %v3003, 7
      %v3274 = vrot.slane %v3273, 2
      %v3275 = vrot.slane %v3071, 7
      %v3276 = vrot.slane %v3275, 2
      %v3277 = vrot.slane %v3072, 7
      %v3278 = vrot.slane %v3277, 2
      %v3279 = vrot.slane %v3073, 7
      %v3280 = vrot.slane %v3279, 2
      %v3281 = vrot.slane %v3004, 7
      %v3282 = vrot.slane %v3281, 2
      %v3283 = vrot.slane %v3074, 7
      %v3284 = vrot.slane %v3283, 2
      %v3285 = vrot.slane %v3075, 7
      %v3286 = vrot.slane %v3285, 2
      %v3287 = vrot.slane %v3076, 7
      %v3288 = vrot.slane %v3287, 2
      %v3289 = vrot.slane %v3005, 7
      %v3290 = vrot.slane %v3289, 2
      %v3291 = vrot.slane %v3077, 7
      %v3292 = vrot.slane %v3291, 2
      %v3293 = vrot.slane %v3078, 7
      %v3294 = vrot.slane %v3293, 2
      %v3295 = vrot.slane %v3079, 7
      %v3296 = vrot.slane %v3295, 2
      %v3297 = vrot.slane %v3006, 7
      %v3298 = vrot.slane %v3297, 2
      %v3299 = vrot.slane %v3080, 7
      %v3300 = vrot.slane %v3299, 2
      %v3301 = vrot.slane %v3081, 7
      %v3302 = vrot.slane %v3301, 2
      %v3303 = vrot.slane %v3082, 7
      %v3304 = vrot.slane %v3303, 2
      %v3305 = vrot.slane %v3007, 7
      %v3306 = vrot.slane %v3305, 2
      %v3307 = vrot.slane %v3083, 7
      %v3308 = vrot.slane %v3307, 2
      %v3309 = vrot.slane %v3084, 7
      %v3310 = vrot.slane %v3309, 2
      %v3311 = vrot.slane %v3085, 7
      %v3312 = vrot.slane %v3311, 2
      %v3313 = vrot.slane %v3008, 7
      %v3314 = vrot.slane %v3313, 2
      %v3315 = vrot.slane %v3086, 7
      %v3316 = vrot.slane %v3315, 2
      %v3317 = vrot.slane %v3087, 7
      %v3318 = vrot.slane %v3317, 2
      %v3319 = vrot.slane %v3088, 7
      %v3320 = vrot.slane %v3319, 2
      %v3321 = vrot.slane %v3009, 7
      %v3322 = vrot.slane %v3321, 2
      %v3323 = vrot.slane %v3089, 7
      %v3324 = vrot.slane %v3323, 2
      %v3325 = vrot.slane %v3090, 7
      %v3326 = vrot.slane %v3325, 2
      %v3327 = vrot.slane %v3091, 7
      %v3328 = vrot.slane %v3327, 2
      %v3329 = vrot.slane %v3010, 7
      %v3330 = vrot.slane %v3329, 2
      %v3331 = vrot.slane %v3092, 7
      %v3332 = vrot.slane %v3331, 2
      %v3333 = vrot.slane %v3093, 7
      %v3334 = vrot.slane %v3333, 2
      %v3335 = vrot.slane %v3094, 7
      %v3336 = vrot.slane %v3335, 2
      %v3337 = vrot.slane %v3011, 7
      %v3338 = vrot.slane %v3337, 2
      %v3339 = vrot.slane %v3095, 7
      %v3340 = vrot.slane %v3339, 2
      %v3341 = vrot.slane %v3096, 7
      %v3342 = vrot.slane %v3341, 2
      %v3343 = vrot.slane %v3097, 7
      %v3344 = vrot.slane %v3343, 2
      %v3345 = vrot.slane %v3012, 7
      %v3346 = vrot.slane %v3345, 2
      %v3347 = vrot.slane %v3098, 7
      %v3348 = vrot.slane %v3347, 2
      %v3349 = vrot.slane %v3099, 7
      %v3350 = vrot.slane %v3349, 2
      %v3351 = vrot.slane %v3100, 7
      %v3352 = vrot.slane %v3351, 2
      %v3353 = vrot.slane %v3013, 7
      %v3354 = vrot.slane %v3353, 2
      %v3355 = vrot.slane %v3101, 7
      %v3356 = vrot.slane %v3355, 2
      %v3357 = vrot.slane %v3102, 7
      %v3358 = vrot.slane %v3357, 2
      %v3359 = vrot.slane %v3103, 7
      %v3360 = vrot.slane %v3359, 2
      %v3361 = vrot.slane %v3014, 7
      %v3362 = vrot.slane %v3361, 2
      %v3363 = vrot.slane %v3104, 7
      %v3364 = vrot.slane %v3363, 2
      %v3365 = vrot.slane %v3105, 7
      %v3366 = vrot.slane %v3365, 2
      %v3367 = vrot.slane %v3106, 7
      %v3368 = vrot.slane %v3367, 2
      %v3369 = vrot.slane %v3015, 7
      %v3370 = vrot.slane %v3369, 2
      %v3371 = vrot.slane %v3107, 7
      %v3372 = vrot.slane %v3371, 2
      %v3373 = vrot.slane %v3108, 7
      %v3374 = vrot.slane %v3373, 2
      %v3375 = vrot.slane %v3109, 7
      %v3376 = vrot.slane %v3375, 2
      %v3377 = vrot.slane %v3016, 7
      %v3378 = vrot.slane %v3377, 2
      %v3379 = vrot.slane %v3110, 7
      %v3380 = vrot.slane %v3379, 2
      %v3381 = vrot.slane %v3111, 7
      %v3382 = vrot.slane %v3381, 2
      %v3383 = vrot.slane %v3112, 7
      %v3384 = vrot.slane %v3383, 2
      %v3385 = vrot.slane %v3017, 7
      %v3386 = vrot.slane %v3385, 2
      %v3387 = vrot.slane %v3113, 7
      %v3388 = vrot.slane %v3387, 2
      %v3389 = vrot.slane %v3114, 7
      %v3390 = vrot.slane %v3389, 2
      %v3391 = vrot.slane %v3115, 7
      %v3392 = vrot.slane %v3391, 2
      %v3393 = vrot.slane %v3018, 7
      %v3394 = vrot.slane %v3393, 2
      %v3395 = vrot.slane %v3116, 7
      %v3396 = vrot.slane %v3395, 2
      %v3397 = vrot.slane %v3117, 7
      %v3398 = vrot.slane %v3397, 2
      %v3399 = vrot.slane %v3118, 7
      %v3400 = vrot.slane %v3399, 2
      %v3401 = vrot.slane %v3019, 7
      %v3402 = vrot.slane %v3401, 2
      %v3403 = vrot.slane %v3119, 7
      %v3404 = vrot.slane %v3403, 2
      %v3405 = vrot.slane %v3120, 7
      %v3406 = vrot.slane %v3405, 2
      %v3407 = vrot.slane %v3121, 7
      %v3408 = vrot.slane %v3407, 2
      %v3409 = vrot.slane %v3020, 7
      %v3410 = vrot.slane %v3409, 2
      %v3411 = vrot.slane %v3122, 7
      %v3412 = vrot.slane %v3411, 2
      %v3413 = vrot.slane %v3123, 7
      %v3414 = vrot.slane %v3413, 2
      %v3415 = vrot.slane %v3124, 7
      %v3416 = vrot.slane %v3415, 2
      %v3417 = vrot.slane %v3021, 7
      %v3418 = vrot.slane %v3417, 2
      %v3419 = vrot.slane %v3125, 7
      %v3420 = vrot.slane %v3419, 2
      %v3421 = vrot.slane %v3126, 7
      %v3422 = vrot.slane %v3421, 2
      %v3423 = vrot.slane %v3127, 7
      %v3424 = vrot.slane %v3423, 2
      %v3425 = vrot.slane %v3022, 7
      %v3426 = vrot.slane %v3425, 2
      %v3427 = vrot.slane %v3128, 7
      %v3428 = vrot.slane %v3427, 2
      %v3429 = vrot.slane %v3129, 7
      %v3430 = vrot.slane %v3429, 2
      %v3431 = vrot.slane %v3130, 7
      %v3432 = vrot.slane %v3431, 2
      %v3433 = vrot.slane %v3023, 7
      %v3434 = vrot.slane %v3433, 2
      %v3435 = vrot.slane %v3131, 7
      %v3436 = vrot.slane %v3435, 2
      %v3437 = vrot.slane %v3132, 7
      %v3438 = vrot.slane %v3437, 2
      %v3439 = vrot.slane %v3133, 7
      %v3440 = vrot.slane %v3439, 2
      %v3441 = vrot.slane %v3024, 7
      %v3442 = vrot.slane %v3441, 2
      %v3443 = vrot.slane %v3134, 7
      %v3444 = vrot.slane %v3443, 2
      %v3445 = vrot.slane %v3135, 7
      %v3446 = vrot.slane %v3445, 2
      %v3447 = vrot.slane %v3136, 7
      %v3448 = vrot.slane %v3447, 2
      %v3449 = vrot.slane %v3025, 7
      %v3450 = vrot.slane %v3449, 2
      %v3451 = vrot.slane %v3137, 7
      %v3452 = vrot.slane %v3451, 2
      %v3453 = vrot.slane %v3138, 7
      %v3454 = vrot.slane %v3453, 2
      %v3455 = vrot.slane %v3139, 7
      %v3456 = vrot.slane %v3455, 2
      %v3457 = vrot.slane %v3026, 7
      %v3458 = vrot.slane %v3457, 2
      %v3459 = vrot.slane %v3140, 7
      %v3460 = vrot.slane %v3459, 2
      %v3461 = vrot.slane %v3141, 7
      %v3462 = vrot.slane %v3461, 2
      %v3463 = vrot.slane %v3142, 7
      %v3464 = vrot.slane %v3463, 2
      %v3465 = vrot.slane %v3027, 7
      %v3466 = vrot.slane %v3465, 2
      %v3467 = vrot.slane %v3143, 7
      %v3468 = vrot.slane %v3467, 2
      %v3469 = vrot.slane %v3144, 7
      %v3470 = vrot.slane %v3469, 2
      %v3471 = vrot.slane %v3145, 7
      %v3472 = vrot.slane %v3471, 2
      %v3473 = vrot.slane %v3028, 7
      %v3474 = vrot.slane %v3473, 2
      %v3475 = vrot.slane %v3146, 7
      %v3476 = vrot.slane %v3475, 2
      %v3477 = vrot.slane %v3147, 7
      %v3478 = vrot.slane %v3477, 2
      %v3479 = vrot.slane %v3148, 7
      %v3480 = vrot.slane %v3479, 2
      %v3481 = vrot.slane %v3029, 7
      %v3482 = vrot.slane %v3481, 2
      %v3483 = vrot.slane %v3149, 7
      %v3484 = vrot.slane %v3483, 2
      %v3485 = vrot.slane %v3150, 7
      %v3486 = vrot.slane %v3485, 2
      %v3487 = vrot.slane %v3151, 7
      %v3488 = vrot.slane %v3487, 2
      %v3489 = vrot.slane %v3030, 7
      %v3490 = vrot.slane %v3489, 2
      %v3491 = vrot.slane %v3152, 7
      %v3492 = vrot.slane %v3491, 2
      %v3493 = vrot.slane %v3153, 7
      %v3494 = vrot.slane %v3493, 2
      %v3495 = vrot.slane %v3154, 7
      %v3496 = vrot.slane %v3495, 2
      %v3497 = vrot.slane %v3031, 7
      %v3498 = vrot.slane %v3497, 2
      %v3499 = vrot.slane %v3155, 7
      %v3500 = vrot.slane %v3499, 2
      %v3501 = vrot.slane %v3156, 7
      %v3502 = vrot.slane %v3501, 2
      %v3503 = vrot.slane %v3157, 7
      %v3504 = vrot.slane %v3503, 2
      %v3505 = vrot.slane %v3032, 7
      %v3506 = vrot.slane %v3505, 2
      %v3507 = vrot.slane %v3158, 7
      %v3508 = vrot.slane %v3507, 2
      %v3509 = vrot.slane %v3159, 7
      %v3510 = vrot.slane %v3509, 2
      %v3511 = vrot.slane %v3160, 7
      %v3512 = vrot.slane %v3511, 2
      %v3641 = vadd.f32 %v3001, %v3258
      %v3642 = vadd.f32 %v3065, %v3260
      %v3643 = vadd.f32 %v3066, %v3262
      %v3644 = vadd.f32 %v3067, %v3264
      %v3645 = vadd.f32 %v3002, %v3266
      %v3646 = vadd.f32 %v3068, %v3268
      %v3647 = vadd.f32 %v3069, %v3270
      %v3648 = vadd.f32 %v3070, %v3272
      %v3649 = vadd.f32 %v3003, %v3274
      %v3650 = vadd.f32 %v3071, %v3276
      %v3651 = vadd.f32 %v3072, %v3278
      %v3652 = vadd.f32 %v3073, %v3280
      %v3653 = vadd.f32 %v3004, %v3282
      %v3654 = vadd.f32 %v3074, %v3284
      %v3655 = vadd.f32 %v3075, %v3286
      %v3656 = vadd.f32 %v3076, %v3288
      %v3657 = vadd.f32 %v3005, %v3290
      %v3658 = vadd.f32 %v3077, %v3292
      %v3659 = vadd.f32 %v3078, %v3294
      %v3660 = vadd.f32 %v3079, %v3296
      %v3661 = vadd.f32 %v3006, %v3298
      %v3662 = vadd.f32 %v3080, %v3300
      %v3663 = vadd.f32 %v3081, %v3302
      %v3664 = vadd.f32 %v3082, %v3304
      %v3665 = vadd.f32 %v3007, %v3306
      %v3666 = vadd.f32 %v3083, %v3308
      %v3667 = vadd.f32 %v3084, %v3310
      %v3668 = vadd.f32 %v3085, %v3312
      %v3669 = vadd.f32 %v3008, %v3314
      %v3670 = vadd.f32 %v3086, %v3316
      %v3671 = vadd.f32 %v3087, %v3318
      %v3672 = vadd.f32 %v3088, %v3320
      %v3673 = vadd.f32 %v3009, %v3322
      %v3674 = vadd.f32 %v3089, %v3324
      %v3675 = vadd.f32 %v3090, %v3326
      %v3676 = vadd.f32 %v3091, %v3328
      %v3677 = vadd.f32 %v3010, %v3330
      %v3678 = vadd.f32 %v3092, %v3332
      %v3679 = vadd.f32 %v3093, %v3334
      %v3680 = vadd.f32 %v3094, %v3336
      %v3681 = vadd.f32 %v3011, %v3338
      %v3682 = vadd.f32 %v3095, %v3340
      %v3683 = vadd.f32 %v3096, %v3342
      %v3684 = vadd.f32 %v3097, %v3344
      %v3685 = vadd.f32 %v3012, %v3346
      %v3686 = vadd.f32 %v3098, %v3348
      %v3687 = vadd.f32 %v3099, %v3350
      %v3688 = vadd.f32 %v3100, %v3352
      %v3689 = vadd.f32 %v3013, %v3354
      %v3690 = vadd.f32 %v3101, %v3356
      %v3691 = vadd.f32 %v3102, %v3358
      %v3692 = vadd.f32 %v3103, %v3360
      %v3693 = vadd.f32 %v3014, %v3362
      %v3694 = vadd.f32 %v3104, %v3364
      %v3695 = vadd.f32 %v3105, %v3366
      %v3696 = vadd.f32 %v3106, %v3368
      %v3697 = vadd.f32 %v3015, %v3370
      %v3698 = vadd.f32 %v3107, %v3372
      %v3699 = vadd.f32 %v3108, %v3374
      %v3700 = vadd.f32 %v3109, %v3376
      %v3701 = vadd.f32 %v3016, %v3378
      %v3702 = vadd.f32 %v3110, %v3380
      %v3703 = vadd.f32 %v3111, %v3382
      %v3704 = vadd.f32 %v3112, %v3384
      %v3705 = vadd.f32 %v3017, %v3386
      %v3706 = vadd.f32 %v3113, %v3388
      %v3707 = vadd.f32 %v3114, %v3390
      %v3708 = vadd.f32 %v3115, %v3392
      %v3709 = vadd.f32 %v3018, %v3394
      %v3710 = vadd.f32 %v3116, %v3396
      %v3711 = vadd.f32 %v3117, %v3398
      %v3712 = vadd.f32 %v3118, %v3400
      %v3713 = vadd.f32 %v3019, %v3402
      %v3714 = vadd.f32 %v3119, %v3404
      %v3715 = vadd.f32 %v3120, %v3406
      %v3716 = vadd.f32 %v3121, %v3408
      %v3717 = vadd.f32 %v3020, %v3410
      %v3718 = vadd.f32 %v3122, %v3412
      %v3719 = vadd.f32 %v3123, %v3414
      %v3720 = vadd.f32 %v3124, %v3416
      %v3721 = vadd.f32 %v3021, %v3418
      %v3722 = vadd.f32 %v3125, %v3420
      %v3723 = vadd.f32 %v3126, %v3422
      %v3724 = vadd.f32 %v3127, %v3424
      %v3725 = vadd.f32 %v3022, %v3426
      %v3726 = vadd.f32 %v3128, %v3428
      %v3727 = vadd.f32 %v3129, %v3430
      %v3728 = vadd.f32 %v3130, %v3432
      %v3729 = vadd.f32 %v3023, %v3434
      %v3730 = vadd.f32 %v3131, %v3436
      %v3731 = vadd.f32 %v3132, %v3438
      %v3732 = vadd.f32 %v3133, %v3440
      %v3733 = vadd.f32 %v3024, %v3442
      %v3734 = vadd.f32 %v3134, %v3444
      %v3735 = vadd.f32 %v3135, %v3446
      %v3736 = vadd.f32 %v3136, %v3448
      %v3737 = vadd.f32 %v3025, %v3450
      %v3738 = vadd.f32 %v3137, %v3452
      %v3739 = vadd.f32 %v3138, %v3454
      %v3740 = vadd.f32 %v3139, %v3456
      %v3741 = vadd.f32 %v3026, %v3458
      %v3742 = vadd.f32 %v3140, %v3460
      %v3743 = vadd.f32 %v3141, %v3462
      %v3744 = vadd.f32 %v3142, %v3464
      %v3745 = vadd.f32 %v3027, %v3466
      %v3746 = vadd.f32 %v3143, %v3468
      %v3747 = vadd.f32 %v3144, %v3470
      %v3748 = vadd.f32 %v3145, %v3472
      %v3749 = vadd.f32 %v3028, %v3474
      %v3750 = vadd.f32 %v3146, %v3476
      %v3751 = vadd.f32 %v3147, %v3478
      %v3752 = vadd.f32 %v3148, %v3480
      %v3753 = vadd.f32 %v3029, %v3482
      %v3754 = vadd.f32 %v3149, %v3484
      %v3755 = vadd.f32 %v3150, %v3486
      %v3756 = vadd.f32 %v3151, %v3488
      %v3757 = vadd.f32 %v3030, %v3490
      %v3758 = vadd.f32 %v3152, %v3492
      %v3759 = vadd.f32 %v3153, %v3494
      %v3760 = vadd.f32 %v3154, %v3496
      %v3761 = vadd.f32 %v3031, %v3498
      %v3762 = vadd.f32 %v3155, %v3500
      %v3763 = vadd.f32 %v3156, %v3502
      %v3764 = vadd.f32 %v3157, %v3504
      %v3765 = vadd.f32 %v3032, %v3506
      %v3766 = vadd.f32 %v3158, %v3508
      %v3767 = vadd.f32 %v3159, %v3510
      %v3768 = vadd.f32 %v3160, %v3512
      %v3769 = vadd.f32 %v3641, %v3649
      %v3770 = vadd.f32 %v3642, %v3650
      %v3771 = vadd.f32 %v3643, %v3651
      %v3772 = vadd.f32 %v3644, %v3652
      %v3773 = vadd.f32 %v3645, %v3653
      %v3774 = vadd.f32 %v3646, %v3654
      %v3775 = vadd.f32 %v3647, %v3655
      %v3776 = vadd.f32 %v3648, %v3656
      %v3777 = vadd.f32 %v3657, %v3665
      %v3778 = vadd.f32 %v3658, %v3666
      %v3779 = vadd.f32 %v3659, %v3667
      %v3780 = vadd.f32 %v3660, %v3668
      %v3781 = vadd.f32 %v3661, %v3669
      %v3782 = vadd.f32 %v3662, %v3670
      %v3783 = vadd.f32 %v3663, %v3671
      %v3784 = vadd.f32 %v3664, %v3672
      %v3785 = vadd.f32 %v3673, %v3681
      %v3786 = vadd.f32 %v3674, %v3682
      %v3787 = vadd.f32 %v3675, %v3683
      %v3788 = vadd.f32 %v3676, %v3684
      %v3789 = vadd.f32 %v3677, %v3685
      %v3790 = vadd.f32 %v3678, %v3686
      %v3791 = vadd.f32 %v3679, %v3687
      %v3792 = vadd.f32 %v3680, %v3688
      %v3793 = vadd.f32 %v3689, %v3697
      %v3794 = vadd.f32 %v3690, %v3698
      %v3795 = vadd.f32 %v3691, %v3699
      %v3796 = vadd.f32 %v3692, %v3700
      %v3797 = vadd.f32 %v3693, %v3701
      %v3798 = vadd.f32 %v3694, %v3702
      %v3799 = vadd.f32 %v3695, %v3703
      %v3800 = vadd.f32 %v3696, %v3704
      %v3801 = vadd.f32 %v3705, %v3713
      %v3802 = vadd.f32 %v3706, %v3714
      %v3803 = vadd.f32 %v3707, %v3715
      %v3804 = vadd.f32 %v3708, %v3716
      %v3805 = vadd.f32 %v3709, %v3717
      %v3806 = vadd.f32 %v3710, %v3718
      %v3807 = vadd.f32 %v3711, %v3719
      %v3808 = vadd.f32 %v3712, %v3720
      %v3809 = vadd.f32 %v3721, %v3729
      %v3810 = vadd.f32 %v3722, %v3730
      %v3811 = vadd.f32 %v3723, %v3731
      %v3812 = vadd.f32 %v3724, %v3732
      %v3813 = vadd.f32 %v3725, %v3733
      %v3814 = vadd.f32 %v3726, %v3734
      %v3815 = vadd.f32 %v3727, %v3735
      %v3816 = vadd.f32 %v3728, %v3736
      %v3817 = vadd.f32 %v3737, %v3745
      %v3818 = vadd.f32 %v3738, %v3746
      %v3819 = vadd.f32 %v3739, %v3747
      %v3820 = vadd.f32 %v3740, %v3748
      %v3821 = vadd.f32 %v3741, %v3749
      %v3822 = vadd.f32 %v3742, %v3750
      %v3823 = vadd.f32 %v3743, %v3751
      %v3824 = vadd.f32 %v3744, %v3752
      %v3825 = vadd.f32 %v3753, %v3761
      %v3826 = vadd.f32 %v3754, %v3762
      %v3827 = vadd.f32 %v3755, %v3763
      %v3828 = vadd.f32 %v3756, %v3764
      %v3829 = vadd.f32 %v3757, %v3765
      %v3830 = vadd.f32 %v3758, %v3766
      %v3831 = vadd.f32 %v3759, %v3767
      %v3832 = vadd.f32 %v3760, %v3768
      %3833 = vst.msk [vmem:[#allocation4] sm:$0xf] %vm324, 0
      %3834 = vst.msk [vmem:[#allocation4 + $0x4] sm:$0xf] %vm324, 0
      %3835 = vst.msk [vmem:[#allocation4 + $0x8] sm:$0xf] %vm324, 0
      %3836 = vst.msk [vmem:[#allocation4 + $0xc] sm:$0xf] %vm324, 0
      %s3837 = scalar_lea.vmem [#allocation4], 80
      %3838 = vst.msk [vmem:[%s3837] sm:$0xf] %vm324, 0
      %3839 = vst.msk [vmem:[%s3837 + $0x4] sm:$0xf] %vm324, 0
      %3840 = vst.msk [vmem:[%s3837 + $0x8] sm:$0xf] %vm324, 0
      %3841 = vst.msk [vmem:[%s3837 + $0xc] sm:$0xf] %vm324, 0
      %v3842 = vld [vmem:[#allocation4] sm:$0x1]
      %v3843 = vsel %vm344, 0, %v3842
      %3844 = vst [vmem:[#allocation4] sm:$0x1] %v3843
      %v3845 = vld [vmem:[#allocation4 + $0x8] sm:$0x1]
      %v3846 = vsel %vm344, 0, %v3845
      %3847 = vst [vmem:[#allocation4 + $0x8] sm:$0x1] %v3846
      %v3848 = vld [vmem:[#allocation4 + $0x10] sm:$0x1]
      %v3849 = vsel %vm344, 0, %v3848
      %3850 = vst [vmem:[#allocation4 + $0x10] sm:$0x1] %v3849
      %v3851 = vld [vmem:[#allocation4 + $0x18] sm:$0x1]
      %v3852 = vsel %vm344, 0, %v3851
      %3853 = vst [vmem:[#allocation4 + $0x18] sm:$0x1] %v3852
      %v3854 = vld [vmem:[#allocation4 + $0x20] sm:$0x1]
      %v3855 = vsel %vm344, 0, %v3854
      %3856 = vst [vmem:[#allocation4 + $0x20] sm:$0x1] %v3855
      %v3857 = vld [vmem:[#allocation4 + $0x28] sm:$0x1]
      %v3858 = vsel %vm344, 0, %v3857
      %3859 = vst [vmem:[#allocation4 + $0x28] sm:$0x1] %v3858
      %v3860 = vld [vmem:[#allocation4 + $0x30] sm:$0x1]
      %v3861 = vsel %vm344, 0, %v3860
      %3862 = vst [vmem:[#allocation4 + $0x30] sm:$0x1] %v3861
      %v3863 = vld [vmem:[#allocation4 + $0x38] sm:$0x1]
      %v3864 = vsel %vm344, 0, %v3863
      %3865 = vst [vmem:[#allocation4 + $0x38] sm:$0x1] %v3864
      %v3866 = vld [vmem:[#allocation4 + $0x40] sm:$0x1]
      %v3867 = vsel %vm344, 0, %v3866
      %3868 = vst [vmem:[#allocation4 + $0x40] sm:$0x1] %v3867
      %v3869 = vld [vmem:[#allocation4 + $0x48] sm:$0x1]
      %v3870 = vsel %vm344, 0, %v3869
      %3871 = vst [vmem:[#allocation4 + $0x48] sm:$0x1] %v3870
      %v3872 = vld [vmem:[#allocation4 + $0x50] sm:$0x1]
      %v3873 = vsel %vm344, 0, %v3872
      %3874 = vst [vmem:[#allocation4 + $0x50] sm:$0x1] %v3873
      %v3875 = vld [vmem:[#allocation4 + $0x58] sm:$0x1]
      %v3876 = vsel %vm344, 0, %v3875
      %3877 = vst [vmem:[#allocation4 + $0x58] sm:$0x1] %v3876
      %v3878 = vld [vmem:[#allocation4 + $0x4] sm:$0xf]
      %v3879 = vsel %vm407, 0, %v3878
      %3880 = vst [vmem:[#allocation4 + $0x4] sm:$0xf] %v3879
      %v3881 = vld [vmem:[#allocation4 + $0xc] sm:$0xf]
      %v3882 = vsel %vm407, 0, %v3881
      %3883 = vst [vmem:[#allocation4 + $0xc] sm:$0xf] %v3882
      %v3884 = vld [vmem:[#allocation4 + $0x14] sm:$0xf]
      %v3885 = vsel %vm407, 0, %v3884
      %3886 = vst [vmem:[#allocation4 + $0x14] sm:$0xf] %v3885
      %v3887 = vld [vmem:[#allocation4 + $0x1c] sm:$0xf]
      %v3888 = vsel %vm407, 0, %v3887
      %3889 = vst [vmem:[#allocation4 + $0x1c] sm:$0xf] %v3888
      %v3890 = vld [vmem:[#allocation4 + $0x24] sm:$0xf]
      %v3891 = vsel %vm407, 0, %v3890
      %3892 = vst [vmem:[#allocation4 + $0x24] sm:$0xf] %v3891
      %v3893 = vld [vmem:[#allocation4 + $0x2c] sm:$0xf]
      %v3894 = vsel %vm407, 0, %v3893
      %3895 = vst [vmem:[#allocation4 + $0x2c] sm:$0xf] %v3894
      %v3896 = vld [vmem:[#allocation4 + $0x34] sm:$0xf]
      %v3897 = vsel %vm407, 0, %v3896
      %3898 = vst [vmem:[#allocation4 + $0x34] sm:$0xf] %v3897
      %v3899 = vld [vmem:[#allocation4 + $0x3c] sm:$0xf]
      %v3900 = vsel %vm407, 0, %v3899
      %3901 = vst [vmem:[#allocation4 + $0x3c] sm:$0xf] %v3900
      %v3902 = vld [vmem:[#allocation4 + $0x44] sm:$0xf]
      %v3903 = vsel %vm407, 0, %v3902
      %3904 = vst [vmem:[#allocation4 + $0x44] sm:$0xf] %v3903
      %v3905 = vld [vmem:[#allocation4 + $0x4c] sm:$0xf]
      %v3906 = vsel %vm407, 0, %v3905
      %3907 = vst [vmem:[#allocation4 + $0x4c] sm:$0xf] %v3906
      %v3908 = vld [vmem:[#allocation4 + $0x54] sm:$0xf]
      %v3909 = vsel %vm407, 0, %v3908
      %3910 = vst [vmem:[#allocation4 + $0x54] sm:$0xf] %v3909
      %v3911 = vld [vmem:[#allocation4 + $0x5c] sm:$0xf]
      %v3912 = vsel %vm407, 0, %v3911
      %3913 = vst [vmem:[#allocation4 + $0x5c] sm:$0xf] %v3912
      %v3914 = vpack.c.bf16 %v3769, %v3769
      %v3915 = vpack.c.bf16 %v3770, %v3770
      %v3916 = vpack.c.bf16 %v3771, %v3771
      %v3917 = vpack.c.bf16 %v3772, %v3772
      %v3918 = vpack.c.bf16 %v3773, %v3773
      %v3919 = vpack.c.bf16 %v3774, %v3774
      %v3920 = vpack.c.bf16 %v3775, %v3775
      %v3921 = vpack.c.bf16 %v3776, %v3776
      %v3922 = vpack.c.bf16 %v3777, %v3777
      %v3923 = vpack.c.bf16 %v3778, %v3778
      %v3924 = vpack.c.bf16 %v3779, %v3779
      %v3925 = vpack.c.bf16 %v3780, %v3780
      %v3926 = vpack.c.bf16 %v3781, %v3781
      %v3927 = vpack.c.bf16 %v3782, %v3782
      %v3928 = vpack.c.bf16 %v3783, %v3783
      %v3929 = vpack.c.bf16 %v3784, %v3784
      %v3930 = vpack.c.bf16 %v3785, %v3785
      %v3931 = vpack.c.bf16 %v3786, %v3786
      %v3932 = vpack.c.bf16 %v3787, %v3787
      %v3933 = vpack.c.bf16 %v3788, %v3788
      %v3934 = vpack.c.bf16 %v3789, %v3789
      %v3935 = vpack.c.bf16 %v3790, %v3790
      %v3936 = vpack.c.bf16 %v3791, %v3791
      %v3937 = vpack.c.bf16 %v3792, %v3792
      %v3938 = vpack.c.bf16 %v3793, %v3793
      %v3939 = vpack.c.bf16 %v3794, %v3794
      %v3940 = vpack.c.bf16 %v3795, %v3795
      %v3941 = vpack.c.bf16 %v3796, %v3796
      %v3942 = vpack.c.bf16 %v3797, %v3797
      %v3943 = vpack.c.bf16 %v3798, %v3798
      %v3944 = vpack.c.bf16 %v3799, %v3799
      %v3945 = vpack.c.bf16 %v3800, %v3800
      %v3946 = vpack.c.bf16 %v3801, %v3801
      %v3947 = vpack.c.bf16 %v3802, %v3802
      %v3948 = vpack.c.bf16 %v3803, %v3803
      %v3949 = vpack.c.bf16 %v3804, %v3804
      %v3950 = vpack.c.bf16 %v3805, %v3805
      %v3951 = vpack.c.bf16 %v3806, %v3806
      %v3952 = vpack.c.bf16 %v3807, %v3807
      %v3953 = vpack.c.bf16 %v3808, %v3808
      %v3954 = vpack.c.bf16 %v3809, %v3809
      %v3955 = vpack.c.bf16 %v3810, %v3810
      %v3956 = vpack.c.bf16 %v3811, %v3811
      %v3957 = vpack.c.bf16 %v3812, %v3812
      %v3958 = vpack.c.bf16 %v3813, %v3813
      %v3959 = vpack.c.bf16 %v3814, %v3814
      %v3960 = vpack.c.bf16 %v3815, %v3815
      %v3961 = vpack.c.bf16 %v3816, %v3816
      %v3962 = vpack.c.bf16 %v3817, %v3817
      %v3963 = vpack.c.bf16 %v3818, %v3818
      %v3964 = vpack.c.bf16 %v3819, %v3819
      %v3965 = vpack.c.bf16 %v3820, %v3820
      %v3966 = vpack.c.bf16 %v3821, %v3821
      %v3967 = vpack.c.bf16 %v3822, %v3822
      %v3968 = vpack.c.bf16 %v3823, %v3823
      %v3969 = vpack.c.bf16 %v3824, %v3824
      %v3970 = vpack.c.bf16 %v3825, %v3825
      %v3971 = vpack.c.bf16 %v3826, %v3826
      %v3972 = vpack.c.bf16 %v3827, %v3827
      %v3973 = vpack.c.bf16 %v3828, %v3828
      %v3974 = vpack.c.bf16 %v3829, %v3829
      %v3975 = vpack.c.bf16 %v3830, %v3830
      %v3976 = vpack.c.bf16 %v3831, %v3831
      %v3977 = vpack.c.bf16 %v3832, %v3832
      %v4042 = vunpack.c.l.b16 %v3914
      %v4043 = vunpack.c.l.b16 %v3915
      %v4044 = vunpack.c.l.b16 %v3916
      %v4045 = vunpack.c.l.b16 %v3917
      %v4046 = vunpack.c.l.b16 %v3918
      %v4047 = vunpack.c.l.b16 %v3919
      %v4048 = vunpack.c.l.b16 %v3920
      %v4049 = vunpack.c.l.b16 %v3921
      %v4050 = vunpack.c.l.b16 %v3922
      %v4051 = vunpack.c.l.b16 %v3923
      %v4052 = vunpack.c.l.b16 %v3924
      %v4053 = vunpack.c.l.b16 %v3925
      %v4054 = vunpack.c.l.b16 %v3926
      %v4055 = vunpack.c.l.b16 %v3927
      %v4056 = vunpack.c.l.b16 %v3928
      %v4057 = vunpack.c.l.b16 %v3929
      %v4058 = vunpack.c.l.b16 %v3930
      %v4059 = vunpack.c.l.b16 %v3931
      %v4060 = vunpack.c.l.b16 %v3932
      %v4061 = vunpack.c.l.b16 %v3933
      %v4062 = vunpack.c.l.b16 %v3934
      %v4063 = vunpack.c.l.b16 %v3935
      %v4064 = vunpack.c.l.b16 %v3936
      %v4065 = vunpack.c.l.b16 %v3937
      %v4066 = vunpack.c.l.b16 %v3938
      %v4067 = vunpack.c.l.b16 %v3939
      %v4068 = vunpack.c.l.b16 %v3940
      %v4069 = vunpack.c.l.b16 %v3941
      %v4070 = vunpack.c.l.b16 %v3942
      %v4071 = vunpack.c.l.b16 %v3943
      %v4072 = vunpack.c.l.b16 %v3944
      %v4073 = vunpack.c.l.b16 %v3945
      %v4074 = vunpack.c.l.b16 %v3946
      %v4075 = vunpack.c.l.b16 %v3947
      %v4076 = vunpack.c.l.b16 %v3948
      %v4077 = vunpack.c.l.b16 %v3949
      %v4078 = vunpack.c.l.b16 %v3950
      %v4079 = vunpack.c.l.b16 %v3951
      %v4080 = vunpack.c.l.b16 %v3952
      %v4081 = vunpack.c.l.b16 %v3953
      %v4082 = vunpack.c.l.b16 %v3954
      %v4083 = vunpack.c.l.b16 %v3955
      %v4084 = vunpack.c.l.b16 %v3956
      %v4085 = vunpack.c.l.b16 %v3957
      %v4086 = vunpack.c.l.b16 %v3958
      %v4087 = vunpack.c.l.b16 %v3959
      %v4088 = vunpack.c.l.b16 %v3960
      %v4089 = vunpack.c.l.b16 %v3961
      %v4090 = vunpack.c.l.b16 %v3962
      %v4091 = vunpack.c.l.b16 %v3963
      %v4092 = vunpack.c.l.b16 %v3964
      %v4093 = vunpack.c.l.b16 %v3965
      %v4094 = vunpack.c.l.b16 %v3966
      %v4095 = vunpack.c.l.b16 %v3967
      %v4096 = vunpack.c.l.b16 %v3968
      %v4097 = vunpack.c.l.b16 %v3969
      %v4098 = vunpack.c.l.b16 %v3970
      %v4099 = vunpack.c.l.b16 %v3971
      %v4100 = vunpack.c.l.b16 %v3972
      %v4101 = vunpack.c.l.b16 %v3973
      %v4102 = vunpack.c.l.b16 %v3974
      %v4103 = vunpack.c.l.b16 %v3975
      %v4104 = vunpack.c.l.b16 %v3976
      %v4105 = vunpack.c.l.b16 %v3977
      %v4106 = vrot.slane %v4042, 7
      %v4107 = vrot.slane %v4043, 6
      %vm4108 = vcmask 1042434
      %v4109 = vsel %vm4108, %v4107, %v4106
      %v4110 = vrot.slane %v4044, 5
      %vm4111 = vcmask 1043459
      %v4112 = vsel %vm4111, %v4110, %v4109
      %v4113 = vrot.slane %v4045, 4
      %vm4114 = vcmask 1044484
      %v4115 = vsel %vm4114, %v4113, %v4112
      %v4116 = vrot.slane %v4046, 3
      %vm4117 = vcmask 1045509
      %v4118 = vsel %vm4117, %v4116, %v4115
      %v4119 = vrot.slane %v4047, 2
      %vm4120 = vcmask 1046534
      %v4121 = vsel %vm4120, %v4119, %v4118
      %v4122 = vrot.slane %v4048, 1
      %vm4123 = vcmask 1047559
      %v4124 = vsel %vm4123, %v4122, %v4121
      %v4125 = vrot.slane %v4050, 7
      %v4126 = vrot.slane %v4051, 6
      %v4127 = vsel %vm4108, %v4126, %v4125
      %v4128 = vrot.slane %v4052, 5
      %v4129 = vsel %vm4111, %v4128, %v4127
      %v4130 = vrot.slane %v4053, 4
      %v4131 = vsel %vm4114, %v4130, %v4129
      %v4132 = vrot.slane %v4054, 3
      %v4133 = vsel %vm4117, %v4132, %v4131
      %v4134 = vrot.slane %v4055, 2
      %v4135 = vsel %vm4120, %v4134, %v4133
      %v4136 = vrot.slane %v4056, 1
      %v4137 = vsel %vm4123, %v4136, %v4135
      %v4138 = vrot.slane %v4058, 7
      %v4139 = vrot.slane %v4059, 6
      %v4140 = vsel %vm4108, %v4139, %v4138
      %v4141 = vrot.slane %v4060, 5
      %v4142 = vsel %vm4111, %v4141, %v4140
      %v4143 = vrot.slane %v4061, 4
      %v4144 = vsel %vm4114, %v4143, %v4142
      %v4145 = vrot.slane %v4062, 3
      %v4146 = vsel %vm4117, %v4145, %v4144
      %v4147 = vrot.slane %v4063, 2
      %v4148 = vsel %vm4120, %v4147, %v4146
      %v4149 = vrot.slane %v4064, 1
      %v4150 = vsel %vm4123, %v4149, %v4148
      %v4151 = vrot.slane %v4066, 7
      %v4152 = vrot.slane %v4067, 6
      %v4153 = vsel %vm4108, %v4152, %v4151
      %v4154 = vrot.slane %v4068, 5
      %v4155 = vsel %vm4111, %v4154, %v4153
      %v4156 = vrot.slane %v4069, 4
      %v4157 = vsel %vm4114, %v4156, %v4155
      %v4158 = vrot.slane %v4070, 3
      %v4159 = vsel %vm4117, %v4158, %v4157
      %v4160 = vrot.slane %v4071, 2
      %v4161 = vsel %vm4120, %v4160, %v4159
      %v4162 = vrot.slane %v4072, 1
      %v4163 = vsel %vm4123, %v4162, %v4161
      %v4164 = vrot.slane %v4074, 7
      %v4165 = vrot.slane %v4075, 6
      %v4166 = vsel %vm4108, %v4165, %v4164
      %v4167 = vrot.slane %v4076, 5
      %v4168 = vsel %vm4111, %v4167, %v4166
      %v4169 = vrot.slane %v4077, 4
      %v4170 = vsel %vm4114, %v4169, %v4168
      %v4171 = vrot.slane %v4078, 3
      %v4172 = vsel %vm4117, %v4171, %v4170
      %v4173 = vrot.slane %v4079, 2
      %v4174 = vsel %vm4120, %v4173, %v4172
      %v4175 = vrot.slane %v4080, 1
      %v4176 = vsel %vm4123, %v4175, %v4174
      %v4177 = vrot.slane %v4082, 7
      %v4178 = vrot.slane %v4083, 6
      %v4179 = vsel %vm4108, %v4178, %v4177
      %v4180 = vrot.slane %v4084, 5
      %v4181 = vsel %vm4111, %v4180, %v4179
      %v4182 = vrot.slane %v4085, 4
      %v4183 = vsel %vm4114, %v4182, %v4181
      %v4184 = vrot.slane %v4086, 3
      %v4185 = vsel %vm4117, %v4184, %v4183
      %v4186 = vrot.slane %v4087, 2
      %v4187 = vsel %vm4120, %v4186, %v4185
      %v4188 = vrot.slane %v4088, 1
      %v4189 = vsel %vm4123, %v4188, %v4187
      %v4190 = vrot.slane %v4090, 7
      %v4191 = vrot.slane %v4091, 6
      %v4192 = vsel %vm4108, %v4191, %v4190
      %v4193 = vrot.slane %v4092, 5
      %v4194 = vsel %vm4111, %v4193, %v4192
      %v4195 = vrot.slane %v4093, 4
      %v4196 = vsel %vm4114, %v4195, %v4194
      %v4197 = vrot.slane %v4094, 3
      %v4198 = vsel %vm4117, %v4197, %v4196
      %v4199 = vrot.slane %v4095, 2
      %v4200 = vsel %vm4120, %v4199, %v4198
      %v4201 = vrot.slane %v4096, 1
      %v4202 = vsel %vm4123, %v4201, %v4200
      %v4203 = vrot.slane %v4098, 7
      %v4204 = vrot.slane %v4099, 6
      %v4205 = vsel %vm4108, %v4204, %v4203
      %v4206 = vrot.slane %v4100, 5
      %v4207 = vsel %vm4111, %v4206, %v4205
      %v4208 = vrot.slane %v4101, 4
      %v4209 = vsel %vm4114, %v4208, %v4207
      %v4210 = vrot.slane %v4102, 3
      %v4211 = vsel %vm4117, %v4210, %v4209
      %v4212 = vrot.slane %v4103, 2
      %v4213 = vsel %vm4120, %v4212, %v4211
      %v4214 = vrot.slane %v4104, 1
      %v4215 = vsel %vm4123, %v4214, %v4213
      %v4216 = vpack.c.b16 %v4124, %v4124
      %v4217 = vpack.c.b16 %v4049, %v4049
      %v4218 = vpack.c.b16 %v4137, %v4137
      %v4219 = vpack.c.b16 %v4057, %v4057
      %v4220 = vpack.c.b16 %v4150, %v4150
      %v4221 = vpack.c.b16 %v4065, %v4065
      %v4222 = vpack.c.b16 %v4163, %v4163
      %v4223 = vpack.c.b16 %v4073, %v4073
      %v4224 = vpack.c.b16 %v4176, %v4176
      %v4225 = vpack.c.b16 %v4081, %v4081
      %v4226 = vpack.c.b16 %v4189, %v4189
      %v4227 = vpack.c.b16 %v4089, %v4089
      %v4228 = vpack.c.b16 %v4202, %v4202
      %v4229 = vpack.c.b16 %v4097, %v4097
      %v4230 = vpack.c.b16 %v4215, %v4215
      %v4231 = vpack.c.b16 %v4105, %v4105
      %s4248 = scalar_lea.vmem [#allocation4], 16
      %v4249 = vld [vmem:[%s4248] sm:$0xf]
      %v4250 = vsel %vm407, %v4216, %v4249
      %4251 = vst [vmem:[%s4248] sm:$0xf] %v4250
      %v4252 = vld [vmem:[%s4248 + $0x4] sm:$0x1]
      %v4253 = vsel %vm344, %v4217, %v4252
      %4254 = vst [vmem:[%s4248 + $0x4] sm:$0x1] %v4253
      %v4255 = vld [vmem:[%s4248 + $0x8] sm:$0xf]
      %v4256 = vsel %vm407, %v4218, %v4255
      %4257 = vst [vmem:[%s4248 + $0x8] sm:$0xf] %v4256
      %v4258 = vld [vmem:[%s4248 + $0xc] sm:$0x1]
      %v4259 = vsel %vm344, %v4219, %v4258
      %4260 = vst [vmem:[%s4248 + $0xc] sm:$0x1] %v4259
      %v4261 = vld [vmem:[%s4248 + $0x10] sm:$0xf]
      %v4262 = vsel %vm407, %v4220, %v4261
      %4263 = vst [vmem:[%s4248 + $0x10] sm:$0xf] %v4262
      %v4264 = vld [vmem:[%s4248 + $0x14] sm:$0x1]
      %v4265 = vsel %vm344, %v4221, %v4264
      %4266 = vst [vmem:[%s4248 + $0x14] sm:$0x1] %v4265
      %v4267 = vld [vmem:[%s4248 + $0x18] sm:$0xf]
      %v4268 = vsel %vm407, %v4222, %v4267
      %4269 = vst [vmem:[%s4248 + $0x18] sm:$0xf] %v4268
      %v4270 = vld [vmem:[%s4248 + $0x1c] sm:$0x1]
      %v4271 = vsel %vm344, %v4223, %v4270
      %4272 = vst [vmem:[%s4248 + $0x1c] sm:$0x1] %v4271
      %v4273 = vld [vmem:[%s4248 + $0x20] sm:$0xf]
      %v4274 = vsel %vm407, %v4224, %v4273
      %4275 = vst [vmem:[%s4248 + $0x20] sm:$0xf] %v4274
      %v4276 = vld [vmem:[%s4248 + $0x24] sm:$0x1]
      %v4277 = vsel %vm344, %v4225, %v4276
      %4278 = vst [vmem:[%s4248 + $0x24] sm:$0x1] %v4277
      %v4279 = vld [vmem:[%s4248 + $0x28] sm:$0xf]
      %v4280 = vsel %vm407, %v4226, %v4279
      %4281 = vst [vmem:[%s4248 + $0x28] sm:$0xf] %v4280
      %v4282 = vld [vmem:[%s4248 + $0x2c] sm:$0x1]
      %v4283 = vsel %vm344, %v4227, %v4282
      %4284 = vst [vmem:[%s4248 + $0x2c] sm:$0x1] %v4283
      %v4285 = vld [vmem:[%s4248 + $0x30] sm:$0xf]
      %v4286 = vsel %vm407, %v4228, %v4285
      %4287 = vst [vmem:[%s4248 + $0x30] sm:$0xf] %v4286
      %v4288 = vld [vmem:[%s4248 + $0x34] sm:$0x1]
      %v4289 = vsel %vm344, %v4229, %v4288
      %4290 = vst [vmem:[%s4248 + $0x34] sm:$0x1] %v4289
      %v4291 = vld [vmem:[%s4248 + $0x38] sm:$0xf]
      %v4292 = vsel %vm407, %v4230, %v4291
      %4293 = vst [vmem:[%s4248 + $0x38] sm:$0xf] %v4292
      %v4294 = vld [vmem:[%s4248 + $0x3c] sm:$0x1]
      %v4295 = vsel %vm344, %v4231, %v4294
      %4296 = vst [vmem:[%s4248 + $0x3c] sm:$0x1] %v4295
      %v4297 = vld [vmem:[#allocation4 + $0x8] sm:$0xf]
      %v4298 = vld [vmem:[#allocation4 + $0xc] sm:$0xf]
      %v4299 = vld [vmem:[#allocation4 + $0x10] sm:$0xf]
      %v4300 = vld [vmem:[#allocation4 + $0x14] sm:$0xf]
      %v4301 = vld [vmem:[#allocation4 + $0x18] sm:$0xf]
      %v4302 = vld [vmem:[#allocation4 + $0x1c] sm:$0xf]
      %v4303 = vld [vmem:[#allocation4 + $0x20] sm:$0xf]
      %v4304 = vld [vmem:[#allocation4 + $0x24] sm:$0xf]
      %v4305 = vld [vmem:[#allocation4 + $0x28] sm:$0xf]
      %v4306 = vld [vmem:[#allocation4 + $0x2c] sm:$0xf]
      %v4307 = vld [vmem:[#allocation4 + $0x30] sm:$0xf]
      %v4308 = vld [vmem:[#allocation4 + $0x34] sm:$0xf]
      %v4309 = vld [vmem:[#allocation4 + $0x38] sm:$0xf]
      %v4310 = vld [vmem:[#allocation4 + $0x3c] sm:$0xf]
      %v4311 = vld [vmem:[#allocation4 + $0x40] sm:$0xf]
      %v4312 = vld [vmem:[#allocation4 + $0x44] sm:$0xf]
      %v4313 = vld [vmem:[#allocation4 + $0x48] sm:$0xf]
      %v4314 = vld [vmem:[#allocation4 + $0x4c] sm:$0xf]
      %v4315 = vld [vmem:[#allocation4 + $0x50] sm:$0xf]
      %v4316 = vld [vmem:[#allocation4 + $0x54] sm:$0xf]
      %v4317 = vld [vmem:[#allocation4 + $0x58] sm:$0xf]
      %v4338 = vunpack.c.l.b16 %v4297
      %v4339 = vunpack.c.l.b16 %v4298
      %v4340 = vunpack.c.l.b16 %v4299
      %v4341 = vunpack.c.l.b16 %v4300
      %v4342 = vunpack.c.l.b16 %v4301
      %v4343 = vunpack.c.l.b16 %v4302
      %v4344 = vunpack.c.l.b16 %v4303
      %v4345 = vunpack.c.l.b16 %v4304
      %v4346 = vunpack.c.l.b16 %v4305
      %v4347 = vunpack.c.l.b16 %v4306
      %v4348 = vunpack.c.l.b16 %v4307
      %v4349 = vunpack.c.l.b16 %v4308
      %v4350 = vunpack.c.l.b16 %v4309
      %v4351 = vunpack.c.l.b16 %v4310
      %v4352 = vunpack.c.l.b16 %v4311
      %v4353 = vunpack.c.l.b16 %v4312
      %v4354 = vunpack.c.l.b16 %v4313
      %v4355 = vunpack.c.l.b16 %v4314
      %v4356 = vunpack.c.l.b16 %v4315
      %v4357 = vunpack.c.l.b16 %v4316
      %v4358 = vpack.c.b16 %v4339, %v4338
      %v4359 = vpack.c.b16 %v4341, %v4340
      %v4360 = vpack.c.b16 %v4343, %v4342
      %v4361 = vpack.c.b16 %v4345, %v4344
      %v4362 = vpack.c.b16 %v4347, %v4346
      %v4363 = vpack.c.b16 %v4349, %v4348
      %v4364 = vpack.c.b16 %v4351, %v4350
      %v4365 = vpack.c.b16 %v4353, %v4352
      %v4366 = vpack.c.b16 %v4355, %v4354
      %v4367 = vpack.c.b16 %v4357, %v4356
      %v4369 = vunpack.c.l.b16 %v4317
      %v4370 = vpack.c.b16 %v4369, %v4369
      %v4372 = vshrl.u32 %v4358, 16
      %v4374 = vshll.u32 %v4358, 16
      %v4376 = vrot.slane %v4374, 1
      %v4377 = vor.u32 %v4372, %v4376
      %v4379 = vshll.u32 %v4359, 16
      %v4381 = vrot.slane %v4379, 1
      %v4382 = vsel %vm1389, %v4377, %v4381
      %v4383 = vshrl.u32 %v4359, 16
      %v4385 = vor.u32 %v4383, %v4381
      %v4387 = vshll.u32 %v4360, 16
      %v4389 = vrot.slane %v4387, 1
      %v4390 = vsel %vm1389, %v4385, %v4389
      %v4391 = vshrl.u32 %v4360, 16
      %v4393 = vor.u32 %v4391, %v4389
      %v4395 = vshll.u32 %v4361, 16
      %v4397 = vrot.slane %v4395, 1
      %v4398 = vsel %vm1389, %v4393, %v4397
      %v4399 = vshrl.u32 %v4361, 16
      %v4401 = vor.u32 %v4399, %v4397
      %v4403 = vshll.u32 %v4362, 16
      %v4405 = vrot.slane %v4403, 1
      %v4406 = vsel %vm1389, %v4401, %v4405
      %v4407 = vshrl.u32 %v4362, 16
      %v4409 = vor.u32 %v4407, %v4405
      %v4411 = vshll.u32 %v4363, 16
      %v4413 = vrot.slane %v4411, 1
      %v4414 = vsel %vm1389, %v4409, %v4413
      %v4415 = vshrl.u32 %v4363, 16
      %v4417 = vor.u32 %v4415, %v4413
      %v4419 = vshll.u32 %v4364, 16
      %v4421 = vrot.slane %v4419, 1
      %v4422 = vsel %vm1389, %v4417, %v4421
      %v4423 = vshrl.u32 %v4364, 16
      %v4425 = vor.u32 %v4423, %v4421
      %v4427 = vshll.u32 %v4365, 16
      %v4429 = vrot.slane %v4427, 1
      %v4430 = vsel %vm1389, %v4425, %v4429
      %v4431 = vshrl.u32 %v4365, 16
      %v4433 = vor.u32 %v4431, %v4429
      %v4435 = vshll.u32 %v4366, 16
      %v4437 = vrot.slane %v4435, 1
      %v4438 = vsel %vm1389, %v4433, %v4437
      %v4439 = vshrl.u32 %v4366, 16
      %v4441 = vor.u32 %v4439, %v4437
      %v4443 = vshll.u32 %v4367, 16
      %v4445 = vrot.slane %v4443, 1
      %v4446 = vsel %vm1389, %v4441, %v4445
      %v4447 = vshrl.u32 %v4367, 16
      %v4449 = vor.u32 %v4447, %v4445
      %v4451 = vshll.u32 %v4370, 16
      %v4453 = vrot.slane %v4451, 1
      %v4454 = vsel %vm1389, %v4449, %v4453
      %4455 = vrot.lane.b32.xlu0 %v4382, 2
      %v4456 = vpop.permute.xlu0 %4455
      %4457 = vrot.lane.b32.xlu0 %v4390, 2
      %v4458 = vpop.permute.xlu0 %4457
      %4459 = vrot.lane.b32.xlu0 %v4398, 2
      %v4460 = vpop.permute.xlu0 %4459
      %4461 = vrot.lane.b32.xlu0 %v4406, 2
      %v4462 = vpop.permute.xlu0 %4461
      %4463 = vrot.lane.b32.xlu0 %v4414, 2
      %v4464 = vpop.permute.xlu0 %4463
      %4465 = vrot.lane.b32.xlu0 %v4422, 2
      %v4466 = vpop.permute.xlu0 %4465
      %4467 = vrot.lane.b32.xlu0 %v4430, 2
      %v4468 = vpop.permute.xlu0 %4467
      %4469 = vrot.lane.b32.xlu0 %v4438, 2
      %v4470 = vpop.permute.xlu0 %4469
      %4471 = vrot.lane.b32.xlu0 %v4446, 2
      %v4472 = vpop.permute.xlu0 %4471
      %4473 = vrot.lane.b32.xlu0 %v4454, 2
      %v4474 = vpop.permute.xlu0 %4473
      %v4475 = vrot.slane %v4358, 1
      %v4476 = vrot.slane %v4359, 1
      %v4477 = vsel %vm1754, %v4475, %v4476
      %v4478 = vrot.slane %v4360, 1
      %v4479 = vsel %vm1754, %v4476, %v4478
      %v4480 = vrot.slane %v4361, 1
      %v4481 = vsel %vm1754, %v4478, %v4480
      %v4482 = vrot.slane %v4362, 1
      %v4483 = vsel %vm1754, %v4480, %v4482
      %v4484 = vrot.slane %v4363, 1
      %v4485 = vsel %vm1754, %v4482, %v4484
      %v4486 = vrot.slane %v4364, 1
      %v4487 = vsel %vm1754, %v4484, %v4486
      %v4488 = vrot.slane %v4365, 1
      %v4489 = vsel %vm1754, %v4486, %v4488
      %v4490 = vrot.slane %v4366, 1
      %v4491 = vsel %vm1754, %v4488, %v4490
      %v4492 = vrot.slane %v4367, 1
      %v4493 = vsel %vm1754, %v4490, %v4492
      %v4494 = vrot.slane %v4370, 1
      %v4495 = vsel %vm1754, %v4492, %v4494
      %4496 = vrot.lane.b32.xlu0 %v4477, 4
      %v4497 = vpop.permute.xlu0 %4496
      %4498 = vrot.lane.b32.xlu0 %v4479, 4
      %v4499 = vpop.permute.xlu0 %4498
      %4500 = vrot.lane.b32.xlu0 %v4481, 4
      %v4501 = vpop.permute.xlu0 %4500
      %4502 = vrot.lane.b32.xlu0 %v4483, 4
      %v4503 = vpop.permute.xlu0 %4502
      %4504 = vrot.lane.b32.xlu0 %v4485, 4
      %v4505 = vpop.permute.xlu0 %4504
      %4506 = vrot.lane.b32.xlu0 %v4487, 4
      %v4507 = vpop.permute.xlu0 %4506
      %4508 = vrot.lane.b32.xlu0 %v4489, 4
      %v4509 = vpop.permute.xlu0 %4508
      %4510 = vrot.lane.b32.xlu0 %v4491, 4
      %v4511 = vpop.permute.xlu0 %4510
      %4512 = vrot.lane.b32.xlu0 %v4493, 4
      %v4513 = vpop.permute.xlu0 %4512
      %4514 = vrot.lane.b32.xlu0 %v4495, 4
      %v4515 = vpop.permute.xlu0 %4514
      %v4517 = vsel %vm1900, %v4358, %v4456
      %v4519 = vsel %vm1900, %v4359, %v4458
      %v4521 = vsel %vm1900, %v4360, %v4460
      %v4523 = vsel %vm1900, %v4361, %v4462
      %v4525 = vsel %vm1900, %v4362, %v4464
      %v4527 = vsel %vm1900, %v4363, %v4466
      %v4529 = vsel %vm1900, %v4364, %v4468
      %v4531 = vsel %vm1900, %v4365, %v4470
      %v4533 = vsel %vm1900, %v4366, %v4472
      %v4535 = vsel %vm1900, %v4367, %v4474
      %v4537 = vsel %vm1973, %v4517, %v4497
      %v4539 = vsel %vm1973, %v4519, %v4499
      %v4541 = vsel %vm1973, %v4521, %v4501
      %v4543 = vsel %vm1973, %v4523, %v4503
      %v4545 = vsel %vm1973, %v4525, %v4505
      %v4547 = vsel %vm1973, %v4527, %v4507
      %v4549 = vsel %vm1973, %v4529, %v4509
      %v4551 = vsel %vm1973, %v4531, %v4511
      %v4553 = vsel %vm1973, %v4533, %v4513
      %v4555 = vsel %vm1973, %v4535, %v4515
      %v4556 = vld [vmem:[%s4] sm:$0x7]
      %s4557 = scalar_lea.vmem %s4, 4
      %v4558 = vld [vmem:[%s4557] sm:$0x7]
      %v4559 = vsel %vm2049, %v4539, 0
      %v4561 = vsel %vm2049, %v4541, 0
      %v4563 = vsel %vm2049, %v4543, 0
      %v4565 = vsel %vm2049, %v4545, 0
      %v4567 = vsel %vm2049, %v4547, 0
      %v4569 = vsel %vm2049, %v4549, 0
      %v4571 = vsel %vm2049, %v4551, 0
      %v4573 = vsel %vm2049, %v4553, 0
      %v4576 = vsel %vm2114, %v4558, 0
      %4578 = vmatpush.bf16.msra.mxu0 0
      %4579 = vmatpush.bf16.msra.mxu0 0
      %4580 = vmatpush.bf16.msra.mxu0 0
      %4581 = vmatpush.bf16.msra.mxu0 0
      %4582 = vmatpush.bf16.msra.mxu0 0
      %4583 = vmatpush.bf16.msra.mxu0 0
      %4584 = vmatpush.bf16.msra.mxu0 0
      %4585 = vmatpush.bf16.msra.mxu0 %v4576
      %4586 = vmatmul.bf16.gmra.mxu0 %v4559
      %v4587 = vpop.f32.mrf.mxu0
      %v4588 = vadd.f32 0.0, %v4587
      %v4589 = vpop.f32.mrf.mxu0
      %4590 = vmatmul.bf16.gmra.mxu0 %v4561
      %v4591 = vpop.f32.mrf.mxu0
      %v4592 = vadd.f32 0.0, %v4591
      %v4593 = vpop.f32.mrf.mxu0
      %4594 = vmatmul.bf16.gmra.mxu0 %v4563
      %v4595 = vpop.f32.mrf.mxu0
      %v4596 = vadd.f32 0.0, %v4595
      %v4597 = vpop.f32.mrf.mxu0
      %4598 = vmatmul.bf16.gmra.mxu0 %v4565
      %v4599 = vpop.f32.mrf.mxu0
      %v4600 = vadd.f32 0.0, %v4599
      %v4601 = vpop.f32.mrf.mxu0
      %4602 = vmatmul.bf16.gmra.mxu0 %v4567
      %v4603 = vpop.f32.mrf.mxu0
      %v4604 = vadd.f32 0.0, %v4603
      %v4605 = vpop.f32.mrf.mxu0
      %4606 = vmatmul.bf16.gmra.mxu0 %v4569
      %v4607 = vpop.f32.mrf.mxu0
      %v4608 = vadd.f32 0.0, %v4607
      %v4609 = vpop.f32.mrf.mxu0
      %4610 = vmatmul.bf16.gmra.mxu0 %v4571
      %v4611 = vpop.f32.mrf.mxu0
      %v4612 = vadd.f32 0.0, %v4611
      %v4613 = vpop.f32.mrf.mxu0
      %4614 = vmatmul.bf16.gmra.mxu0 %v4573
      %v4615 = vpop.f32.mrf.mxu0
      %v4616 = vadd.f32 0.0, %v4615
      %v4617 = vpop.f32.mrf.mxu0
      %4618 = vdwg.mxu0
      %v4619 = vsel %vm2049, %v4537, 0
      %v4622 = vsel %vm2114, %v4556, 0
      %4624 = vmatpush.bf16.msra.mxu0 0
      %4625 = vmatpush.bf16.msra.mxu0 0
      %4626 = vmatpush.bf16.msra.mxu0 0
      %4627 = vmatpush.bf16.msra.mxu0 0
      %4628 = vmatpush.bf16.msra.mxu0 0
      %4629 = vmatpush.bf16.msra.mxu0 0
      %4630 = vmatpush.bf16.msra.mxu0 0
      %4631 = vmatpush.bf16.msra.mxu0 %v4622
      %4632 = vmatmul.bf16.gmra.mxu0 %v4619
      %v4633 = vpop.f32.mrf.mxu0
      %v4634 = vadd.f32 %v4588, %v4633
      %v4635 = vpop.f32.mrf.mxu0
      %4636 = vmatmul.bf16.gmra.mxu0 %v4559
      %v4637 = vpop.f32.mrf.mxu0
      %v4638 = vadd.f32 %v4592, %v4637
      %v4639 = vpop.f32.mrf.mxu0
      %4640 = vmatmul.bf16.gmra.mxu0 %v4561
      %v4641 = vpop.f32.mrf.mxu0
      %v4642 = vadd.f32 %v4596, %v4641
      %v4643 = vpop.f32.mrf.mxu0
      %4644 = vmatmul.bf16.gmra.mxu0 %v4563
      %v4645 = vpop.f32.mrf.mxu0
      %v4646 = vadd.f32 %v4600, %v4645
      %v4647 = vpop.f32.mrf.mxu0
      %4648 = vmatmul.bf16.gmra.mxu0 %v4565
      %v4649 = vpop.f32.mrf.mxu0
      %v4650 = vadd.f32 %v4604, %v4649
      %v4651 = vpop.f32.mrf.mxu0
      %4652 = vmatmul.bf16.gmra.mxu0 %v4567
      %v4653 = vpop.f32.mrf.mxu0
      %v4654 = vadd.f32 %v4608, %v4653
      %v4655 = vpop.f32.mrf.mxu0
      %4656 = vmatmul.bf16.gmra.mxu0 %v4569
      %v4657 = vpop.f32.mrf.mxu0
      %v4658 = vadd.f32 %v4612, %v4657
      %v4659 = vpop.f32.mrf.mxu0
      %4660 = vmatmul.bf16.gmra.mxu0 %v4571
      %v4661 = vpop.f32.mrf.mxu0
      %v4662 = vadd.f32 %v4616, %v4661
      %v4663 = vpop.f32.mrf.mxu0
      %4664 = vdwg.mxu0
      %s4665 = scalar_lea.vmem %s4, 8
      %v4666 = vld [vmem:[%s4665] sm:$0x7]
      %v4667 = vsel %vm2049, %v4555, 0
      %v4670 = vsel %vm2114, %v4666, 0
      %4672 = vmatpush.bf16.msra.mxu0 0
      %4673 = vmatpush.bf16.msra.mxu0 0
      %4674 = vmatpush.bf16.msra.mxu0 0
      %4675 = vmatpush.bf16.msra.mxu0 0
      %4676 = vmatpush.bf16.msra.mxu0 0
      %4677 = vmatpush.bf16.msra.mxu0 0
      %4678 = vmatpush.bf16.msra.mxu0 0
      %4679 = vmatpush.bf16.msra.mxu0 %v4670
      %4680 = vmatmul.bf16.gmra.mxu0 %v4561
      %v4681 = vpop.f32.mrf.mxu0
      %v4682 = vadd.f32 0.0, %v4681
      %v4683 = vpop.f32.mrf.mxu0
      %4684 = vmatmul.bf16.gmra.mxu0 %v4563
      %v4685 = vpop.f32.mrf.mxu0
      %v4686 = vadd.f32 0.0, %v4685
      %v4687 = vpop.f32.mrf.mxu0
      %4688 = vmatmul.bf16.gmra.mxu0 %v4565
      %v4689 = vpop.f32.mrf.mxu0
      %v4690 = vadd.f32 0.0, %v4689
      %v4691 = vpop.f32.mrf.mxu0
      %4692 = vmatmul.bf16.gmra.mxu0 %v4567
      %v4693 = vpop.f32.mrf.mxu0
      %v4694 = vadd.f32 0.0, %v4693
      %v4695 = vpop.f32.mrf.mxu0
      %4696 = vmatmul.bf16.gmra.mxu0 %v4569
      %v4697 = vpop.f32.mrf.mxu0
      %v4698 = vadd.f32 0.0, %v4697
      %v4699 = vpop.f32.mrf.mxu0
      %4700 = vmatmul.bf16.gmra.mxu0 %v4571
      %v4701 = vpop.f32.mrf.mxu0
      %v4702 = vadd.f32 0.0, %v4701
      %v4703 = vpop.f32.mrf.mxu0
      %4704 = vmatmul.bf16.gmra.mxu0 %v4573
      %v4705 = vpop.f32.mrf.mxu0
      %v4706 = vadd.f32 0.0, %v4705
      %v4707 = vpop.f32.mrf.mxu0
      %4708 = vmatmul.bf16.gmra.mxu0 %v4667
      %v4709 = vpop.f32.mrf.mxu0
      %v4710 = vadd.f32 0.0, %v4709
      %v4711 = vpop.f32.mrf.mxu0
      %4712 = vdwg.mxu0
      %v4713 = vadd.f32 %v4634, %v4682
      %v4714 = vadd.f32 %v4638, %v4686
      %v4715 = vadd.f32 %v4642, %v4690
      %v4716 = vadd.f32 %v4646, %v4694
      %v4717 = vadd.f32 %v4650, %v4698
      %v4718 = vadd.f32 %v4654, %v4702
      %v4719 = vadd.f32 %v4658, %v4706
      %v4720 = vadd.f32 %v4662, %v4710
      %v4729 = vrot.slane %v2993, 1
      %v4730 = vrot.slane %v2993, 2
      %v4731 = vrot.slane %v2993, 3
      %v4732 = vrot.slane %v2993, 4
      %v4733 = vrot.slane %v2993, 5
      %v4734 = vrot.slane %v2993, 6
      %v4735 = vrot.slane %v2993, 7
      %v4736 = vrot.slane %v2994, 1
      %v4737 = vrot.slane %v2994, 2
      %v4738 = vrot.slane %v2994, 3
      %v4739 = vrot.slane %v2994, 4
      %v4740 = vrot.slane %v2994, 5
      %v4741 = vrot.slane %v2994, 6
      %v4742 = vrot.slane %v2994, 7
      %v4743 = vrot.slane %v2995, 1
      %v4744 = vrot.slane %v2995, 2
      %v4745 = vrot.slane %v2995, 3
      %v4746 = vrot.slane %v2995, 4
      %v4747 = vrot.slane %v2995, 5
      %v4748 = vrot.slane %v2995, 6
      %v4749 = vrot.slane %v2995, 7
      %v4750 = vrot.slane %v2996, 1
      %v4751 = vrot.slane %v2996, 2
      %v4752 = vrot.slane %v2996, 3
      %v4753 = vrot.slane %v2996, 4
      %v4754 = vrot.slane %v2996, 5
      %v4755 = vrot.slane %v2996, 6
      %v4756 = vrot.slane %v2996, 7
      %v4757 = vrot.slane %v2997, 1
      %v4758 = vrot.slane %v2997, 2
      %v4759 = vrot.slane %v2997, 3
      %v4760 = vrot.slane %v2997, 4
      %v4761 = vrot.slane %v2997, 5
      %v4762 = vrot.slane %v2997, 6
      %v4763 = vrot.slane %v2997, 7
      %v4764 = vrot.slane %v2998, 1
      %v4765 = vrot.slane %v2998, 2
      %v4766 = vrot.slane %v2998, 3
      %v4767 = vrot.slane %v2998, 4
      %v4768 = vrot.slane %v2998, 5
      %v4769 = vrot.slane %v2998, 6
      %v4770 = vrot.slane %v2998, 7
      %v4771 = vrot.slane %v2999, 1
      %v4772 = vrot.slane %v2999, 2
      %v4773 = vrot.slane %v2999, 3
      %v4774 = vrot.slane %v2999, 4
      %v4775 = vrot.slane %v2999, 5
      %v4776 = vrot.slane %v2999, 6
      %v4777 = vrot.slane %v2999, 7
      %v4778 = vrot.slane %v3000, 1
      %v4779 = vrot.slane %v3000, 2
      %v4780 = vrot.slane %v3000, 3
      %v4781 = vrot.slane %v3000, 4
      %v4782 = vrot.slane %v3000, 5
      %v4783 = vrot.slane %v3000, 6
      %v4784 = vrot.slane %v3000, 7
      %v4785 = vperm.slane %v2993, 0
      %v4786 = vperm.slane %v4729, 0
      %v4787 = vperm.slane %v4730, 0
      %v4788 = vperm.slane %v4731, 0
      %v4789 = vperm.slane %v4732, 0
      %v4790 = vperm.slane %v4733, 0
      %v4791 = vperm.slane %v4734, 0
      %v4792 = vperm.slane %v4735, 0
      %v4793 = vperm.slane %v2994, 0
      %v4794 = vperm.slane %v4736, 0
      %v4795 = vperm.slane %v4737, 0
      %v4796 = vperm.slane %v4738, 0
      %v4797 = vperm.slane %v4739, 0
      %v4798 = vperm.slane %v4740, 0
      %v4799 = vperm.slane %v4741, 0
      %v4800 = vperm.slane %v4742, 0
      %v4801 = vperm.slane %v2995, 0
      %v4802 = vperm.slane %v4743, 0
      %v4803 = vperm.slane %v4744, 0
      %v4804 = vperm.slane %v4745, 0
      %v4805 = vperm.slane %v4746, 0
      %v4806 = vperm.slane %v4747, 0
      %v4807 = vperm.slane %v4748, 0
      %v4808 = vperm.slane %v4749, 0
      %v4809 = vperm.slane %v2996, 0
      %v4810 = vperm.slane %v4750, 0
      %v4811 = vperm.slane %v4751, 0
      %v4812 = vperm.slane %v4752, 0
      %v4813 = vperm.slane %v4753, 0
      %v4814 = vperm.slane %v4754, 0
      %v4815 = vperm.slane %v4755, 0
      %v4816 = vperm.slane %v4756, 0
      %v4817 = vperm.slane %v2997, 0
      %v4818 = vperm.slane %v4757, 0
      %v4819 = vperm.slane %v4758, 0
      %v4820 = vperm.slane %v4759, 0
      %v4821 = vperm.slane %v4760, 0
      %v4822 = vperm.slane %v4761, 0
      %v4823 = vperm.slane %v4762, 0
      %v4824 = vperm.slane %v4763, 0
      %v4825 = vperm.slane %v2998, 0
      %v4826 = vperm.slane %v4764, 0
      %v4827 = vperm.slane %v4765, 0
      %v4828 = vperm.slane %v4766, 0
      %v4829 = vperm.slane %v4767, 0
      %v4830 = vperm.slane %v4768, 0
      %v4831 = vperm.slane %v4769, 0
      %v4832 = vperm.slane %v4770, 0
      %v4833 = vperm.slane %v2999, 0
      %v4834 = vperm.slane %v4771, 0
      %v4835 = vperm.slane %v4772, 0
      %v4836 = vperm.slane %v4773, 0
      %v4837 = vperm.slane %v4774, 0
      %v4838 = vperm.slane %v4775, 0
      %v4839 = vperm.slane %v4776, 0
      %v4840 = vperm.slane %v4777, 0
      %v4841 = vperm.slane %v3000, 0
      %v4842 = vperm.slane %v4778, 0
      %v4843 = vperm.slane %v4779, 0
      %v4844 = vperm.slane %v4780, 0
      %v4845 = vperm.slane %v4781, 0
      %v4846 = vperm.slane %v4782, 0
      %v4847 = vperm.slane %v4783, 0
      %v4848 = vperm.slane %v4784, 0
      %4849 = vst [vmem:[#allocation1] ss:$4 sm:$0xff] %v4785
      %s4850 = scalar_lea.vmem [#allocation1], 1
      %4851 = vst [vmem:[%s4850] ss:$4 sm:$0xff] %v4786
      %s4852 = scalar_lea.vmem [#allocation1], 2
      %4853 = vst [vmem:[%s4852] ss:$4 sm:$0xff] %v4787
      %s4854 = scalar_lea.vmem [#allocation1], 3
      %4855 = vst [vmem:[%s4854] ss:$4 sm:$0xff] %v4788
      %s4856 = scalar_lea.vmem [#allocation1], 32
      %4857 = vst [vmem:[%s4856] ss:$4 sm:$0xff] %v4789
      %s4858 = scalar_lea.vmem [#allocation1], 33
      %4859 = vst [vmem:[%s4858] ss:$4 sm:$0xff] %v4790
      %s4860 = scalar_lea.vmem [#allocation1], 34
      %4861 = vst [vmem:[%s4860] ss:$4 sm:$0xff] %v4791
      %s4862 = scalar_lea.vmem [#allocation1], 35
      %4863 = vst [vmem:[%s4862] ss:$4 sm:$0xff] %v4792
      %v4864 = vld.sshfl [vmem:[#allocation1] sm:$0xff pattern:$0x73625140]
      %v4865 = vld.sshfl [vmem:[#allocation1 + $0x20] sm:$0xff pattern:$0x73625140]
      %4866 = vst [vmem:[#allocation1] ss:$4 sm:$0xff] %v4785
      %4867 = vst [vmem:[%s4850] ss:$4 sm:$0xff] %v4786
      %4868 = vst [vmem:[%s4852] ss:$4 sm:$0xff] %v4787
      %4869 = vst [vmem:[%s4854] ss:$4 sm:$0xff] %v4788
      %4870 = vst [vmem:[%s4856] ss:$4 sm:$0xff] %v4789
      %4871 = vst [vmem:[%s4858] ss:$4 sm:$0xff] %v4790
      %4872 = vst [vmem:[%s4860] ss:$4 sm:$0xff] %v4791
      %4873 = vst [vmem:[%s4862] ss:$4 sm:$0xff] %v4792
      %v4874 = vld.sshfl [vmem:[#allocation1] sm:$0xff pattern:$0x73625140]
      %v4875 = vld.sshfl [vmem:[#allocation1 + $0x20] sm:$0xff pattern:$0x73625140]
      %4876 = vst [vmem:[#allocation1] ss:$4 sm:$0xff] %v4793
      %4877 = vst [vmem:[%s4850] ss:$4 sm:$0xff] %v4794
      %4878 = vst [vmem:[%s4852] ss:$4 sm:$0xff] %v4795
      %4879 = vst [vmem:[%s4854] ss:$4 sm:$0xff] %v4796
      %4880 = vst [vmem:[%s4856] ss:$4 sm:$0xff] %v4797
      %4881 = vst [vmem:[%s4858] ss:$4 sm:$0xff] %v4798
      %4882 = vst [vmem:[%s4860] ss:$4 sm:$0xff] %v4799
      %4883 = vst [vmem:[%s4862] ss:$4 sm:$0xff] %v4800
      %v4884 = vld.sshfl [vmem:[#allocation1] sm:$0xff pattern:$0x73625140]
      %v4885 = vld.sshfl [vmem:[#allocation1 + $0x20] sm:$0xff pattern:$0x73625140]
      %4886 = vst [vmem:[#allocation1] ss:$4 sm:$0xff] %v4793
      %4887 = vst [vmem:[%s4850] ss:$4 sm:$0xff] %v4794
      %4888 = vst [vmem:[%s4852] ss:$4 sm:$0xff] %v4795
      %4889 = vst [vmem:[%s4854] ss:$4 sm:$0xff] %v4796
      %4890 = vst [vmem:[%s4856] ss:$4 sm:$0xff] %v4797
      %4891 = vst [vmem:[%s4858] ss:$4 sm:$0xff] %v4798
      %4892 = vst [vmem:[%s4860] ss:$4 sm:$0xff] %v4799
      %4893 = vst [vmem:[%s4862] ss:$4 sm:$0xff] %v4800
      %v4894 = vld.sshfl [vmem:[#allocation1] sm:$0xff pattern:$0x73625140]
      %v4895 = vld.sshfl [vmem:[#allocation1 + $0x20] sm:$0xff pattern:$0x73625140]
      %4896 = vst [vmem:[#allocation1] ss:$4 sm:$0xff] %v4801
      %4897 = vst [vmem:[%s4850] ss:$4 sm:$0xff] %v4802
      %4898 = vst [vmem:[%s4852] ss:$4 sm:$0xff] %v4803
      %4899 = vst [vmem:[%s4854] ss:$4 sm:$0xff] %v4804
      %4900 = vst [vmem:[%s4856] ss:$4 sm:$0xff] %v4805
      %4901 = vst [vmem:[%s4858] ss:$4 sm:$0xff] %v4806
      %4902 = vst [vmem:[%s4860] ss:$4 sm:$0xff] %v4807
      %4903 = vst [vmem:[%s4862] ss:$4 sm:$0xff] %v4808
      %v4904 = vld.sshfl [vmem:[#allocation1] sm:$0xff pattern:$0x73625140]
      %v4905 = vld.sshfl [vmem:[#allocation1 + $0x20] sm:$0xff pattern:$0x73625140]
      %4906 = vst [vmem:[#allocation1] ss:$4 sm:$0xff] %v4801
      %4907 = vst [vmem:[%s4850] ss:$4 sm:$0xff] %v4802
      %4908 = vst [vmem:[%s4852] ss:$4 sm:$0xff] %v4803
      %4909 = vst [vmem:[%s4854] ss:$4 sm:$0xff] %v4804
      %4910 = vst [vmem:[%s4856] ss:$4 sm:$0xff] %v4805
      %4911 = vst [vmem:[%s4858] ss:$4 sm:$0xff] %v4806
      %4912 = vst [vmem:[%s4860] ss:$4 sm:$0xff] %v4807
      %4913 = vst [vmem:[%s4862] ss:$4 sm:$0xff] %v4808
      %v4914 = vld.sshfl [vmem:[#allocation1] sm:$0xff pattern:$0x73625140]
      %v4915 = vld.sshfl [vmem:[#allocation1 + $0x20] sm:$0xff pattern:$0x73625140]
      %4916 = vst [vmem:[#allocation1] ss:$4 sm:$0xff] %v4809
      %4917 = vst [vmem:[%s4850] ss:$4 sm:$0xff] %v4810
      %4918 = vst [vmem:[%s4852] ss:$4 sm:$0xff] %v4811
      %4919 = vst [vmem:[%s4854] ss:$4 sm:$0xff] %v4812
      %4920 = vst [vmem:[%s4856] ss:$4 sm:$0xff] %v4813
      %4921 = vst [vmem:[%s4858] ss:$4 sm:$0xff] %v4814
      %4922 = vst [vmem:[%s4860] ss:$4 sm:$0xff] %v4815
      %4923 = vst [vmem:[%s4862] ss:$4 sm:$0xff] %v4816
      %v4924 = vld.sshfl [vmem:[#allocation1] sm:$0xff pattern:$0x73625140]
      %v4925 = vld.sshfl [vmem:[#allocation1 + $0x20] sm:$0xff pattern:$0x73625140]
      %4926 = vst [vmem:[#allocation1] ss:$4 sm:$0xff] %v4809
      %4927 = vst [vmem:[%s4850] ss:$4 sm:$0xff] %v4810
      %4928 = vst [vmem:[%s4852] ss:$4 sm:$0xff] %v4811
      %4929 = vst [vmem:[%s4854] ss:$4 sm:$0xff] %v4812
      %4930 = vst [vmem:[%s4856] ss:$4 sm:$0xff] %v4813
      %4931 = vst [vmem:[%s4858] ss:$4 sm:$0xff] %v4814
      %4932 = vst [vmem:[%s4860] ss:$4 sm:$0xff] %v4815
      %4933 = vst [vmem:[%s4862] ss:$4 sm:$0xff] %v4816
      %v4934 = vld.sshfl [vmem:[#allocation1] sm:$0xff pattern:$0x73625140]
      %v4935 = vld.sshfl [vmem:[#allocation1 + $0x20] sm:$0xff pattern:$0x73625140]
      %4936 = vst [vmem:[#allocation1] ss:$4 sm:$0xff] %v4817
      %4937 = vst [vmem:[%s4850] ss:$4 sm:$0xff] %v4818
      %4938 = vst [vmem:[%s4852] ss:$4 sm:$0xff] %v4819
      %4939 = vst [vmem:[%s4854] ss:$4 sm:$0xff] %v4820
      %4940 = vst [vmem:[%s4856] ss:$4 sm:$0xff] %v4821
      %4941 = vst [vmem:[%s4858] ss:$4 sm:$0xff] %v4822
      %4942 = vst [vmem:[%s4860] ss:$4 sm:$0xff] %v4823
      %4943 = vst [vmem:[%s4862] ss:$4 sm:$0xff] %v4824
      %v4944 = vld.sshfl [vmem:[#allocation1] sm:$0xff pattern:$0x73625140]
      %v4945 = vld.sshfl [vmem:[#allocation1 + $0x20] sm:$0xff pattern:$0x73625140]
      %4946 = vst [vmem:[#allocation1] ss:$4 sm:$0xff] %v4817
      %4947 = vst [vmem:[%s4850] ss:$4 sm:$0xff] %v4818
      %4948 = vst [vmem:[%s4852] ss:$4 sm:$0xff] %v4819
      %4949 = vst [vmem:[%s4854] ss:$4 sm:$0xff] %v4820
      %4950 = vst [vmem:[%s4856] ss:$4 sm:$0xff] %v4821
      %4951 = vst [vmem:[%s4858] ss:$4 sm:$0xff] %v4822
      %4952 = vst [vmem:[%s4860] ss:$4 sm:$0xff] %v4823
      %4953 = vst [vmem:[%s4862] ss:$4 sm:$0xff] %v4824
      %v4954 = vld.sshfl [vmem:[#allocation1] sm:$0xff pattern:$0x73625140]
      %v4955 = vld.sshfl [vmem:[#allocation1 + $0x20] sm:$0xff pattern:$0x73625140]
      %4956 = vst [vmem:[#allocation1] ss:$4 sm:$0xff] %v4825
      %4957 = vst [vmem:[%s4850] ss:$4 sm:$0xff] %v4826
      %4958 = vst [vmem:[%s4852] ss:$4 sm:$0xff] %v4827
      %4959 = vst [vmem:[%s4854] ss:$4 sm:$0xff] %v4828
      %4960 = vst [vmem:[%s4856] ss:$4 sm:$0xff] %v4829
      %4961 = vst [vmem:[%s4858] ss:$4 sm:$0xff] %v4830
      %4962 = vst [vmem:[%s4860] ss:$4 sm:$0xff] %v4831
      %4963 = vst [vmem:[%s4862] ss:$4 sm:$0xff] %v4832
      %v4964 = vld.sshfl [vmem:[#allocation1] sm:$0xff pattern:$0x73625140]
      %v4965 = vld.sshfl [vmem:[#allocation1 + $0x20] sm:$0xff pattern:$0x73625140]
      %4966 = vst [vmem:[#allocation1] ss:$4 sm:$0xff] %v4825
      %4967 = vst [vmem:[%s4850] ss:$4 sm:$0xff] %v4826
      %4968 = vst [vmem:[%s4852] ss:$4 sm:$0xff] %v4827
      %4969 = vst [vmem:[%s4854] ss:$4 sm:$0xff] %v4828
      %4970 = vst [vmem:[%s4856] ss:$4 sm:$0xff] %v4829
      %4971 = vst [vmem:[%s4858] ss:$4 sm:$0xff] %v4830
      %4972 = vst [vmem:[%s4860] ss:$4 sm:$0xff] %v4831
      %4973 = vst [vmem:[%s4862] ss:$4 sm:$0xff] %v4832
      %v4974 = vld.sshfl [vmem:[#allocation1] sm:$0xff pattern:$0x73625140]
      %v4975 = vld.sshfl [vmem:[#allocation1 + $0x20] sm:$0xff pattern:$0x73625140]
      %4976 = vst [vmem:[#allocation1] ss:$4 sm:$0xff] %v4833
      %4977 = vst [vmem:[%s4850] ss:$4 sm:$0xff] %v4834
      %4978 = vst [vmem:[%s4852] ss:$4 sm:$0xff] %v4835
      %4979 = vst [vmem:[%s4854] ss:$4 sm:$0xff] %v4836
      %4980 = vst [vmem:[%s4856] ss:$4 sm:$0xff] %v4837
      %4981 = vst [vmem:[%s4858] ss:$4 sm:$0xff] %v4838
      %4982 = vst [vmem:[%s4860] ss:$4 sm:$0xff] %v4839
      %4983 = vst [vmem:[%s4862] ss:$4 sm:$0xff] %v4840
      %v4984 = vld.sshfl [vmem:[#allocation1] sm:$0xff pattern:$0x73625140]
      %v4985 = vld.sshfl [vmem:[#allocation1 + $0x20] sm:$0xff pattern:$0x73625140]
      %4986 = vst [vmem:[#allocation1] ss:$4 sm:$0xff] %v4833
      %4987 = vst [vmem:[%s4850] ss:$4 sm:$0xff] %v4834
      %4988 = vst [vmem:[%s4852] ss:$4 sm:$0xff] %v4835
      %4989 = vst [vmem:[%s4854] ss:$4 sm:$0xff] %v4836
      %4990 = vst [vmem:[%s4856] ss:$4 sm:$0xff] %v4837
      %4991 = vst [vmem:[%s4858] ss:$4 sm:$0xff] %v4838
      %4992 = vst [vmem:[%s4860] ss:$4 sm:$0xff] %v4839
      %4993 = vst [vmem:[%s4862] ss:$4 sm:$0xff] %v4840
      %v4994 = vld.sshfl [vmem:[#allocation1] sm:$0xff pattern:$0x73625140]
      %v4995 = vld.sshfl [vmem:[#allocation1 + $0x20] sm:$0xff pattern:$0x73625140]
      %4996 = vst [vmem:[#allocation1] ss:$4 sm:$0xff] %v4841
      %4997 = vst [vmem:[%s4850] ss:$4 sm:$0xff] %v4842
      %4998 = vst [vmem:[%s4852] ss:$4 sm:$0xff] %v4843
      %4999 = vst [vmem:[%s4854] ss:$4 sm:$0xff] %v4844
      %5000 = vst [vmem:[%s4856] ss:$4 sm:$0xff] %v4845
      %5001 = vst [vmem:[%s4858] ss:$4 sm:$0xff] %v4846
      %5002 = vst [vmem:[%s4860] ss:$4 sm:$0xff] %v4847
      %5003 = vst [vmem:[%s4862] ss:$4 sm:$0xff] %v4848
      %v5004 = vld.sshfl [vmem:[#allocation1] sm:$0xff pattern:$0x73625140]
      %v5005 = vld.sshfl [vmem:[#allocation1 + $0x20] sm:$0xff pattern:$0x73625140]
      %5006 = vst [vmem:[#allocation1] ss:$4 sm:$0xff] %v4841
      %5007 = vst [vmem:[%s4850] ss:$4 sm:$0xff] %v4842
      %5008 = vst [vmem:[%s4852] ss:$4 sm:$0xff] %v4843
      %5009 = vst [vmem:[%s4854] ss:$4 sm:$0xff] %v4844
      %5010 = vst [vmem:[%s4856] ss:$4 sm:$0xff] %v4845
      %5011 = vst [vmem:[%s4858] ss:$4 sm:$0xff] %v4846
      %5012 = vst [vmem:[%s4860] ss:$4 sm:$0xff] %v4847
      %5013 = vst [vmem:[%s4862] ss:$4 sm:$0xff] %v4848
      %v5014 = vld.sshfl [vmem:[#allocation1] sm:$0xff pattern:$0x73625140]
      %v5015 = vld.sshfl [vmem:[#allocation1 + $0x20] sm:$0xff pattern:$0x73625140]
      %5016 = vrot.lane.b32.xlu0 %v4864, 126
      %v5017 = vpop.permute.xlu0 %5016
      %5018 = vrot.lane.b32.xlu0 %v4865, 126
      %v5019 = vpop.permute.xlu0 %5018
      %5020 = vrot.lane.b32.xlu0 %v4874, 126
      %v5021 = vpop.permute.xlu0 %5020
      %5022 = vrot.lane.b32.xlu0 %v4875, 126
      %v5023 = vpop.permute.xlu0 %5022
      %5024 = vrot.lane.b32.xlu0 %v4884, 126
      %v5025 = vpop.permute.xlu0 %5024
      %5026 = vrot.lane.b32.xlu0 %v4885, 126
      %v5027 = vpop.permute.xlu0 %5026
      %5028 = vrot.lane.b32.xlu0 %v4894, 126
      %v5029 = vpop.permute.xlu0 %5028
      %5030 = vrot.lane.b32.xlu0 %v4895, 126
      %v5031 = vpop.permute.xlu0 %5030
      %5032 = vrot.lane.b32.xlu0 %v4904, 126
      %v5033 = vpop.permute.xlu0 %5032
      %5034 = vrot.lane.b32.xlu0 %v4905, 126
      %v5035 = vpop.permute.xlu0 %5034
      %5036 = vrot.lane.b32.xlu0 %v4914, 126
      %v5037 = vpop.permute.xlu0 %5036
      %5038 = vrot.lane.b32.xlu0 %v4915, 126
      %v5039 = vpop.permute.xlu0 %5038
      %5040 = vrot.lane.b32.xlu0 %v4924, 126
      %v5041 = vpop.permute.xlu0 %5040
      %5042 = vrot.lane.b32.xlu0 %v4925, 126
      %v5043 = vpop.permute.xlu0 %5042
      %5044 = vrot.lane.b32.xlu0 %v4934, 126
      %v5045 = vpop.permute.xlu0 %5044
      %5046 = vrot.lane.b32.xlu0 %v4935, 126
      %v5047 = vpop.permute.xlu0 %5046
      %5048 = vrot.lane.b32.xlu0 %v4944, 126
      %v5049 = vpop.permute.xlu0 %5048
      %5050 = vrot.lane.b32.xlu0 %v4945, 126
      %v5051 = vpop.permute.xlu0 %5050
      %5052 = vrot.lane.b32.xlu0 %v4954, 126
      %v5053 = vpop.permute.xlu0 %5052
      %5054 = vrot.lane.b32.xlu0 %v4955, 126
      %v5055 = vpop.permute.xlu0 %5054
      %5056 = vrot.lane.b32.xlu0 %v4964, 126
      %v5057 = vpop.permute.xlu0 %5056
      %5058 = vrot.lane.b32.xlu0 %v4965, 126
      %v5059 = vpop.permute.xlu0 %5058
      %5060 = vrot.lane.b32.xlu0 %v4974, 126
      %v5061 = vpop.permute.xlu0 %5060
      %5062 = vrot.lane.b32.xlu0 %v4975, 126
      %v5063 = vpop.permute.xlu0 %5062
      %5064 = vrot.lane.b32.xlu0 %v4984, 126
      %v5065 = vpop.permute.xlu0 %5064
      %5066 = vrot.lane.b32.xlu0 %v4985, 126
      %v5067 = vpop.permute.xlu0 %5066
      %5068 = vrot.lane.b32.xlu0 %v4994, 126
      %v5069 = vpop.permute.xlu0 %5068
      %5070 = vrot.lane.b32.xlu0 %v4995, 126
      %v5071 = vpop.permute.xlu0 %5070
      %5072 = vrot.lane.b32.xlu0 %v5004, 126
      %v5073 = vpop.permute.xlu0 %5072
      %5074 = vrot.lane.b32.xlu0 %v5005, 126
      %v5075 = vpop.permute.xlu0 %5074
      %5076 = vrot.lane.b32.xlu0 %v5014, 126
      %v5077 = vpop.permute.xlu0 %5076
      %5078 = vrot.lane.b32.xlu0 %v5015, 126
      %v5079 = vpop.permute.xlu0 %5078
      %v5112 = vadd.f32 %v2545, %v5017
      %v5113 = vadd.f32 %v2546, %v5019
      %v5114 = vadd.f32 %v2547, %v5021
      %v5115 = vadd.f32 %v2548, %v5023
      %v5116 = vadd.f32 %v2549, %v5025
      %v5117 = vadd.f32 %v2550, %v5027
      %v5118 = vadd.f32 %v2551, %v5029
      %v5119 = vadd.f32 %v2552, %v5031
      %v5120 = vadd.f32 %v2553, %v5033
      %v5121 = vadd.f32 %v2554, %v5035
      %v5122 = vadd.f32 %v2555, %v5037
      %v5123 = vadd.f32 %v2556, %v5039
      %v5124 = vadd.f32 %v2557, %v5041
      %v5125 = vadd.f32 %v2558, %v5043
      %v5126 = vadd.f32 %v2559, %v5045
      %v5127 = vadd.f32 %v2560, %v5047
      %v5128 = vadd.f32 %v2561, %v5049
      %v5129 = vadd.f32 %v2562, %v5051
      %v5130 = vadd.f32 %v2563, %v5053
      %v5131 = vadd.f32 %v2564, %v5055
      %v5132 = vadd.f32 %v2565, %v5057
      %v5133 = vadd.f32 %v2566, %v5059
      %v5134 = vadd.f32 %v2567, %v5061
      %v5135 = vadd.f32 %v2568, %v5063
      %v5136 = vadd.f32 %v2569, %v5065
      %v5137 = vadd.f32 %v2570, %v5067
      %v5138 = vadd.f32 %v2571, %v5069
      %v5139 = vadd.f32 %v2572, %v5071
      %v5140 = vadd.f32 %v2573, %v5073
      %v5141 = vadd.f32 %v2574, %v5075
      %v5142 = vadd.f32 %v2575, %v5077
      %v5143 = vadd.f32 %v2576, %v5079
      %v5144 = vadd.f32 %v2993, %v4713
      %v5145 = vadd.f32 %v2994, %v4714
      %v5146 = vadd.f32 %v2995, %v4715
      %v5147 = vadd.f32 %v2996, %v4716
      %v5148 = vadd.f32 %v2997, %v4717
      %v5149 = vadd.f32 %v2998, %v4718
      %v5150 = vadd.f32 %v2999, %v4719
      %v5151 = vadd.f32 %v3000, %v4720
      %v5152 = vpack.c.bf16 %v5112, %v5112
      %v5153 = vpack.c.bf16 %v5113, %v5113
      %v5154 = vpack.c.bf16 %v5114, %v5114
      %v5155 = vpack.c.bf16 %v5115, %v5115
      %v5156 = vpack.c.bf16 %v5116, %v5116
      %v5157 = vpack.c.bf16 %v5117, %v5117
      %v5158 = vpack.c.bf16 %v5118, %v5118
      %v5159 = vpack.c.bf16 %v5119, %v5119
      %v5160 = vpack.c.bf16 %v5120, %v5120
      %v5161 = vpack.c.bf16 %v5121, %v5121
      %v5162 = vpack.c.bf16 %v5122, %v5122
      %v5163 = vpack.c.bf16 %v5123, %v5123
      %v5164 = vpack.c.bf16 %v5124, %v5124
      %v5165 = vpack.c.bf16 %v5125, %v5125
      %v5166 = vpack.c.bf16 %v5126, %v5126
      %v5167 = vpack.c.bf16 %v5127, %v5127
      %v5168 = vpack.c.bf16 %v5128, %v5128
      %v5169 = vpack.c.bf16 %v5129, %v5129
      %v5170 = vpack.c.bf16 %v5130, %v5130
      %v5171 = vpack.c.bf16 %v5131, %v5131
      %v5172 = vpack.c.bf16 %v5132, %v5132
      %v5173 = vpack.c.bf16 %v5133, %v5133
      %v5174 = vpack.c.bf16 %v5134, %v5134
      %v5175 = vpack.c.bf16 %v5135, %v5135
      %v5176 = vpack.c.bf16 %v5136, %v5136
      %v5177 = vpack.c.bf16 %v5137, %v5137
      %v5178 = vpack.c.bf16 %v5138, %v5138
      %v5179 = vpack.c.bf16 %v5139, %v5139
      %v5180 = vpack.c.bf16 %v5140, %v5140
      %v5181 = vpack.c.bf16 %v5141, %v5141
      %v5182 = vpack.c.bf16 %v5142, %v5142
      %v5183 = vpack.c.bf16 %v5143, %v5143
      %v5184 = vrot.slane %v5160, 4
      %vm5185 = vcmask 1047556
      %v5186 = vsel %vm5185, %v5184, %v5152
      %v5188 = vunpack.c.l.s4 1983009808
      %v5189 = vunpack.c.0.s8 %v5188
      %v5190 = vperm.slane %v5186, %v5189
      %v5191 = vrot.slane %v5164, 4
      %v5192 = vsel %vm5185, %v5191, %v5156
      %v5194 = vunpack.c.l.s4 1983009808
      %v5195 = vunpack.c.0.s8 %v5194
      %v5196 = vperm.slane %v5192, %v5195
      %v5197 = vrot.slane %v5196, 4
      %v5198 = vsel %vm5185, %v5197, %v5190
      %v5199 = vrot.slane %v5190, 4
      %v5200 = vsel %vm5185, %v5196, %v5199
      %v5202 = vunpack.c.l.s4 1934713408
      %v5203 = vunpack.c.0.s8 %v5202
      %v5204 = vperm.slane %v5198, %v5203
      %v5206 = vunpack.c.l.s4 1934713408
      %v5207 = vunpack.c.0.s8 %v5206
      %v5208 = vperm.slane %v5200, %v5207
      %v5209 = vrot.slane %v5204, 4
      %v5210 = vsel %vm5185, 0, %v5209
      %v5211 = vrot.slane %v5208, 4
      %v5212 = vsel %vm5185, 0, %v5211
      %v5213 = vrot.slane %v5162, 4
      %v5214 = vsel %vm5185, %v5213, %v5154
      %v5216 = vunpack.c.l.s4 1983009808
      %v5217 = vunpack.c.0.s8 %v5216
      %v5218 = vperm.slane %v5214, %v5217
      %v5219 = vrot.slane %v5166, 4
      %v5220 = vsel %vm5185, %v5219, %v5158
      %v5222 = vunpack.c.l.s4 1983009808
      %v5223 = vunpack.c.0.s8 %v5222
      %v5224 = vperm.slane %v5220, %v5223
      %v5225 = vrot.slane %v5224, 4
      %v5226 = vsel %vm5185, %v5225, %v5218
      %v5227 = vrot.slane %v5218, 4
      %v5228 = vsel %vm5185, %v5224, %v5227
      %v5230 = vunpack.c.l.s4 1934713408
      %v5231 = vunpack.c.0.s8 %v5230
      %v5232 = vperm.slane %v5226, %v5231
      %v5234 = vunpack.c.l.s4 1934713408
      %v5235 = vunpack.c.0.s8 %v5234
      %v5236 = vperm.slane %v5228, %v5235
      %v5237 = vrot.slane %v5232, 4
      %v5238 = vsel %vm5185, 0, %v5237
      %v5239 = vrot.slane %v5236, 4
      %v5240 = vsel %vm5185, 0, %v5239
      %v5241 = vrot.slane %v5176, 4
      %v5242 = vsel %vm5185, %v5241, %v5168
      %v5244 = vunpack.c.l.s4 1983009808
      %v5245 = vunpack.c.0.s8 %v5244
      %v5246 = vperm.slane %v5242, %v5245
      %v5247 = vrot.slane %v5180, 4
      %v5248 = vsel %vm5185, %v5247, %v5172
      %v5250 = vunpack.c.l.s4 1983009808
      %v5251 = vunpack.c.0.s8 %v5250
      %v5252 = vperm.slane %v5248, %v5251
      %v5253 = vrot.slane %v5252, 4
      %v5254 = vsel %vm5185, %v5253, %v5246
      %v5255 = vrot.slane %v5246, 4
      %v5256 = vsel %vm5185, %v5252, %v5255
      %v5258 = vunpack.c.l.s4 1934713408
      %v5259 = vunpack.c.0.s8 %v5258
      %v5260 = vperm.slane %v5254, %v5259
      %v5262 = vunpack.c.l.s4 1934713408
      %v5263 = vunpack.c.0.s8 %v5262
      %v5264 = vperm.slane %v5256, %v5263
      %v5265 = vrot.slane %v5260, 4
      %v5266 = vsel %vm5185, 0, %v5265
      %v5267 = vrot.slane %v5264, 4
      %v5268 = vsel %vm5185, 0, %v5267
      %v5269 = vrot.slane %v5178, 4
      %v5270 = vsel %vm5185, %v5269, %v5170
      %v5272 = vunpack.c.l.s4 1983009808
      %v5273 = vunpack.c.0.s8 %v5272
      %v5274 = vperm.slane %v5270, %v5273
      %v5275 = vrot.slane %v5182, 4
      %v5276 = vsel %vm5185, %v5275, %v5174
      %v5278 = vunpack.c.l.s4 1983009808
      %v5279 = vunpack.c.0.s8 %v5278
      %v5280 = vperm.slane %v5276, %v5279
      %v5281 = vrot.slane %v5280, 4
      %v5282 = vsel %vm5185, %v5281, %v5274
      %v5283 = vrot.slane %v5274, 4
      %v5284 = vsel %vm5185, %v5280, %v5283
      %v5286 = vunpack.c.l.s4 1934713408
      %v5287 = vunpack.c.0.s8 %v5286
      %v5288 = vperm.slane %v5282, %v5287
      %v5290 = vunpack.c.l.s4 1934713408
      %v5291 = vunpack.c.0.s8 %v5290
      %v5292 = vperm.slane %v5284, %v5291
      %v5293 = vrot.slane %v5288, 4
      %v5294 = vsel %vm5185, 0, %v5293
      %v5295 = vrot.slane %v5292, 4
      %v5296 = vsel %vm5185, 0, %v5295
      %v5297 = vrot.slane %v5161, 4
      %v5298 = vsel %vm5185, %v5297, %v5153
      %v5300 = vunpack.c.l.s4 1983009808
      %v5301 = vunpack.c.0.s8 %v5300
      %v5302 = vperm.slane %v5298, %v5301
      %v5303 = vrot.slane %v5165, 4
      %v5304 = vsel %vm5185, %v5303, %v5157
      %v5306 = vunpack.c.l.s4 1983009808
      %v5307 = vunpack.c.0.s8 %v5306
      %v5308 = vperm.slane %v5304, %v5307
      %v5309 = vrot.slane %v5308, 4
      %v5310 = vsel %vm5185, %v5309, %v5302
      %v5311 = vrot.slane %v5302, 4
      %v5312 = vsel %vm5185, %v5308, %v5311
      %v5314 = vunpack.c.l.s4 1934713408
      %v5315 = vunpack.c.0.s8 %v5314
      %v5316 = vperm.slane %v5310, %v5315
      %v5318 = vunpack.c.l.s4 1934713408
      %v5319 = vunpack.c.0.s8 %v5318
      %v5320 = vperm.slane %v5312, %v5319
      %v5321 = vrot.slane %v5316, 4
      %v5322 = vsel %vm5185, 0, %v5321
      %v5323 = vrot.slane %v5320, 4
      %v5324 = vsel %vm5185, 0, %v5323
      %v5325 = vrot.slane %v5163, 4
      %v5326 = vsel %vm5185, %v5325, %v5155
      %v5328 = vunpack.c.l.s4 1983009808
      %v5329 = vunpack.c.0.s8 %v5328
      %v5330 = vperm.slane %v5326, %v5329
      %v5331 = vrot.slane %v5167, 4
      %v5332 = vsel %vm5185, %v5331, %v5159
      %v5334 = vunpack.c.l.s4 1983009808
      %v5335 = vunpack.c.0.s8 %v5334
      %v5336 = vperm.slane %v5332, %v5335
      %v5337 = vrot.slane %v5336, 4
      %v5338 = vsel %vm5185, %v5337, %v5330
      %v5339 = vrot.slane %v5330, 4
      %v5340 = vsel %vm5185, %v5336, %v5339
      %v5342 = vunpack.c.l.s4 1934713408
      %v5343 = vunpack.c.0.s8 %v5342
      %v5344 = vperm.slane %v5338, %v5343
      %v5346 = vunpack.c.l.s4 1934713408
      %v5347 = vunpack.c.0.s8 %v5346
      %v5348 = vperm.slane %v5340, %v5347
      %v5349 = vrot.slane %v5344, 4
      %v5350 = vsel %vm5185, 0, %v5349
      %v5351 = vrot.slane %v5348, 4
      %v5352 = vsel %vm5185, 0, %v5351
      %v5353 = vrot.slane %v5177, 4
      %v5354 = vsel %vm5185, %v5353, %v5169
      %v5356 = vunpack.c.l.s4 1983009808
      %v5357 = vunpack.c.0.s8 %v5356
      %v5358 = vperm.slane %v5354, %v5357
      %v5359 = vrot.slane %v5181, 4
      %v5360 = vsel %vm5185, %v5359, %v5173
      %v5362 = vunpack.c.l.s4 1983009808
      %v5363 = vunpack.c.0.s8 %v5362
      %v5364 = vperm.slane %v5360, %v5363
      %v5365 = vrot.slane %v5364, 4
      %v5366 = vsel %vm5185, %v5365, %v5358
      %v5367 = vrot.slane %v5358, 4
      %v5368 = vsel %vm5185, %v5364, %v5367
      %v5370 = vunpack.c.l.s4 1934713408
      %v5371 = vunpack.c.0.s8 %v5370
      %v5372 = vperm.slane %v5366, %v5371
      %v5374 = vunpack.c.l.s4 1934713408
      %v5375 = vunpack.c.0.s8 %v5374
      %v5376 = vperm.slane %v5368, %v5375
      %v5377 = vrot.slane %v5372, 4
      %v5378 = vsel %vm5185, 0, %v5377
      %v5379 = vrot.slane %v5376, 4
      %v5380 = vsel %vm5185, 0, %v5379
      %v5381 = vrot.slane %v5179, 4
      %v5382 = vsel %vm5185, %v5381, %v5171
      %v5384 = vunpack.c.l.s4 1983009808
      %v5385 = vunpack.c.0.s8 %v5384
      %v5386 = vperm.slane %v5382, %v5385
      %v5387 = vrot.slane %v5183, 4
      %v5388 = vsel %vm5185, %v5387, %v5175
      %v5390 = vunpack.c.l.s4 1983009808
      %v5391 = vunpack.c.0.s8 %v5390
      %v5392 = vperm.slane %v5388, %v5391
      %v5393 = vrot.slane %v5392, 4
      %v5394 = vsel %vm5185, %v5393, %v5386
      %v5395 = vrot.slane %v5386, 4
      %v5396 = vsel %vm5185, %v5392, %v5395
      %v5398 = vunpack.c.l.s4 1934713408
      %v5399 = vunpack.c.0.s8 %v5398
      %v5400 = vperm.slane %v5394, %v5399
      %v5402 = vunpack.c.l.s4 1934713408
      %v5403 = vunpack.c.0.s8 %v5402
      %v5404 = vperm.slane %v5396, %v5403
      %v5405 = vrot.slane %v5400, 4
      %v5406 = vsel %vm5185, 0, %v5405
      %v5407 = vrot.slane %v5404, 4
      %v5408 = vsel %vm5185, 0, %v5407
      %v5411 = vpack.i.b16 %v5232, %v5204
      %v5412 = vshrl.u32 %v5204, 16
      %v5413 = vshrl.u32 %v5232, 16
      %v5414 = vpack.i.b16 %v5413, %v5412
      %v5417 = vpack.i.b16 %v5238, %v5210
      %v5418 = vshrl.u32 %v5210, 16
      %v5419 = vshrl.u32 %v5238, 16
      %v5420 = vpack.i.b16 %v5419, %v5418
      %v5423 = vpack.i.b16 %v5236, %v5208
      %v5424 = vshrl.u32 %v5208, 16
      %v5425 = vshrl.u32 %v5236, 16
      %v5426 = vpack.i.b16 %v5425, %v5424
      %v5429 = vpack.i.b16 %v5240, %v5212
      %v5430 = vshrl.u32 %v5212, 16
      %v5431 = vshrl.u32 %v5240, 16
      %v5432 = vpack.i.b16 %v5431, %v5430
      %v5435 = vpack.i.b16 %v5344, %v5316
      %v5436 = vshrl.u32 %v5316, 16
      %v5437 = vshrl.u32 %v5344, 16
      %v5438 = vpack.i.b16 %v5437, %v5436
      %v5441 = vpack.i.b16 %v5350, %v5322
      %v5442 = vshrl.u32 %v5322, 16
      %v5443 = vshrl.u32 %v5350, 16
      %v5444 = vpack.i.b16 %v5443, %v5442
      %v5447 = vpack.i.b16 %v5348, %v5320
      %v5448 = vshrl.u32 %v5320, 16
      %v5449 = vshrl.u32 %v5348, 16
      %v5450 = vpack.i.b16 %v5449, %v5448
      %v5453 = vpack.i.b16 %v5352, %v5324
      %v5454 = vshrl.u32 %v5324, 16
      %v5455 = vshrl.u32 %v5352, 16
      %v5456 = vpack.i.b16 %v5455, %v5454
      %v5459 = vpack.i.b16 %v5288, %v5260
      %v5460 = vshrl.u32 %v5260, 16
      %v5461 = vshrl.u32 %v5288, 16
      %v5462 = vpack.i.b16 %v5461, %v5460
      %v5465 = vpack.i.b16 %v5294, %v5266
      %v5466 = vshrl.u32 %v5266, 16
      %v5467 = vshrl.u32 %v5294, 16
      %v5468 = vpack.i.b16 %v5467, %v5466
      %v5471 = vpack.i.b16 %v5292, %v5264
      %v5472 = vshrl.u32 %v5264, 16
      %v5473 = vshrl.u32 %v5292, 16
      %v5474 = vpack.i.b16 %v5473, %v5472
      %v5477 = vpack.i.b16 %v5296, %v5268
      %v5478 = vshrl.u32 %v5268, 16
      %v5479 = vshrl.u32 %v5296, 16
      %v5480 = vpack.i.b16 %v5479, %v5478
      %v5483 = vpack.i.b16 %v5400, %v5372
      %v5484 = vshrl.u32 %v5372, 16
      %v5485 = vshrl.u32 %v5400, 16
      %v5486 = vpack.i.b16 %v5485, %v5484
      %v5489 = vpack.i.b16 %v5406, %v5378
      %v5490 = vshrl.u32 %v5378, 16
      %v5491 = vshrl.u32 %v5406, 16
      %v5492 = vpack.i.b16 %v5491, %v5490
      %v5495 = vpack.i.b16 %v5404, %v5376
      %v5496 = vshrl.u32 %v5376, 16
      %v5497 = vshrl.u32 %v5404, 16
      %v5498 = vpack.i.b16 %v5497, %v5496
      %v5501 = vpack.i.b16 %v5408, %v5380
      %v5502 = vshrl.u32 %v5380, 16
      %v5503 = vshrl.u32 %v5408, 16
      %v5504 = vpack.i.b16 %v5503, %v5502
      %v5505 = vunpack.c.l.b16 %v5411
      %v5506 = vunpack.c.l.b16 %v5459
      %v5507 = vpack.c.b16 %v5506, %v5505
      %v5508 = vunpack.c.l.b16 %v5414
      %v5509 = vunpack.c.l.b16 %v5462
      %v5510 = vpack.c.b16 %v5509, %v5508
      %5511 = vrot.lane.b32.xlu0 %v5510, 2
      %v5512 = vpop.permute.xlu0 %5511
      %v5513 = vunpack.c.l.b16 %v5417
      %v5514 = vunpack.c.l.b16 %v5465
      %v5515 = vpack.c.b16 %v5514, %v5513
      %5516 = vrot.lane.b32.xlu0 %v5515, 4
      %v5517 = vpop.permute.xlu0 %5516
      %v5518 = vunpack.c.l.b16 %v5420
      %v5519 = vunpack.c.l.b16 %v5468
      %v5520 = vpack.c.b16 %v5519, %v5518
      %5521 = vrot.lane.b32.xlu0 %v5520, 6
      %v5522 = vpop.permute.xlu0 %5521
      %v5523 = vunpack.c.l.b16 %v5423
      %v5524 = vunpack.c.l.b16 %v5471
      %v5525 = vpack.c.b16 %v5524, %v5523
      %5526 = vrot.lane.b32.xlu0 %v5525, 8
      %v5527 = vpop.permute.xlu0 %5526
      %v5528 = vunpack.c.l.b16 %v5426
      %v5529 = vunpack.c.l.b16 %v5474
      %v5530 = vpack.c.b16 %v5529, %v5528
      %5531 = vrot.lane.b32.xlu0 %v5530, 10
      %v5532 = vpop.permute.xlu0 %5531
      %v5533 = vunpack.c.l.b16 %v5429
      %v5534 = vunpack.c.l.b16 %v5477
      %v5535 = vpack.c.b16 %v5534, %v5533
      %5536 = vrot.lane.b32.xlu0 %v5535, 12
      %v5537 = vpop.permute.xlu0 %5536
      %v5538 = vunpack.c.l.b16 %v5432
      %v5539 = vunpack.c.l.b16 %v5480
      %v5540 = vpack.c.b16 %v5539, %v5538
      %5541 = vrot.lane.b32.xlu0 %v5540, 14
      %v5542 = vpop.permute.xlu0 %5541
      %v5543 = vunpack.c.l.b16 %v5435
      %v5544 = vunpack.c.l.b16 %v5483
      %v5545 = vpack.c.b16 %v5544, %v5543
      %5546 = vrot.lane.b32.xlu0 %v5545, 16
      %v5547 = vpop.permute.xlu0 %5546
      %v5548 = vunpack.c.l.b16 %v5438
      %v5549 = vunpack.c.l.b16 %v5486
      %v5550 = vpack.c.b16 %v5549, %v5548
      %5551 = vrot.lane.b32.xlu0 %v5550, 18
      %v5552 = vpop.permute.xlu0 %5551
      %v5553 = vunpack.c.l.b16 %v5441
      %v5554 = vunpack.c.l.b16 %v5489
      %v5555 = vpack.c.b16 %v5554, %v5553
      %5556 = vrot.lane.b32.xlu0 %v5555, 20
      %v5557 = vpop.permute.xlu0 %5556
      %v5558 = vunpack.c.l.b16 %v5444
      %v5559 = vunpack.c.l.b16 %v5492
      %v5560 = vpack.c.b16 %v5559, %v5558
      %5561 = vrot.lane.b32.xlu0 %v5560, 22
      %v5562 = vpop.permute.xlu0 %5561
      %v5563 = vunpack.c.l.b16 %v5447
      %v5564 = vunpack.c.l.b16 %v5495
      %v5565 = vpack.c.b16 %v5564, %v5563
      %5566 = vrot.lane.b32.xlu0 %v5565, 24
      %v5567 = vpop.permute.xlu0 %5566
      %v5568 = vunpack.c.l.b16 %v5450
      %v5569 = vunpack.c.l.b16 %v5498
      %v5570 = vpack.c.b16 %v5569, %v5568
      %5571 = vrot.lane.b32.xlu0 %v5570, 26
      %v5572 = vpop.permute.xlu0 %5571
      %v5573 = vunpack.c.l.b16 %v5453
      %v5574 = vunpack.c.l.b16 %v5501
      %v5575 = vpack.c.b16 %v5574, %v5573
      %5576 = vrot.lane.b32.xlu0 %v5575, 28
      %v5577 = vpop.permute.xlu0 %5576
      %v5578 = vunpack.c.l.b16 %v5456
      %v5579 = vunpack.c.l.b16 %v5504
      %v5580 = vpack.c.b16 %v5579, %v5578
      %5581 = vrot.lane.b32.xlu0 %v5580, 30
      %v5582 = vpop.permute.xlu0 %5581
      %v5585 = vsel %vm1900, %v5507, %v5512
      %v5587 = vsel %vm1973, %v5585, %v5517
      %v5589 = vsel %vm2049, %v5587, %v5522
      %vm5590 = vcmask 64512
      %v5592 = vsel %vm5590, %v5589, %v5527
      %vm5593 = vcmask 80896
      %v5595 = vsel %vm5593, %v5592, %v5532
      %vm5596 = vcmask 97280
      %v5598 = vsel %vm5596, %v5595, %v5537
      %vm5599 = vcmask 113664
      %v5601 = vsel %vm5599, %v5598, %v5542
      %vm5602 = vcmask 130048
      %v5604 = vsel %vm5602, %v5601, %v5547
      %vm5605 = vcmask 146432
      %v5607 = vsel %vm5605, %v5604, %v5552
      %vm5608 = vcmask 162816
      %v5610 = vsel %vm5608, %v5607, %v5557
      %vm5611 = vcmask 179200
      %v5613 = vsel %vm5611, %v5610, %v5562
      %vm5614 = vcmask 195584
      %v5616 = vsel %vm5614, %v5613, %v5567
      %vm5617 = vcmask 211968
      %v5619 = vsel %vm5617, %v5616, %v5572
      %vm5620 = vcmask 228352
      %v5622 = vsel %vm5620, %v5619, %v5577
      %vm5623 = vcmask 244736
      %v5625 = vsel %vm5623, %v5622, %v5582
      %v5627 = vunpack.c.l.b16 %v5625
      %v5628 = vunpack.c.h.b16 %v5625
      %v5629 = vpack.c.b16 %v5627, %v5627
      %v5630 = vpack.c.b16 %v5628, %v5628
      %vm5633 = vcmask 257024
      %5634 = vst.msk [vmem:[%s278] sm:$0xf] %vm5633, %v5629
      %5635 = vst.msk [vmem:[%s278 + $0x4] sm:$0xf] %vm5633, %v5630
      %v5636 = vpack.c.bf16 %v5144, %v5144
      %v5637 = vpack.c.bf16 %v5145, %v5145
      %v5638 = vpack.c.bf16 %v5146, %v5146
      %v5639 = vpack.c.bf16 %v5147, %v5147
      %v5640 = vpack.c.bf16 %v5148, %v5148
      %v5641 = vpack.c.bf16 %v5149, %v5149
      %v5642 = vpack.c.bf16 %v5150, %v5150
      %v5643 = vpack.c.bf16 %v5151, %v5151
      %v5644 = vrot.slane %v5640, 4
      %v5645 = vsel %vm5185, %v5644, %v5636
      %v5647 = vunpack.c.l.s4 1983009808
      %v5648 = vunpack.c.0.s8 %v5647
      %v5649 = vperm.slane %v5645, %v5648
      %v5650 = vrot.slane %v5642, 4
      %v5651 = vsel %vm5185, %v5650, %v5638
      %v5653 = vunpack.c.l.s4 1983009808
      %v5654 = vunpack.c.0.s8 %v5653
      %v5655 = vperm.slane %v5651, %v5654
      %v5656 = vrot.slane %v5655, 4
      %v5657 = vsel %vm5185, %v5656, %v5649
      %v5658 = vrot.slane %v5649, 4
      %v5659 = vsel %vm5185, %v5655, %v5658
      %v5661 = vunpack.c.l.s4 1934713408
      %v5662 = vunpack.c.0.s8 %v5661
      %v5663 = vperm.slane %v5657, %v5662
      %v5665 = vunpack.c.l.s4 1934713408
      %v5666 = vunpack.c.0.s8 %v5665
      %v5667 = vperm.slane %v5659, %v5666
      %v5668 = vrot.slane %v5663, 4
      %v5669 = vsel %vm5185, 0, %v5668
      %v5670 = vrot.slane %v5667, 4
      %v5671 = vsel %vm5185, 0, %v5670
      %v5672 = vrot.slane %v5641, 4
      %v5673 = vsel %vm5185, %v5672, %v5637
      %v5675 = vunpack.c.l.s4 1983009808
      %v5676 = vunpack.c.0.s8 %v5675
      %v5677 = vperm.slane %v5673, %v5676
      %v5678 = vrot.slane %v5643, 4
      %v5679 = vsel %vm5185, %v5678, %v5639
      %v5681 = vunpack.c.l.s4 1983009808
      %v5682 = vunpack.c.0.s8 %v5681
      %v5683 = vperm.slane %v5679, %v5682
      %v5684 = vrot.slane %v5683, 4
      %v5685 = vsel %vm5185, %v5684, %v5677
      %v5686 = vrot.slane %v5677, 4
      %v5687 = vsel %vm5185, %v5683, %v5686
      %v5689 = vunpack.c.l.s4 1934713408
      %v5690 = vunpack.c.0.s8 %v5689
      %v5691 = vperm.slane %v5685, %v5690
      %v5693 = vunpack.c.l.s4 1934713408
      %v5694 = vunpack.c.0.s8 %v5693
      %v5695 = vperm.slane %v5687, %v5694
      %v5696 = vrot.slane %v5691, 4
      %v5697 = vsel %vm5185, 0, %v5696
      %v5698 = vrot.slane %v5695, 4
      %v5699 = vsel %vm5185, 0, %v5698
      %v5702 = vpack.i.b16 %v5691, %v5663
      %v5703 = vshrl.u32 %v5663, 16
      %v5704 = vshrl.u32 %v5691, 16
      %v5705 = vpack.i.b16 %v5704, %v5703
      %v5708 = vpack.i.b16 %v5697, %v5669
      %v5709 = vshrl.u32 %v5669, 16
      %v5710 = vshrl.u32 %v5697, 16
      %v5711 = vpack.i.b16 %v5710, %v5709
      %v5714 = vpack.i.b16 %v5695, %v5667
      %v5715 = vshrl.u32 %v5667, 16
      %v5716 = vshrl.u32 %v5695, 16
      %v5717 = vpack.i.b16 %v5716, %v5715
      %v5720 = vpack.i.b16 %v5699, %v5671
      %v5721 = vshrl.u32 %v5671, 16
      %v5722 = vshrl.u32 %v5699, 16
      %v5723 = vpack.i.b16 %v5722, %v5721
      %v5724 = vunpack.c.l.b16 %v5705
      %v5725 = vpack.c.b16 %v5724, %v5724
      %5726 = vrot.lane.b32.xlu0 %v5725, 2
      %v5727 = vpop.permute.xlu0 %5726
      %v5728 = vunpack.c.l.b16 %v5708
      %v5729 = vpack.c.b16 %v5728, %v5728
      %5730 = vrot.lane.b32.xlu0 %v5729, 4
      %v5731 = vpop.permute.xlu0 %5730
      %v5732 = vunpack.c.l.b16 %v5711
      %v5733 = vpack.c.b16 %v5732, %v5732
      %5734 = vrot.lane.b32.xlu0 %v5733, 6
      %v5735 = vpop.permute.xlu0 %5734
      %v5736 = vunpack.c.l.b16 %v5714
      %v5737 = vpack.c.b16 %v5736, %v5736
      %5738 = vrot.lane.b32.xlu0 %v5737, 8
      %v5739 = vpop.permute.xlu0 %5738
      %v5740 = vunpack.c.l.b16 %v5717
      %v5741 = vpack.c.b16 %v5740, %v5740
      %5742 = vrot.lane.b32.xlu0 %v5741, 10
      %v5743 = vpop.permute.xlu0 %5742
      %v5744 = vunpack.c.l.b16 %v5720
      %v5745 = vpack.c.b16 %v5744, %v5744
      %5746 = vrot.lane.b32.xlu0 %v5745, 12
      %v5747 = vpop.permute.xlu0 %5746
      %v5748 = vunpack.c.l.b16 %v5723
      %v5749 = vpack.c.b16 %v5748, %v5748
      %5750 = vrot.lane.b32.xlu0 %v5749, 14
      %v5751 = vpop.permute.xlu0 %5750
      %v5754 = vsel %vm1900, %v5702, %v5727
      %v5756 = vsel %vm1973, %v5754, %v5731
      %v5758 = vsel %vm2049, %v5756, %v5735
      %v5760 = vsel %vm5590, %v5758, %v5739
      %v5762 = vsel %vm5593, %v5760, %v5743
      %v5764 = vsel %vm5596, %v5762, %v5747
      %v5766 = vsel %vm5599, %v5764, %v5751
      %vm5768 = vcmask 125952
      %5769 = vst.msk [vmem:[%s282] sm:$0xf] %vm5768, %v5766
      %p5770 = scmp.lt.s32.totalorder %s18, 1
      %s5771 = scalar_select %p5770, %s18, 1
      %s5772 = smul.addr %s5771, 2
      %s5773 = smul.addr %s5772, 4
      %s5774 = scalar_lea.vmem %s5, %s5773
      %p5775 = scmp.lt.s32.totalorder %s18, 1
      %s5776 = scalar_select %p5775, %s18, 1
      %s5777 = smul.addr %s5776, 4
      %s5778 = scalar_lea.vmem %s6, %s5777
      // Predicated region
      $region41: #{octave_conv_forward.1} parent=39 // pred_check
        %p5779 = pneg %p151
      $region42: #{octave_conv_forward.1} parent=39 // pred_check_branch
        %5781 = sbr.rel (%p5779) target = $region44
      $region43: #{octave_conv_forward.1} parent=39 // pred_region
        _
      $region44: #{octave_conv_forward.1} parent=39 // pred_fallthru
        _
      // Predicated region
      $region45: #{octave_conv_forward.1} parent=39 // pred_check
        %p5782 = pneg %p177
      $region46: #{octave_conv_forward.1} parent=39 // pred_check_branch
        %5784 = sbr.rel (%p5782) target = $region48
      $region47: #{octave_conv_forward.1} parent=39 // pred_region
        _
      $region48: #{octave_conv_forward.1} parent=39 // pred_fallthru
        _
    $region40: #{octave_conv_forward.1} parent=5 // pred_fallthru
      _
    %p5785 = scmp.le.s32.totalorder 2, %s13
    // Predicated region
    $region49: #{octave_conv_forward.1} parent=5 // pred_check
      %p5786 = pneg %p5785
    $region50: #{octave_conv_forward.1} parent=5 // pred_check_branch
      %5788 = sbr.rel (%p5786) target = $region52
    $region51: #{octave_conv_forward.1} parent=5 // pred_region
      %s5789 = ssub.s32 %s13, 2
      // Predicated region
      $region53: #{octave_conv_forward.1} parent=51 // pred_check
        %p5790 = pneg %p157
      $region54: #{octave_conv_forward.1} parent=51 // pred_check_branch
        %5792 = sbr.rel (%p5790) target = $region56
      $region55: #{octave_conv_forward.1} parent=51 // pred_region
        %p5793 = scmp.lt.s32.totalorder %s19, 1
        %s5794 = scalar_select %p5793, %s19, 1
        %s5795 = smul.addr %s5794, 2
        %s5796 = smul.addr %s5795, 4
        %s5797 = scalar_lea.vmem %s5, %s5796
      $region56: #{octave_conv_forward.1} parent=51 // pred_fallthru
        _
      // Predicated region
      $region57: #{octave_conv_forward.1} parent=51 // pred_check
        %p5798 = pneg %p183
      $region58: #{octave_conv_forward.1} parent=51 // pred_check_branch
        %5800 = sbr.rel (%p5798) target = $region60
      $region59: #{octave_conv_forward.1} parent=51 // pred_region
        %p5801 = scmp.lt.s32.totalorder %s19, 1
        %s5802 = scalar_select %p5801, %s19, 1
        %s5803 = smul.addr %s5802, 4
        %s5804 = scalar_lea.vmem %s6, %s5803
      $region60: #{octave_conv_forward.1} parent=51 // pred_fallthru
        _
    $region52: #{octave_conv_forward.1} parent=5 // pred_fallthru
      _
  $region6: #{octave_conv_forward.1} parent=0 // loop_footer
    %s17 = sadd.s32 1, %s13
  $region7: #{octave_conv_forward.1} parent=0 // loop_footer_branch
    %12 = sbr.rel target = $region3
  $region8: #{octave_conv_forward.1} parent=0 // loop_exit
    _

</llo_original>
